<compile_context>
chip_gen: v5e
topology: v5e:2x2
jax: 0.10.0
libtpu: 0.0.40
codegen_flags: <defaults>
</compile_context>

<pallas_src>
import functools

import numpy as np

import jax
import jax.numpy as jnp
from jax.experimental import pallas as pl
from jax.experimental.pallas import tpu as pltpu


# Network geometry (fixed by the PyTorch module).
_H0, _W0 = 28, 28             # input image
_H1, _W1, _C1 = 14, 14, 16    # conv1 output
_H2, _W2, _C2 = 7, 7, 16      # conv2 output
_H3, _W3, _C3 = 4, 4, 10      # conv3 output
_FC1 = 256                    # fc1 width
_QPAD = 128                   # padded action dim (lane-dense output stores)


# ---------------------------------------------------------------------------
# The fused kernel: one batch tile does the whole network.
# ---------------------------------------------------------------------------
def _dqn_kernel(x_ref, c1c_ref, c1p_ref, b1_ref, c2_ref, b2_ref,
                c3_ref, b3_ref, f1_ref, bf1_ref, f2_ref, bf2_ref, o_ref):
    f32 = jnp.float32
    bf16 = jnp.bfloat16

    # Input block: (TB, 784) f32 -> 14 paired-row slabs of (TB, 56) bf16.
    # Slab p holds image rows {2p, 2p+1}; 56 lanes keeps K a multiple of 8.
    xb = x_ref[...].astype(bf16)
    slabs = [xb[:, p * 56:(p + 1) * 56] for p in range(_H1)]

    # ---- conv1 as banded GEMMs over paired row slabs -----------------------
    # Output row ho needs input rows {2ho-1, 2ho, 2ho+1}:
    #   rows {2ho, 2ho+1}  -> slab[ho]   @ c1_cur   (kh = 1, 2 bands)
    #   row  {2ho-1}       -> slab[ho-1] @ c1_prev  (kh = 0 band; ho=0 -> pad)
    wc = c1c_ref[...]
    wp = c1p_ref[...]
    b1 = b1_ref[...]
    y1 = []
    for ho in range(_H1):
        acc = jnp.dot(slabs[ho], wc, preferred_element_type=f32)
        if ho > 0:
            acc = acc + jnp.dot(slabs[ho - 1], wp, preferred_element_type=f32)
        y1.append(jnp.maximum(acc + b1, 0.0).astype(bf16))   # (TB, 224)

    # ---- generic banded conv over row slabs (conv2 / conv3) ---------------
    def conv_rows(rows, w_ref, b_ref, h_in, h_out):
        wk = [w_ref[k] for k in range(3)]
        b = b_ref[...]
        out = []
        for ho in range(h_out):
            acc = None
            for kh in range(3):
                r = 2 * ho + kh - 1
                if 0 <= r < h_in:        # top/bottom zero padding -> skip tap
                    p = jnp.dot(rows[r], wk[kh], preferred_element_type=f32)
                    acc = p if acc is None else acc + p
            out.append(jnp.maximum(acc + b, 0.0).astype(bf16))
        return out

    y2 = conv_rows(y1, c2_ref, b2_ref, _H1, _H2)   # 7 x (TB, 112)
    y3 = conv_rows(y2, c3_ref, b3_ref, _H2, _H3)   # 4 x (TB, 40)

    # ---- flatten + fc1 (+ReLU) + fc2, all VMEM resident --------------------
    # fc1 columns were pre-permuted so each conv3 row slab multiplies its own
    # (40, 256) block; summing the 4 partial GEMMs == PyTorch's NCHW flatten.
    h = jnp.dot(y3[0], f1_ref[0], preferred_element_type=f32)
    for ho in range(1, _H3):
        h = h + jnp.dot(y3[ho], f1_ref[ho], preferred_element_type=f32)
    h = jnp.maximum(h + bf1_ref[...], 0.0).astype(bf16)        # (TB, 256)

    q = jnp.dot(h, f2_ref[...], preferred_element_type=f32) + bf2_ref[...]
    o_ref[...] = q                                             # (TB, 128) f32


# ---------------------------------------------------------------------------
# Batch tiling: multiple of 8, divide the batch when possible (no pad copy),
# and >= 2 grid steps for larger batches so both v7x TensorCores are used.
# ---------------------------------------------------------------------------
def _pick_batch_tile(batch, target=256):
    if batch <= 16:
        return ((batch + 7) // 8) * 8            # one sublane-aligned block
    best = None
    limit = min(target, batch // 2)
    for tb in range(8, limit + 1, 8):
        if batch % tb == 0:
            best = tb
    if best is not None:
        return best
    # No nice divisor: split roughly in half (pads the last block).
    return min(target, (((batch + 1) // 2) + 7) // 8 * 8)


# ---------------------------------------------------------------------------
# Forward pass: single pallas_call.
# ---------------------------------------------------------------------------
def dqn_forward(params, state, *, action_size):
    x = state.reshape(-1, _H0 * _W0).astype(jnp.float32)
    batch = x.shape[0]
    tb = _pick_batch_tile(batch)
    bp = ((batch + tb - 1) // tb) * tb
    if bp != batch:
        x = jnp.pad(x, ((0, bp - batch), (0, 0)))
    grid = bp // tb

    out = pl.pallas_call(
        _dqn_kernel,
        out_shape=jax.ShapeDtypeStruct((bp, _QPAD), jnp.float32),
        grid=(grid,),
        in_specs=[
            pl.BlockSpec((tb, _H0 * _W0), lambda i: (i, 0)),          # input
            pl.BlockSpec((2 * _W0, _W1 * _C1), lambda i: (0, 0)),     # c1 cur
            pl.BlockSpec((2 * _W0, _W1 * _C1), lambda i: (0, 0)),     # c1 prev
            pl.BlockSpec((1, _W1 * _C1), lambda i: (0, 0)),           # c1 bias
            pl.BlockSpec((3, _W1 * _C1, _W2 * _C2), lambda i: (0, 0, 0)),
            pl.BlockSpec((1, _W2 * _C2), lambda i: (0, 0)),
            pl.BlockSpec((3, _W2 * _C2, _W3 * _C3), lambda i: (0, 0, 0)),
            pl.BlockSpec((1, _W3 * _C3), lambda i: (0, 0)),
            pl.BlockSpec((_H3, _W3 * _C3, _FC1), lambda i: (0, 0, 0)),
            pl.BlockSpec((1, _FC1), lambda i: (0, 0)),
            pl.BlockSpec((_FC1, _QPAD), lambda i: (0, 0)),
            pl.BlockSpec((1, _QPAD), lambda i: (0, 0)),
        ],
        out_specs=pl.BlockSpec((tb, _QPAD), lambda i: (i, 0)),
        compiler_params=pltpu.CompilerParams(
            dimension_semantics=("parallel",)),
    )(x, params["c1_cur"], params["c1_prev"], params["c1_b"],
      params["c2_w"], params["c2_b"], params["c3_w"], params["c3_b"],
      params["fc1_w"], params["fc1_b"], params["fc2_w"], params["fc2_b"])

    return out[:batch, :action_size]


# ---------------------------------------------------------------------------
# Parameter generation (PyTorch layout) + one-time conversion to the banded
# kernel layout.
# ---------------------------------------------------------------------------
def _banded_conv_mats(w, w_in, w_out):
    """PyTorch conv weight (Cout, Cin, 3, 3), stride 2, pad 1, width folded.

    Returns m of shape (3, w_in*Cin, w_out*Cout) with
      m[kh, wi*Cin+ci, wo*Cout+co] = w[co, ci, kh, kw]  where kw = wi - 2*wo + 1
    (left/right zero padding falls outside the band -> stays zero).
    """
    w = np.asarray(w, np.float32)
    cout, cin = w.shape[0], w.shape[1]
    m = np.zeros((3, w_in * cin, w_out * cout), np.float32)
    for kh in range(3):
        for wo in range(w_out):
            for kw in range(3):
                wi = 2 * wo + kw - 1
                if 0 <= wi < w_in:
                    m[kh, wi * cin:(wi + 1) * cin,
                      wo * cout:(wo + 1) * cout] = w[:, :, kh, kw].T
    return m


def _build_kernel_params(tp, action_size):
    bf16 = jnp.bfloat16

    # conv1: fold the three kh bands into "current pair" / "previous pair".
    m1 = _banded_conv_mats(tp["c1w"], _W0, _W1)                   # (3, 28, 224)
    c1_cur = np.concatenate([m1[1], m1[2]], axis=0)               # rows 2ho, 2ho+1
    c1_prev = np.concatenate([np.zeros_like(m1[0]), m1[0]], axis=0)  # row 2ho-1

    m2 = _banded_conv_mats(tp["c2w"], _W1, _W2)                   # (3, 224, 112)
    m3 = _banded_conv_mats(tp["c3w"], _W2, _W3)                   # (3, 112, 40)

    # fc1: permute columns from PyTorch NCHW flatten (co*16 + ho*4 + wo) to a
    # per-output-row block layout (ho, wo*10 + co) and store transposed.
    f1w = np.asarray(tp["f1w"], np.float32)                       # (256, 160)
    mf1 = np.zeros((_H3, _W3 * _C3, _FC1), np.float32)            # (4, 40, 256)
    for ho in range(_H3):
        for wo in range(_W3):
            for co in range(_C3):
                mf1[ho, wo * _C3 + co, :] = f1w[:, co * (_H3 * _W3) + ho * _W3 + wo]

    # fc2: transpose + zero-pad the output dim to 128 lanes.
    f2w = np.asarray(tp["f2w"], np.float32)                       # (A, 256)
    f2w_pad = np.zeros((_FC1, _QPAD), np.float32)
    f2w_pad[:, :action_size] = f2w.T
    f2b_pad = np.zeros((_QPAD,), np.float32)
    f2b_pad[:action_size] = np.asarray(tp["f2b"], np.float32)

    def bias_row(b, reps):   # per-channel bias tiled over output width
        return jnp.asarray(np.tile(np.asarray(b, np.float32), reps)[None, :])

    return {
        "c1_cur": jnp.asarray(c1_cur, bf16),
        "c1_prev": jnp.asarray(c1_prev, bf16),
        "c1_b": bias_row(tp["c1b"], _W1),
        "c2_w": jnp.asarray(m2, bf16),
        "c2_b": bias_row(tp["c2b"], _W2),
        "c3_w": jnp.asarray(m3, bf16),
        "c3_b": bias_row(tp["c3b"], _W3),
        "fc1_w": jnp.asarray(mf1, bf16),
        "fc1_b": jnp.asarray(np.asarray(tp["f1b"], np.float32)[None, :]),
        "fc2_w": jnp.asarray(f2w_pad, bf16),
        "fc2_b": jnp.asarray(f2b_pad[None, :]),
    }


def init_params(action_size, key):
    """Returns (kernel_params, pytorch_layout_params)."""
    ks = jax.random.split(key, 10)

    def u(k, shape, fan_in):
        bound = 1.0 / float(fan_in) ** 0.5
        return jax.random.uniform(k, shape, jnp.float32, -bound, bound)

    tp = {
        "c1w": u(ks[0], (16, 1, 3, 3), 9),    "c1b": u(ks[1], (16,), 9),
        "c2w": u(ks[2], (16, 16, 3, 3), 144), "c2b": u(ks[3], (16,), 144),
        "c3w": u(ks[4], (10, 16, 3, 3), 144), "c3b": u(ks[5], (10,), 144),
        "f1w": u(ks[6], (256, 160), 160),     "f1b": u(ks[7], (256,), 160),
        "f2w": u(ks[8], (action_size, 256), 256),
        "f2b": u(ks[9], (action_size,), 256),
    }
    return _build_kernel_params(tp, action_size), tp


# ---------------------------------------------------------------------------
# Independent pure-XLA reference (PyTorch-layout weights, f32 everywhere).
# ---------------------------------------------------------------------------
def dqn_forward_ref(tp, state):
    x = state.reshape(-1, 1, _H0, _W0).astype(jnp.float32)

    def conv(x, w, b):
        y = jax.lax.conv_general_dilated(
            x, w, window_strides=(2, 2), padding=((1, 1), (1, 1)),
            dimension_numbers=("NCHW", "OIHW", "NCHW"))
        return jax.nn.relu(y + b.reshape(1, -1, 1, 1))

    x = conv(x, tp["c1w"], tp["c1b"])
    x = conv(x, tp["c2w"], tp["c2b"])
    x = conv(x, tp["c3w"], tp["c3b"])
    x = x.reshape(x.shape[0], _C3 * _H3 * _W3)          # NCHW flatten
    h = jax.nn.relu(x @ tp["f1w"].T + tp["f1b"])
    return h @ tp["f2w"].T + tp["f2b"]


if __name__ == "__main__":
    key = jax.random.PRNGKey(0)
    k_param, k_in = jax.random.split(key)

    action_size = 6
    batch = 2
    params, torch_params = init_params(action_size, k_param)
    state = jax.random.uniform(k_in, (batch, 1, 28, 28), jnp.float32)

    fwd = jax.jit(functools.partial(dqn_forward, action_size=action_size))
    q_values = fwd(params, state)
    jax.block_until_ready(q_values)

    assert q_values.shape == (batch, action_size)
    assert q_values.dtype == jnp.float32
    assert bool(jnp.all(jnp.isfinite(q_values)))

    q_ref = jax.jit(dqn_forward_ref)(torch_params, state)
    max_err = float(jnp.max(jnp.abs(q_values - q_ref)))
    assert bool(jnp.allclose(q_values, q_ref, rtol=2e-2, atol=2e-2)), max_err

    print("KERNEL_OK")
</pallas_src>

<mosaic_0001>
module attributes {stable_mosaic.version = 11 : i64} {
  func.func @_dqn_kernel(%arg0: i32, %arg1: memref<8x784xf32, #tpu.memory_space<vmem>>, %arg2: memref<56x224xbf16, #tpu.memory_space<vmem>>, %arg3: memref<56x224xbf16, #tpu.memory_space<vmem>>, %arg4: memref<1x224xf32, #tpu.memory_space<vmem>>, %arg5: memref<3x224x112xbf16, #tpu.memory_space<vmem>>, %arg6: memref<1x112xf32, #tpu.memory_space<vmem>>, %arg7: memref<3x112x40xbf16, #tpu.memory_space<vmem>>, %arg8: memref<1x40xf32, #tpu.memory_space<vmem>>, %arg9: memref<4x40x256xbf16, #tpu.memory_space<vmem>>, %arg10: memref<1x256xf32, #tpu.memory_space<vmem>>, %arg11: memref<256x128xbf16, #tpu.memory_space<vmem>>, %arg12: memref<1x128xf32, #tpu.memory_space<vmem>>, %arg13: memref<8x128xf32, #tpu.memory_space<vmem>>) attributes {dimension_semantics = [#tpu.dimension_semantics<parallel>], iteration_bounds = array<i64: 1>, scalar_prefetch = 0 : i64, scratch_operands = 0 : i64, tpu.core_type = #tpu.core_type<tc>, window_params = [{transform_indices = @transform_0, window_bounds = array<i64: 8, 784>}, {pipeline_mode = #tpu.pipeline_mode<synchronous>, transform_indices = @transform_1, window_bounds = array<i64: 56, 224>}, {pipeline_mode = #tpu.pipeline_mode<synchronous>, transform_indices = @transform_2, window_bounds = array<i64: 56, 224>}, {pipeline_mode = #tpu.pipeline_mode<synchronous>, transform_indices = @transform_3, window_bounds = array<i64: 1, 224>}, {pipeline_mode = #tpu.pipeline_mode<synchronous>, transform_indices = @transform_4, window_bounds = array<i64: 3, 224, 112>}, {pipeline_mode = #tpu.pipeline_mode<synchronous>, transform_indices = @transform_5, window_bounds = array<i64: 1, 112>}, {pipeline_mode = #tpu.pipeline_mode<synchronous>, transform_indices = @transform_6, window_bounds = array<i64: 3, 112, 40>}, {pipeline_mode = #tpu.pipeline_mode<synchronous>, transform_indices = @transform_7, window_bounds = array<i64: 1, 40>}, {pipeline_mode = #tpu.pipeline_mode<synchronous>, transform_indices = @transform_8, window_bounds = array<i64: 4, 40, 256>}, {pipeline_mode = #tpu.pipeline_mode<synchronous>, transform_indices = @transform_9, window_bounds = array<i64: 1, 256>}, {pipeline_mode = #tpu.pipeline_mode<synchronous>, transform_indices = @transform_10, window_bounds = array<i64: 256, 128>}, {pipeline_mode = #tpu.pipeline_mode<synchronous>, transform_indices = @transform_11, window_bounds = array<i64: 1, 128>}, {transform_indices = @transform_12, window_bounds = array<i64: 8, 128>}]} {
    %c0 = arith.constant 0 : index
    %c0_0 = arith.constant 0 : index
    %0 = vector.load %arg1[%c0, %c0_0] : memref<8x784xf32, #tpu.memory_space<vmem>>, vector<8x784xf32>
    %1 = arith.truncf %0 : vector<8x784xf32> to vector<8x784xbf16>
    %2 = vector.extract_strided_slice %1 {offsets = [0, 0], sizes = [8, 56], strides = [1, 1]} : vector<8x784xbf16> to vector<8x56xbf16>
    %3 = vector.extract_strided_slice %1 {offsets = [0, 56], sizes = [8, 56], strides = [1, 1]} : vector<8x784xbf16> to vector<8x56xbf16>
    %4 = vector.extract_strided_slice %1 {offsets = [0, 112], sizes = [8, 56], strides = [1, 1]} : vector<8x784xbf16> to vector<8x56xbf16>
    %5 = vector.extract_strided_slice %1 {offsets = [0, 168], sizes = [8, 56], strides = [1, 1]} : vector<8x784xbf16> to vector<8x56xbf16>
    %6 = vector.extract_strided_slice %1 {offsets = [0, 224], sizes = [8, 56], strides = [1, 1]} : vector<8x784xbf16> to vector<8x56xbf16>
    %7 = vector.extract_strided_slice %1 {offsets = [0, 280], sizes = [8, 56], strides = [1, 1]} : vector<8x784xbf16> to vector<8x56xbf16>
    %8 = vector.extract_strided_slice %1 {offsets = [0, 336], sizes = [8, 56], strides = [1, 1]} : vector<8x784xbf16> to vector<8x56xbf16>
    %9 = vector.extract_strided_slice %1 {offsets = [0, 392], sizes = [8, 56], strides = [1, 1]} : vector<8x784xbf16> to vector<8x56xbf16>
    %10 = vector.extract_strided_slice %1 {offsets = [0, 448], sizes = [8, 56], strides = [1, 1]} : vector<8x784xbf16> to vector<8x56xbf16>
    %11 = vector.extract_strided_slice %1 {offsets = [0, 504], sizes = [8, 56], strides = [1, 1]} : vector<8x784xbf16> to vector<8x56xbf16>
    %12 = vector.extract_strided_slice %1 {offsets = [0, 560], sizes = [8, 56], strides = [1, 1]} : vector<8x784xbf16> to vector<8x56xbf16>
    %13 = vector.extract_strided_slice %1 {offsets = [0, 616], sizes = [8, 56], strides = [1, 1]} : vector<8x784xbf16> to vector<8x56xbf16>
    %14 = vector.extract_strided_slice %1 {offsets = [0, 672], sizes = [8, 56], strides = [1, 1]} : vector<8x784xbf16> to vector<8x56xbf16>
    %15 = vector.extract_strided_slice %1 {offsets = [0, 728], sizes = [8, 56], strides = [1, 1]} : vector<8x784xbf16> to vector<8x56xbf16>
    %c0_1 = arith.constant 0 : index
    %c0_2 = arith.constant 0 : index
    %16 = vector.load %arg2[%c0_1, %c0_2] : memref<56x224xbf16, #tpu.memory_space<vmem>>, vector<56x224xbf16>
    %c0_3 = arith.constant 0 : index
    %c0_4 = arith.constant 0 : index
    %17 = vector.load %arg3[%c0_3, %c0_4] : memref<56x224xbf16, #tpu.memory_space<vmem>>, vector<56x224xbf16>
    %c0_5 = arith.constant 0 : index
    %c0_6 = arith.constant 0 : index
    %18 = vector.load %arg4[%c0_5, %c0_6] : memref<1x224xf32, #tpu.memory_space<vmem>>, vector<1x224xf32>
    %cst = arith.constant dense<0.000000e+00> : vector<8x224xf32>
    %19 = tpu.matmul %2, %16, %cst {dimension_numbers = #tpu.dot_dimension_numbers<[1], [0], [0], [1], [0, 0, 1, 1], [], []>} : vector<8x56xbf16>, vector<56x224xbf16>, vector<8x224xf32> -> vector<8x224xf32>
    %20 = vector.broadcast %18 : vector<1x224xf32> to vector<8x224xf32>
    %21 = arith.addf %19, %20 : vector<8x224xf32>
    %cst_7 = arith.constant 0.000000e+00 : f32
    %22 = vector.broadcast %cst_7 : f32 to vector<8x224xf32>
    %23 = arith.maximumf %21, %22 : vector<8x224xf32>
    %24 = arith.truncf %23 : vector<8x224xf32> to vector<8x224xbf16>
    %cst_8 = arith.constant dense<0.000000e+00> : vector<8x224xf32>
    %25 = tpu.matmul %3, %16, %cst_8 {dimension_numbers = #tpu.dot_dimension_numbers<[1], [0], [0], [1], [0, 0, 1, 1], [], []>} : vector<8x56xbf16>, vector<56x224xbf16>, vector<8x224xf32> -> vector<8x224xf32>
    %cst_9 = arith.constant dense<0.000000e+00> : vector<8x224xf32>
    %26 = tpu.matmul %2, %17, %cst_9 {dimension_numbers = #tpu.dot_dimension_numbers<[1], [0], [0], [1], [0, 0, 1, 1], [], []>} : vector<8x56xbf16>, vector<56x224xbf16>, vector<8x224xf32> -> vector<8x224xf32>
    %27 = arith.addf %25, %26 : vector<8x224xf32>
    %28 = vector.broadcast %18 : vector<1x224xf32> to vector<8x224xf32>
    %29 = arith.addf %27, %28 : vector<8x224xf32>
    %cst_10 = arith.constant 0.000000e+00 : f32
    %30 = vector.broadcast %cst_10 : f32 to vector<8x224xf32>
    %31 = arith.maximumf %29, %30 : vector<8x224xf32>
    %32 = arith.truncf %31 : vector<8x224xf32> to vector<8x224xbf16>
    %cst_11 = arith.constant dense<0.000000e+00> : vector<8x224xf32>
    %33 = tpu.matmul %4, %16, %cst_11 {dimension_numbers = #tpu.dot_dimension_numbers<[1], [0], [0], [1], [0, 0, 1, 1], [], []>} : vector<8x56xbf16>, vector<56x224xbf16>, vector<8x224xf32> -> vector<8x224xf32>
    %cst_12 = arith.constant dense<0.000000e+00> : vector<8x224xf32>
    %34 = tpu.matmul %3, %17, %cst_12 {dimension_numbers = #tpu.dot_dimension_numbers<[1], [0], [0], [1], [0, 0, 1, 1], [], []>} : vector<8x56xbf16>, vector<56x224xbf16>, vector<8x224xf32> -> vector<8x224xf32>
    %35 = arith.addf %33, %34 : vector<8x224xf32>
    %36 = vector.broadcast %18 : vector<1x224xf32> to vector<8x224xf32>
    %37 = arith.addf %35, %36 : vector<8x224xf32>
    %cst_13 = arith.constant 0.000000e+00 : f32
    %38 = vector.broadcast %cst_13 : f32 to vector<8x224xf32>
    %39 = arith.maximumf %37, %38 : vector<8x224xf32>
    %40 = arith.truncf %39 : vector<8x224xf32> to vector<8x224xbf16>
    %cst_14 = arith.constant dense<0.000000e+00> : vector<8x224xf32>
    %41 = tpu.matmul %5, %16, %cst_14 {dimension_numbers = #tpu.dot_dimension_numbers<[1], [0], [0], [1], [0, 0, 1, 1], [], []>} : vector<8x56xbf16>, vector<56x224xbf16>, vector<8x224xf32> -> vector<8x224xf32>
    %cst_15 = arith.constant dense<0.000000e+00> : vector<8x224xf32>
    %42 = tpu.matmul %4, %17, %cst_15 {dimension_numbers = #tpu.dot_dimension_numbers<[1], [0], [0], [1], [0, 0, 1, 1], [], []>} : vector<8x56xbf16>, vector<56x224xbf16>, vector<8x224xf32> -> vector<8x224xf32>
    %43 = arith.addf %41, %42 : vector<8x224xf32>
    %44 = vector.broadcast %18 : vector<1x224xf32> to vector<8x224xf32>
    %45 = arith.addf %43, %44 : vector<8x224xf32>
    %cst_16 = arith.constant 0.000000e+00 : f32
    %46 = vector.broadcast %cst_16 : f32 to vector<8x224xf32>
    %47 = arith.maximumf %45, %46 : vector<8x224xf32>
    %48 = arith.truncf %47 : vector<8x224xf32> to vector<8x224xbf16>
    %cst_17 = arith.constant dense<0.000000e+00> : vector<8x224xf32>
    %49 = tpu.matmul %6, %16, %cst_17 {dimension_numbers = #tpu.dot_dimension_numbers<[1], [0], [0], [1], [0, 0, 1, 1], [], []>} : vector<8x56xbf16>, vector<56x224xbf16>, vector<8x224xf32> -> vector<8x224xf32>
    %cst_18 = arith.constant dense<0.000000e+00> : vector<8x224xf32>
    %50 = tpu.matmul %5, %17, %cst_18 {dimension_numbers = #tpu.dot_dimension_numbers<[1], [0], [0], [1], [0, 0, 1, 1], [], []>} : vector<8x56xbf16>, vector<56x224xbf16>, vector<8x224xf32> -> vector<8x224xf32>
    %51 = arith.addf %49, %50 : vector<8x224xf32>
    %52 = vector.broadcast %18 : vector<1x224xf32> to vector<8x224xf32>
    %53 = arith.addf %51, %52 : vector<8x224xf32>
    %cst_19 = arith.constant 0.000000e+00 : f32
    %54 = vector.broadcast %cst_19 : f32 to vector<8x224xf32>
    %55 = arith.maximumf %53, %54 : vector<8x224xf32>
    %56 = arith.truncf %55 : vector<8x224xf32> to vector<8x224xbf16>
    %cst_20 = arith.constant dense<0.000000e+00> : vector<8x224xf32>
    %57 = tpu.matmul %7, %16, %cst_20 {dimension_numbers = #tpu.dot_dimension_numbers<[1], [0], [0], [1], [0, 0, 1, 1], [], []>} : vector<8x56xbf16>, vector<56x224xbf16>, vector<8x224xf32> -> vector<8x224xf32>
    %cst_21 = arith.constant dense<0.000000e+00> : vector<8x224xf32>
    %58 = tpu.matmul %6, %17, %cst_21 {dimension_numbers = #tpu.dot_dimension_numbers<[1], [0], [0], [1], [0, 0, 1, 1], [], []>} : vector<8x56xbf16>, vector<56x224xbf16>, vector<8x224xf32> -> vector<8x224xf32>
    %59 = arith.addf %57, %58 : vector<8x224xf32>
    %60 = vector.broadcast %18 : vector<1x224xf32> to vector<8x224xf32>
    %61 = arith.addf %59, %60 : vector<8x224xf32>
    %cst_22 = arith.constant 0.000000e+00 : f32
    %62 = vector.broadcast %cst_22 : f32 to vector<8x224xf32>
    %63 = arith.maximumf %61, %62 : vector<8x224xf32>
    %64 = arith.truncf %63 : vector<8x224xf32> to vector<8x224xbf16>
    %cst_23 = arith.constant dense<0.000000e+00> : vector<8x224xf32>
    %65 = tpu.matmul %8, %16, %cst_23 {dimension_numbers = #tpu.dot_dimension_numbers<[1], [0], [0], [1], [0, 0, 1, 1], [], []>} : vector<8x56xbf16>, vector<56x224xbf16>, vector<8x224xf32> -> vector<8x224xf32>
    %cst_24 = arith.constant dense<0.000000e+00> : vector<8x224xf32>
    %66 = tpu.matmul %7, %17, %cst_24 {dimension_numbers = #tpu.dot_dimension_numbers<[1], [0], [0], [1], [0, 0, 1, 1], [], []>} : vector<8x56xbf16>, vector<56x224xbf16>, vector<8x224xf32> -> vector<8x224xf32>
    %67 = arith.addf %65, %66 : vector<8x224xf32>
    %68 = vector.broadcast %18 : vector<1x224xf32> to vector<8x224xf32>
    %69 = arith.addf %67, %68 : vector<8x224xf32>
    %cst_25 = arith.constant 0.000000e+00 : f32
    %70 = vector.broadcast %cst_25 : f32 to vector<8x224xf32>
    %71 = arith.maximumf %69, %70 : vector<8x224xf32>
    %72 = arith.truncf %71 : vector<8x224xf32> to vector<8x224xbf16>
    %cst_26 = arith.constant dense<0.000000e+00> : vector<8x224xf32>
    %73 = tpu.matmul %9, %16, %cst_26 {dimension_numbers = #tpu.dot_dimension_numbers<[1], [0], [0], [1], [0, 0, 1, 1], [], []>} : vector<8x56xbf16>, vector<56x224xbf16>, vector<8x224xf32> -> vector<8x224xf32>
    %cst_27 = arith.constant dense<0.000000e+00> : vector<8x224xf32>
    %74 = tpu.matmul %8, %17, %cst_27 {dimension_numbers = #tpu.dot_dimension_numbers<[1], [0], [0], [1], [0, 0, 1, 1], [], []>} : vector<8x56xbf16>, vector<56x224xbf16>, vector<8x224xf32> -> vector<8x224xf32>
    %75 = arith.addf %73, %74 : vector<8x224xf32>
    %76 = vector.broadcast %18 : vector<1x224xf32> to vector<8x224xf32>
    %77 = arith.addf %75, %76 : vector<8x224xf32>
    %cst_28 = arith.constant 0.000000e+00 : f32
    %78 = vector.broadcast %cst_28 : f32 to vector<8x224xf32>
    %79 = arith.maximumf %77, %78 : vector<8x224xf32>
    %80 = arith.truncf %79 : vector<8x224xf32> to vector<8x224xbf16>
    %cst_29 = arith.constant dense<0.000000e+00> : vector<8x224xf32>
    %81 = tpu.matmul %10, %16, %cst_29 {dimension_numbers = #tpu.dot_dimension_numbers<[1], [0], [0], [1], [0, 0, 1, 1], [], []>} : vector<8x56xbf16>, vector<56x224xbf16>, vector<8x224xf32> -> vector<8x224xf32>
    %cst_30 = arith.constant dense<0.000000e+00> : vector<8x224xf32>
    %82 = tpu.matmul %9, %17, %cst_30 {dimension_numbers = #tpu.dot_dimension_numbers<[1], [0], [0], [1], [0, 0, 1, 1], [], []>} : vector<8x56xbf16>, vector<56x224xbf16>, vector<8x224xf32> -> vector<8x224xf32>
    %83 = arith.addf %81, %82 : vector<8x224xf32>
    %84 = vector.broadcast %18 : vector<1x224xf32> to vector<8x224xf32>
    %85 = arith.addf %83, %84 : vector<8x224xf32>
    %cst_31 = arith.constant 0.000000e+00 : f32
    %86 = vector.broadcast %cst_31 : f32 to vector<8x224xf32>
    %87 = arith.maximumf %85, %86 : vector<8x224xf32>
    %88 = arith.truncf %87 : vector<8x224xf32> to vector<8x224xbf16>
    %cst_32 = arith.constant dense<0.000000e+00> : vector<8x224xf32>
    %89 = tpu.matmul %11, %16, %cst_32 {dimension_numbers = #tpu.dot_dimension_numbers<[1], [0], [0], [1], [0, 0, 1, 1], [], []>} : vector<8x56xbf16>, vector<56x224xbf16>, vector<8x224xf32> -> vector<8x224xf32>
    %cst_33 = arith.constant dense<0.000000e+00> : vector<8x224xf32>
    %90 = tpu.matmul %10, %17, %cst_33 {dimension_numbers = #tpu.dot_dimension_numbers<[1], [0], [0], [1], [0, 0, 1, 1], [], []>} : vector<8x56xbf16>, vector<56x224xbf16>, vector<8x224xf32> -> vector<8x224xf32>
    %91 = arith.addf %89, %90 : vector<8x224xf32>
    %92 = vector.broadcast %18 : vector<1x224xf32> to vector<8x224xf32>
    %93 = arith.addf %91, %92 : vector<8x224xf32>
    %cst_34 = arith.constant 0.000000e+00 : f32
    %94 = vector.broadcast %cst_34 : f32 to vector<8x224xf32>
    %95 = arith.maximumf %93, %94 : vector<8x224xf32>
    %96 = arith.truncf %95 : vector<8x224xf32> to vector<8x224xbf16>
    %cst_35 = arith.constant dense<0.000000e+00> : vector<8x224xf32>
    %97 = tpu.matmul %12, %16, %cst_35 {dimension_numbers = #tpu.dot_dimension_numbers<[1], [0], [0], [1], [0, 0, 1, 1], [], []>} : vector<8x56xbf16>, vector<56x224xbf16>, vector<8x224xf32> -> vector<8x224xf32>
    %cst_36 = arith.constant dense<0.000000e+00> : vector<8x224xf32>
    %98 = tpu.matmul %11, %17, %cst_36 {dimension_numbers = #tpu.dot_dimension_numbers<[1], [0], [0], [1], [0, 0, 1, 1], [], []>} : vector<8x56xbf16>, vector<56x224xbf16>, vector<8x224xf32> -> vector<8x224xf32>
    %99 = arith.addf %97, %98 : vector<8x224xf32>
    %100 = vector.broadcast %18 : vector<1x224xf32> to vector<8x224xf32>
    %101 = arith.addf %99, %100 : vector<8x224xf32>
    %cst_37 = arith.constant 0.000000e+00 : f32
    %102 = vector.broadcast %cst_37 : f32 to vector<8x224xf32>
    %103 = arith.maximumf %101, %102 : vector<8x224xf32>
    %104 = arith.truncf %103 : vector<8x224xf32> to vector<8x224xbf16>
    %cst_38 = arith.constant dense<0.000000e+00> : vector<8x224xf32>
    %105 = tpu.matmul %13, %16, %cst_38 {dimension_numbers = #tpu.dot_dimension_numbers<[1], [0], [0], [1], [0, 0, 1, 1], [], []>} : vector<8x56xbf16>, vector<56x224xbf16>, vector<8x224xf32> -> vector<8x224xf32>
    %cst_39 = arith.constant dense<0.000000e+00> : vector<8x224xf32>
    %106 = tpu.matmul %12, %17, %cst_39 {dimension_numbers = #tpu.dot_dimension_numbers<[1], [0], [0], [1], [0, 0, 1, 1], [], []>} : vector<8x56xbf16>, vector<56x224xbf16>, vector<8x224xf32> -> vector<8x224xf32>
    %107 = arith.addf %105, %106 : vector<8x224xf32>
    %108 = vector.broadcast %18 : vector<1x224xf32> to vector<8x224xf32>
    %109 = arith.addf %107, %108 : vector<8x224xf32>
    %cst_40 = arith.constant 0.000000e+00 : f32
    %110 = vector.broadcast %cst_40 : f32 to vector<8x224xf32>
    %111 = arith.maximumf %109, %110 : vector<8x224xf32>
    %112 = arith.truncf %111 : vector<8x224xf32> to vector<8x224xbf16>
    %cst_41 = arith.constant dense<0.000000e+00> : vector<8x224xf32>
    %113 = tpu.matmul %14, %16, %cst_41 {dimension_numbers = #tpu.dot_dimension_numbers<[1], [0], [0], [1], [0, 0, 1, 1], [], []>} : vector<8x56xbf16>, vector<56x224xbf16>, vector<8x224xf32> -> vector<8x224xf32>
    %cst_42 = arith.constant dense<0.000000e+00> : vector<8x224xf32>
    %114 = tpu.matmul %13, %17, %cst_42 {dimension_numbers = #tpu.dot_dimension_numbers<[1], [0], [0], [1], [0, 0, 1, 1], [], []>} : vector<8x56xbf16>, vector<56x224xbf16>, vector<8x224xf32> -> vector<8x224xf32>
    %115 = arith.addf %113, %114 : vector<8x224xf32>
    %116 = vector.broadcast %18 : vector<1x224xf32> to vector<8x224xf32>
    %117 = arith.addf %115, %116 : vector<8x224xf32>
    %cst_43 = arith.constant 0.000000e+00 : f32
    %118 = vector.broadcast %cst_43 : f32 to vector<8x224xf32>
    %119 = arith.maximumf %117, %118 : vector<8x224xf32>
    %120 = arith.truncf %119 : vector<8x224xf32> to vector<8x224xbf16>
    %cst_44 = arith.constant dense<0.000000e+00> : vector<8x224xf32>
    %121 = tpu.matmul %15, %16, %cst_44 {dimension_numbers = #tpu.dot_dimension_numbers<[1], [0], [0], [1], [0, 0, 1, 1], [], []>} : vector<8x56xbf16>, vector<56x224xbf16>, vector<8x224xf32> -> vector<8x224xf32>
    %cst_45 = arith.constant dense<0.000000e+00> : vector<8x224xf32>
    %122 = tpu.matmul %14, %17, %cst_45 {dimension_numbers = #tpu.dot_dimension_numbers<[1], [0], [0], [1], [0, 0, 1, 1], [], []>} : vector<8x56xbf16>, vector<56x224xbf16>, vector<8x224xf32> -> vector<8x224xf32>
    %123 = arith.addf %121, %122 : vector<8x224xf32>
    %124 = vector.broadcast %18 : vector<1x224xf32> to vector<8x224xf32>
    %125 = arith.addf %123, %124 : vector<8x224xf32>
    %cst_46 = arith.constant 0.000000e+00 : f32
    %126 = vector.broadcast %cst_46 : f32 to vector<8x224xf32>
    %127 = arith.maximumf %125, %126 : vector<8x224xf32>
    %128 = arith.truncf %127 : vector<8x224xf32> to vector<8x224xbf16>
    %c0_47 = arith.constant 0 : index
    %c0_48 = arith.constant 0 : index
    %c0_49 = arith.constant 0 : index
    %129 = vector.load %arg5[%c0_47, %c0_48, %c0_49] : memref<3x224x112xbf16, #tpu.memory_space<vmem>>, vector<1x224x112xbf16>
    %130 = vector.shape_cast %129 : vector<1x224x112xbf16> to vector<224x112xbf16>
    %c1 = arith.constant 1 : index
    %c0_50 = arith.constant 0 : index
    %c0_51 = arith.constant 0 : index
    %131 = vector.load %arg5[%c1, %c0_50, %c0_51] : memref<3x224x112xbf16, #tpu.memory_space<vmem>>, vector<1x224x112xbf16>
    %132 = vector.shape_cast %131 : vector<1x224x112xbf16> to vector<224x112xbf16>
    %c2 = arith.constant 2 : index
    %c0_52 = arith.constant 0 : index
    %c0_53 = arith.constant 0 : index
    %133 = vector.load %arg5[%c2, %c0_52, %c0_53] : memref<3x224x112xbf16, #tpu.memory_space<vmem>>, vector<1x224x112xbf16>
    %134 = vector.shape_cast %133 : vector<1x224x112xbf16> to vector<224x112xbf16>
    %c0_54 = arith.constant 0 : index
    %c0_55 = arith.constant 0 : index
    %135 = vector.load %arg6[%c0_54, %c0_55] : memref<1x112xf32, #tpu.memory_space<vmem>>, vector<1x112xf32>
    %cst_56 = arith.constant dense<0.000000e+00> : vector<8x112xf32>
    %136 = tpu.matmul %24, %132, %cst_56 {dimension_numbers = #tpu.dot_dimension_numbers<[1], [0], [0], [1], [0, 0, 1, 1], [], []>} : vector<8x224xbf16>, vector<224x112xbf16>, vector<8x112xf32> -> vector<8x112xf32>
    %cst_57 = arith.constant dense<0.000000e+00> : vector<8x112xf32>
    %137 = tpu.matmul %32, %134, %cst_57 {dimension_numbers = #tpu.dot_dimension_numbers<[1], [0], [0], [1], [0, 0, 1, 1], [], []>} : vector<8x224xbf16>, vector<224x112xbf16>, vector<8x112xf32> -> vector<8x112xf32>
    %138 = arith.addf %136, %137 : vector<8x112xf32>
    %139 = vector.broadcast %135 : vector<1x112xf32> to vector<8x112xf32>
    %140 = arith.addf %138, %139 : vector<8x112xf32>
    %cst_58 = arith.constant 0.000000e+00 : f32
    %141 = vector.broadcast %cst_58 : f32 to vector<8x112xf32>
    %142 = arith.maximumf %140, %141 : vector<8x112xf32>
    %143 = arith.truncf %142 : vector<8x112xf32> to vector<8x112xbf16>
    %cst_59 = arith.constant dense<0.000000e+00> : vector<8x112xf32>
    %144 = tpu.matmul %32, %130, %cst_59 {dimension_numbers = #tpu.dot_dimension_numbers<[1], [0], [0], [1], [0, 0, 1, 1], [], []>} : vector<8x224xbf16>, vector<224x112xbf16>, vector<8x112xf32> -> vector<8x112xf32>
    %cst_60 = arith.constant dense<0.000000e+00> : vector<8x112xf32>
    %145 = tpu.matmul %40, %132, %cst_60 {dimension_numbers = #tpu.dot_dimension_numbers<[1], [0], [0], [1], [0, 0, 1, 1], [], []>} : vector<8x224xbf16>, vector<224x112xbf16>, vector<8x112xf32> -> vector<8x112xf32>
    %146 = arith.addf %144, %145 : vector<8x112xf32>
    %cst_61 = arith.constant dense<0.000000e+00> : vector<8x112xf32>
    %147 = tpu.matmul %48, %134, %cst_61 {dimension_numbers = #tpu.dot_dimension_numbers<[1], [0], [0], [1], [0, 0, 1, 1], [], []>} : vector<8x224xbf16>, vector<224x112xbf16>, vector<8x112xf32> -> vector<8x112xf32>
    %148 = arith.addf %146, %147 : vector<8x112xf32>
    %149 = vector.broadcast %135 : vector<1x112xf32> to vector<8x112xf32>
    %150 = arith.addf %148, %149 : vector<8x112xf32>
    %cst_62 = arith.constant 0.000000e+00 : f32
    %151 = vector.broadcast %cst_62 : f32 to vector<8x112xf32>
    %152 = arith.maximumf %150, %151 : vector<8x112xf32>
    %153 = arith.truncf %152 : vector<8x112xf32> to vector<8x112xbf16>
    %cst_63 = arith.constant dense<0.000000e+00> : vector<8x112xf32>
    %154 = tpu.matmul %48, %130, %cst_63 {dimension_numbers = #tpu.dot_dimension_numbers<[1], [0], [0], [1], [0, 0, 1, 1], [], []>} : vector<8x224xbf16>, vector<224x112xbf16>, vector<8x112xf32> -> vector<8x112xf32>
    %cst_64 = arith.constant dense<0.000000e+00> : vector<8x112xf32>
    %155 = tpu.matmul %56, %132, %cst_64 {dimension_numbers = #tpu.dot_dimension_numbers<[1], [0], [0], [1], [0, 0, 1, 1], [], []>} : vector<8x224xbf16>, vector<224x112xbf16>, vector<8x112xf32> -> vector<8x112xf32>
    %156 = arith.addf %154, %155 : vector<8x112xf32>
    %cst_65 = arith.constant dense<0.000000e+00> : vector<8x112xf32>
    %157 = tpu.matmul %64, %134, %cst_65 {dimension_numbers = #tpu.dot_dimension_numbers<[1], [0], [0], [1], [0, 0, 1, 1], [], []>} : vector<8x224xbf16>, vector<224x112xbf16>, vector<8x112xf32> -> vector<8x112xf32>
    %158 = arith.addf %156, %157 : vector<8x112xf32>
    %159 = vector.broadcast %135 : vector<1x112xf32> to vector<8x112xf32>
    %160 = arith.addf %158, %159 : vector<8x112xf32>
    %cst_66 = arith.constant 0.000000e+00 : f32
    %161 = vector.broadcast %cst_66 : f32 to vector<8x112xf32>
    %162 = arith.maximumf %160, %161 : vector<8x112xf32>
    %163 = arith.truncf %162 : vector<8x112xf32> to vector<8x112xbf16>
    %cst_67 = arith.constant dense<0.000000e+00> : vector<8x112xf32>
    %164 = tpu.matmul %64, %130, %cst_67 {dimension_numbers = #tpu.dot_dimension_numbers<[1], [0], [0], [1], [0, 0, 1, 1], [], []>} : vector<8x224xbf16>, vector<224x112xbf16>, vector<8x112xf32> -> vector<8x112xf32>
    %cst_68 = arith.constant dense<0.000000e+00> : vector<8x112xf32>
    %165 = tpu.matmul %72, %132, %cst_68 {dimension_numbers = #tpu.dot_dimension_numbers<[1], [0], [0], [1], [0, 0, 1, 1], [], []>} : vector<8x224xbf16>, vector<224x112xbf16>, vector<8x112xf32> -> vector<8x112xf32>
    %166 = arith.addf %164, %165 : vector<8x112xf32>
    %cst_69 = arith.constant dense<0.000000e+00> : vector<8x112xf32>
    %167 = tpu.matmul %80, %134, %cst_69 {dimension_numbers = #tpu.dot_dimension_numbers<[1], [0], [0], [1], [0, 0, 1, 1], [], []>} : vector<8x224xbf16>, vector<224x112xbf16>, vector<8x112xf32> -> vector<8x112xf32>
    %168 = arith.addf %166, %167 : vector<8x112xf32>
    %169 = vector.broadcast %135 : vector<1x112xf32> to vector<8x112xf32>
    %170 = arith.addf %168, %169 : vector<8x112xf32>
    %cst_70 = arith.constant 0.000000e+00 : f32
    %171 = vector.broadcast %cst_70 : f32 to vector<8x112xf32>
    %172 = arith.maximumf %170, %171 : vector<8x112xf32>
    %173 = arith.truncf %172 : vector<8x112xf32> to vector<8x112xbf16>
    %cst_71 = arith.constant dense<0.000000e+00> : vector<8x112xf32>
    %174 = tpu.matmul %80, %130, %cst_71 {dimension_numbers = #tpu.dot_dimension_numbers<[1], [0], [0], [1], [0, 0, 1, 1], [], []>} : vector<8x224xbf16>, vector<224x112xbf16>, vector<8x112xf32> -> vector<8x112xf32>
    %cst_72 = arith.constant dense<0.000000e+00> : vector<8x112xf32>
    %175 = tpu.matmul %88, %132, %cst_72 {dimension_numbers = #tpu.dot_dimension_numbers<[1], [0], [0], [1], [0, 0, 1, 1], [], []>} : vector<8x224xbf16>, vector<224x112xbf16>, vector<8x112xf32> -> vector<8x112xf32>
    %176 = arith.addf %174, %175 : vector<8x112xf32>
    %cst_73 = arith.constant dense<0.000000e+00> : vector<8x112xf32>
    %177 = tpu.matmul %96, %134, %cst_73 {dimension_numbers = #tpu.dot_dimension_numbers<[1], [0], [0], [1], [0, 0, 1, 1], [], []>} : vector<8x224xbf16>, vector<224x112xbf16>, vector<8x112xf32> -> vector<8x112xf32>
    %178 = arith.addf %176, %177 : vector<8x112xf32>
    %179 = vector.broadcast %135 : vector<1x112xf32> to vector<8x112xf32>
    %180 = arith.addf %178, %179 : vector<8x112xf32>
    %cst_74 = arith.constant 0.000000e+00 : f32
    %181 = vector.broadcast %cst_74 : f32 to vector<8x112xf32>
    %182 = arith.maximumf %180, %181 : vector<8x112xf32>
    %183 = arith.truncf %182 : vector<8x112xf32> to vector<8x112xbf16>
    %cst_75 = arith.constant dense<0.000000e+00> : vector<8x112xf32>
    %184 = tpu.matmul %96, %130, %cst_75 {dimension_numbers = #tpu.dot_dimension_numbers<[1], [0], [0], [1], [0, 0, 1, 1], [], []>} : vector<8x224xbf16>, vector<224x112xbf16>, vector<8x112xf32> -> vector<8x112xf32>
    %cst_76 = arith.constant dense<0.000000e+00> : vector<8x112xf32>
    %185 = tpu.matmul %104, %132, %cst_76 {dimension_numbers = #tpu.dot_dimension_numbers<[1], [0], [0], [1], [0, 0, 1, 1], [], []>} : vector<8x224xbf16>, vector<224x112xbf16>, vector<8x112xf32> -> vector<8x112xf32>
    %186 = arith.addf %184, %185 : vector<8x112xf32>
    %cst_77 = arith.constant dense<0.000000e+00> : vector<8x112xf32>
    %187 = tpu.matmul %112, %134, %cst_77 {dimension_numbers = #tpu.dot_dimension_numbers<[1], [0], [0], [1], [0, 0, 1, 1], [], []>} : vector<8x224xbf16>, vector<224x112xbf16>, vector<8x112xf32> -> vector<8x112xf32>
    %188 = arith.addf %186, %187 : vector<8x112xf32>
    %189 = vector.broadcast %135 : vector<1x112xf32> to vector<8x112xf32>
    %190 = arith.addf %188, %189 : vector<8x112xf32>
    %cst_78 = arith.constant 0.000000e+00 : f32
    %191 = vector.broadcast %cst_78 : f32 to vector<8x112xf32>
    %192 = arith.maximumf %190, %191 : vector<8x112xf32>
    %193 = arith.truncf %192 : vector<8x112xf32> to vector<8x112xbf16>
    %cst_79 = arith.constant dense<0.000000e+00> : vector<8x112xf32>
    %194 = tpu.matmul %112, %130, %cst_79 {dimension_numbers = #tpu.dot_dimension_numbers<[1], [0], [0], [1], [0, 0, 1, 1], [], []>} : vector<8x224xbf16>, vector<224x112xbf16>, vector<8x112xf32> -> vector<8x112xf32>
    %cst_80 = arith.constant dense<0.000000e+00> : vector<8x112xf32>
    %195 = tpu.matmul %120, %132, %cst_80 {dimension_numbers = #tpu.dot_dimension_numbers<[1], [0], [0], [1], [0, 0, 1, 1], [], []>} : vector<8x224xbf16>, vector<224x112xbf16>, vector<8x112xf32> -> vector<8x112xf32>
    %196 = arith.addf %194, %195 : vector<8x112xf32>
    %cst_81 = arith.constant dense<0.000000e+00> : vector<8x112xf32>
    %197 = tpu.matmul %128, %134, %cst_81 {dimension_numbers = #tpu.dot_dimension_numbers<[1], [0], [0], [1], [0, 0, 1, 1], [], []>} : vector<8x224xbf16>, vector<224x112xbf16>, vector<8x112xf32> -> vector<8x112xf32>
    %198 = arith.addf %196, %197 : vector<8x112xf32>
    %199 = vector.broadcast %135 : vector<1x112xf32> to vector<8x112xf32>
    %200 = arith.addf %198, %199 : vector<8x112xf32>
    %cst_82 = arith.constant 0.000000e+00 : f32
    %201 = vector.broadcast %cst_82 : f32 to vector<8x112xf32>
    %202 = arith.maximumf %200, %201 : vector<8x112xf32>
    %203 = arith.truncf %202 : vector<8x112xf32> to vector<8x112xbf16>
    %c0_83 = arith.constant 0 : index
    %c0_84 = arith.constant 0 : index
    %c0_85 = arith.constant 0 : index
    %204 = vector.load %arg7[%c0_83, %c0_84, %c0_85] : memref<3x112x40xbf16, #tpu.memory_space<vmem>>, vector<1x112x40xbf16>
    %205 = vector.shape_cast %204 : vector<1x112x40xbf16> to vector<112x40xbf16>
    %c1_86 = arith.constant 1 : index
    %c0_87 = arith.constant 0 : index
    %c0_88 = arith.constant 0 : index
    %206 = vector.load %arg7[%c1_86, %c0_87, %c0_88] : memref<3x112x40xbf16, #tpu.memory_space<vmem>>, vector<1x112x40xbf16>
    %207 = vector.shape_cast %206 : vector<1x112x40xbf16> to vector<112x40xbf16>
    %c2_89 = arith.constant 2 : index
    %c0_90 = arith.constant 0 : index
    %c0_91 = arith.constant 0 : index
    %208 = vector.load %arg7[%c2_89, %c0_90, %c0_91] : memref<3x112x40xbf16, #tpu.memory_space<vmem>>, vector<1x112x40xbf16>
    %209 = vector.shape_cast %208 : vector<1x112x40xbf16> to vector<112x40xbf16>
    %c0_92 = arith.constant 0 : index
    %c0_93 = arith.constant 0 : index
    %210 = vector.load %arg8[%c0_92, %c0_93] : memref<1x40xf32, #tpu.memory_space<vmem>>, vector<1x40xf32>
    %cst_94 = arith.constant dense<0.000000e+00> : vector<8x40xf32>
    %211 = tpu.matmul %143, %207, %cst_94 {dimension_numbers = #tpu.dot_dimension_numbers<[1], [0], [0], [1], [0, 0, 1, 1], [], []>} : vector<8x112xbf16>, vector<112x40xbf16>, vector<8x40xf32> -> vector<8x40xf32>
    %cst_95 = arith.constant dense<0.000000e+00> : vector<8x40xf32>
    %212 = tpu.matmul %153, %209, %cst_95 {dimension_numbers = #tpu.dot_dimension_numbers<[1], [0], [0], [1], [0, 0, 1, 1], [], []>} : vector<8x112xbf16>, vector<112x40xbf16>, vector<8x40xf32> -> vector<8x40xf32>
    %213 = arith.addf %211, %212 : vector<8x40xf32>
    %214 = vector.broadcast %210 : vector<1x40xf32> to vector<8x40xf32>
    %215 = arith.addf %213, %214 : vector<8x40xf32>
    %cst_96 = arith.constant 0.000000e+00 : f32
    %216 = vector.broadcast %cst_96 : f32 to vector<8x40xf32>
    %217 = arith.maximumf %215, %216 : vector<8x40xf32>
    %218 = arith.truncf %217 : vector<8x40xf32> to vector<8x40xbf16>
    %cst_97 = arith.constant dense<0.000000e+00> : vector<8x40xf32>
    %219 = tpu.matmul %153, %205, %cst_97 {dimension_numbers = #tpu.dot_dimension_numbers<[1], [0], [0], [1], [0, 0, 1, 1], [], []>} : vector<8x112xbf16>, vector<112x40xbf16>, vector<8x40xf32> -> vector<8x40xf32>
    %cst_98 = arith.constant dense<0.000000e+00> : vector<8x40xf32>
    %220 = tpu.matmul %163, %207, %cst_98 {dimension_numbers = #tpu.dot_dimension_numbers<[1], [0], [0], [1], [0, 0, 1, 1], [], []>} : vector<8x112xbf16>, vector<112x40xbf16>, vector<8x40xf32> -> vector<8x40xf32>
    %221 = arith.addf %219, %220 : vector<8x40xf32>
    %cst_99 = arith.constant dense<0.000000e+00> : vector<8x40xf32>
    %222 = tpu.matmul %173, %209, %cst_99 {dimension_numbers = #tpu.dot_dimension_numbers<[1], [0], [0], [1], [0, 0, 1, 1], [], []>} : vector<8x112xbf16>, vector<112x40xbf16>, vector<8x40xf32> -> vector<8x40xf32>
    %223 = arith.addf %221, %222 : vector<8x40xf32>
    %224 = vector.broadcast %210 : vector<1x40xf32> to vector<8x40xf32>
    %225 = arith.addf %223, %224 : vector<8x40xf32>
    %cst_100 = arith.constant 0.000000e+00 : f32
    %226 = vector.broadcast %cst_100 : f32 to vector<8x40xf32>
    %227 = arith.maximumf %225, %226 : vector<8x40xf32>
    %228 = arith.truncf %227 : vector<8x40xf32> to vector<8x40xbf16>
    %cst_101 = arith.constant dense<0.000000e+00> : vector<8x40xf32>
    %229 = tpu.matmul %173, %205, %cst_101 {dimension_numbers = #tpu.dot_dimension_numbers<[1], [0], [0], [1], [0, 0, 1, 1], [], []>} : vector<8x112xbf16>, vector<112x40xbf16>, vector<8x40xf32> -> vector<8x40xf32>
    %cst_102 = arith.constant dense<0.000000e+00> : vector<8x40xf32>
    %230 = tpu.matmul %183, %207, %cst_102 {dimension_numbers = #tpu.dot_dimension_numbers<[1], [0], [0], [1], [0, 0, 1, 1], [], []>} : vector<8x112xbf16>, vector<112x40xbf16>, vector<8x40xf32> -> vector<8x40xf32>
    %231 = arith.addf %229, %230 : vector<8x40xf32>
    %cst_103 = arith.constant dense<0.000000e+00> : vector<8x40xf32>
    %232 = tpu.matmul %193, %209, %cst_103 {dimension_numbers = #tpu.dot_dimension_numbers<[1], [0], [0], [1], [0, 0, 1, 1], [], []>} : vector<8x112xbf16>, vector<112x40xbf16>, vector<8x40xf32> -> vector<8x40xf32>
    %233 = arith.addf %231, %232 : vector<8x40xf32>
    %234 = vector.broadcast %210 : vector<1x40xf32> to vector<8x40xf32>
    %235 = arith.addf %233, %234 : vector<8x40xf32>
    %cst_104 = arith.constant 0.000000e+00 : f32
    %236 = vector.broadcast %cst_104 : f32 to vector<8x40xf32>
    %237 = arith.maximumf %235, %236 : vector<8x40xf32>
    %238 = arith.truncf %237 : vector<8x40xf32> to vector<8x40xbf16>
    %cst_105 = arith.constant dense<0.000000e+00> : vector<8x40xf32>
    %239 = tpu.matmul %193, %205, %cst_105 {dimension_numbers = #tpu.dot_dimension_numbers<[1], [0], [0], [1], [0, 0, 1, 1], [], []>} : vector<8x112xbf16>, vector<112x40xbf16>, vector<8x40xf32> -> vector<8x40xf32>
    %cst_106 = arith.constant dense<0.000000e+00> : vector<8x40xf32>
    %240 = tpu.matmul %203, %207, %cst_106 {dimension_numbers = #tpu.dot_dimension_numbers<[1], [0], [0], [1], [0, 0, 1, 1], [], []>} : vector<8x112xbf16>, vector<112x40xbf16>, vector<8x40xf32> -> vector<8x40xf32>
    %241 = arith.addf %239, %240 : vector<8x40xf32>
    %242 = vector.broadcast %210 : vector<1x40xf32> to vector<8x40xf32>
    %243 = arith.addf %241, %242 : vector<8x40xf32>
    %cst_107 = arith.constant 0.000000e+00 : f32
    %244 = vector.broadcast %cst_107 : f32 to vector<8x40xf32>
    %245 = arith.maximumf %243, %244 : vector<8x40xf32>
    %246 = arith.truncf %245 : vector<8x40xf32> to vector<8x40xbf16>
    %c0_108 = arith.constant 0 : index
    %c0_109 = arith.constant 0 : index
    %c0_110 = arith.constant 0 : index
    %247 = vector.load %arg9[%c0_108, %c0_109, %c0_110] : memref<4x40x256xbf16, #tpu.memory_space<vmem>>, vector<1x40x256xbf16>
    %248 = vector.shape_cast %247 : vector<1x40x256xbf16> to vector<40x256xbf16>
    %cst_111 = arith.constant dense<0.000000e+00> : vector<8x256xf32>
    %249 = tpu.matmul %218, %248, %cst_111 {dimension_numbers = #tpu.dot_dimension_numbers<[1], [0], [0], [1], [0, 0, 1, 1], [], []>} : vector<8x40xbf16>, vector<40x256xbf16>, vector<8x256xf32> -> vector<8x256xf32>
    %c1_112 = arith.constant 1 : index
    %c0_113 = arith.constant 0 : index
    %c0_114 = arith.constant 0 : index
    %250 = vector.load %arg9[%c1_112, %c0_113, %c0_114] : memref<4x40x256xbf16, #tpu.memory_space<vmem>>, vector<1x40x256xbf16>
    %251 = vector.shape_cast %250 : vector<1x40x256xbf16> to vector<40x256xbf16>
    %cst_115 = arith.constant dense<0.000000e+00> : vector<8x256xf32>
    %252 = tpu.matmul %228, %251, %cst_115 {dimension_numbers = #tpu.dot_dimension_numbers<[1], [0], [0], [1], [0, 0, 1, 1], [], []>} : vector<8x40xbf16>, vector<40x256xbf16>, vector<8x256xf32> -> vector<8x256xf32>
    %253 = arith.addf %249, %252 : vector<8x256xf32>
    %c2_116 = arith.constant 2 : index
    %c0_117 = arith.constant 0 : index
    %c0_118 = arith.constant 0 : index
    %254 = vector.load %arg9[%c2_116, %c0_117, %c0_118] : memref<4x40x256xbf16, #tpu.memory_space<vmem>>, vector<1x40x256xbf16>
    %255 = vector.shape_cast %254 : vector<1x40x256xbf16> to vector<40x256xbf16>
    %cst_119 = arith.constant dense<0.000000e+00> : vector<8x256xf32>
    %256 = tpu.matmul %238, %255, %cst_119 {dimension_numbers = #tpu.dot_dimension_numbers<[1], [0], [0], [1], [0, 0, 1, 1], [], []>} : vector<8x40xbf16>, vector<40x256xbf16>, vector<8x256xf32> -> vector<8x256xf32>
    %257 = arith.addf %253, %256 : vector<8x256xf32>
    %c3 = arith.constant 3 : index
    %c0_120 = arith.constant 0 : index
    %c0_121 = arith.constant 0 : index
    %258 = vector.load %arg9[%c3, %c0_120, %c0_121] : memref<4x40x256xbf16, #tpu.memory_space<vmem>>, vector<1x40x256xbf16>
    %259 = vector.shape_cast %258 : vector<1x40x256xbf16> to vector<40x256xbf16>
    %cst_122 = arith.constant dense<0.000000e+00> : vector<8x256xf32>
    %260 = tpu.matmul %246, %259, %cst_122 {dimension_numbers = #tpu.dot_dimension_numbers<[1], [0], [0], [1], [0, 0, 1, 1], [], []>} : vector<8x40xbf16>, vector<40x256xbf16>, vector<8x256xf32> -> vector<8x256xf32>
    %261 = arith.addf %257, %260 : vector<8x256xf32>
    %c0_123 = arith.constant 0 : index
    %c0_124 = arith.constant 0 : index
    %262 = vector.load %arg10[%c0_123, %c0_124] : memref<1x256xf32, #tpu.memory_space<vmem>>, vector<1x256xf32>
    %263 = vector.broadcast %262 : vector<1x256xf32> to vector<8x256xf32>
    %264 = arith.addf %261, %263 : vector<8x256xf32>
    %cst_125 = arith.constant 0.000000e+00 : f32
    %265 = vector.broadcast %cst_125 : f32 to vector<8x256xf32>
    %266 = arith.maximumf %264, %265 : vector<8x256xf32>
    %267 = arith.truncf %266 : vector<8x256xf32> to vector<8x256xbf16>
    %c0_126 = arith.constant 0 : index
    %c0_127 = arith.constant 0 : index
    %268 = vector.load %arg11[%c0_126, %c0_127] : memref<256x128xbf16, #tpu.memory_space<vmem>>, vector<256x128xbf16>
    %cst_128 = arith.constant dense<0.000000e+00> : vector<8x128xf32>
    %269 = tpu.matmul %267, %268, %cst_128 {dimension_numbers = #tpu.dot_dimension_numbers<[1], [0], [0], [1], [0, 0, 1, 1], [], []>} : vector<8x256xbf16>, vector<256x128xbf16>, vector<8x128xf32> -> vector<8x128xf32>
    %c0_129 = arith.constant 0 : index
    %c0_130 = arith.constant 0 : index
    %270 = vector.load %arg12[%c0_129, %c0_130] : memref<1x128xf32, #tpu.memory_space<vmem>>, vector<1x128xf32>
    %271 = vector.broadcast %270 : vector<1x128xf32> to vector<8x128xf32>
    %272 = arith.addf %269, %271 : vector<8x128xf32>
    %c0_131 = arith.constant 0 : index
    %c0_132 = arith.constant 0 : index
    %273 = vector.load %arg13[%c0_131, %c0_132] : memref<8x128xf32, #tpu.memory_space<vmem>>, vector<8x128xf32>
    tpu.vector_store %arg13[%c0_131, %c0_132], %272 {strides = array<i32>} : memref<8x128xf32, #tpu.memory_space<vmem>>, vector<8x128xf32>,
    return
  }
  func.func @transform_0(%arg0: i32) -> (i32, i32) {
    %c0_i32 = arith.constant 0 : i32
    %c0_i32_0 = arith.constant 0 : i32
    return %arg0, %c0_i32 : i32, i32
  }
  func.func @transform_1(%arg0: i32) -> (i32, i32) {
    %c0_i32 = arith.constant 0 : i32
    %c0_i32_0 = arith.constant 0 : i32
    %c0_i32_1 = arith.constant 0 : i32
    return %c0_i32, %c0_i32_0 : i32, i32
  }
  func.func @transform_2(%arg0: i32) -> (i32, i32) {
    %c0_i32 = arith.constant 0 : i32
    %c0_i32_0 = arith.constant 0 : i32
    %c0_i32_1 = arith.constant 0 : i32
    return %c0_i32, %c0_i32_0 : i32, i32
  }
  func.func @transform_3(%arg0: i32) -> (i32, i32) {
    %c0_i32 = arith.constant 0 : i32
    %c0_i32_0 = arith.constant 0 : i32
    %c0_i32_1 = arith.constant 0 : i32
    return %c0_i32, %c0_i32_0 : i32, i32
  }
  func.func @transform_4(%arg0: i32) -> (i32, i32, i32) {
    %c0_i32 = arith.constant 0 : i32
    %c0_i32_0 = arith.constant 0 : i32
    %c0_i32_1 = arith.constant 0 : i32
    %c0_i32_2 = arith.constant 0 : i32
    return %c0_i32, %c0_i32_0, %c0_i32_1 : i32, i32, i32
  }
  func.func @transform_5(%arg0: i32) -> (i32, i32) {
    %c0_i32 = arith.constant 0 : i32
    %c0_i32_0 = arith.constant 0 : i32
    %c0_i32_1 = arith.constant 0 : i32
    return %c0_i32, %c0_i32_0 : i32, i32
  }
  func.func @transform_6(%arg0: i32) -> (i32, i32, i32) {
    %c0_i32 = arith.constant 0 : i32
    %c0_i32_0 = arith.constant 0 : i32
    %c0_i32_1 = arith.constant 0 : i32
    %c0_i32_2 = arith.constant 0 : i32
    return %c0_i32, %c0_i32_0, %c0_i32_1 : i32, i32, i32
  }
  func.func @transform_7(%arg0: i32) -> (i32, i32) {
    %c0_i32 = arith.constant 0 : i32
    %c0_i32_0 = arith.constant 0 : i32
    %c0_i32_1 = arith.constant 0 : i32
    return %c0_i32, %c0_i32_0 : i32, i32
  }
  func.func @transform_8(%arg0: i32) -> (i32, i32, i32) {
    %c0_i32 = arith.constant 0 : i32
    %c0_i32_0 = arith.constant 0 : i32
    %c0_i32_1 = arith.constant 0 : i32
    %c0_i32_2 = arith.constant 0 : i32
    return %c0_i32, %c0_i32_0, %c0_i32_1 : i32, i32, i32
  }
  func.func @transform_9(%arg0: i32) -> (i32, i32) {
    %c0_i32 = arith.constant 0 : i32
    %c0_i32_0 = arith.constant 0 : i32
    %c0_i32_1 = arith.constant 0 : i32
    return %c0_i32, %c0_i32_0 : i32, i32
  }
  func.func @transform_10(%arg0: i32) -> (i32, i32) {
    %c0_i32 = arith.constant 0 : i32
    %c0_i32_0 = arith.constant 0 : i32
    %c0_i32_1 = arith.constant 0 : i32
    return %c0_i32, %c0_i32_0 : i32, i32
  }
  func.func @transform_11(%arg0: i32) -> (i32, i32) {
    %c0_i32 = arith.constant 0 : i32
    %c0_i32_0 = arith.constant 0 : i32
    %c0_i32_1 = arith.constant 0 : i32
    return %c0_i32, %c0_i32_0 : i32, i32
  }
  func.func @transform_12(%arg0: i32) -> (i32, i32) {
    %c0_i32 = arith.constant 0 : i32
    %c0_i32_0 = arith.constant 0 : i32
    return %arg0, %c0_i32 : i32, i32
  }
}

</mosaic_0001>

<llo_original>
// kernel: dqn_forward.1
$region0: #{dqn_forward.1}
  #allocation0 [shape = 'u32[]', space=smem, size = 0x4, offset = 0x4, fixed_abs, tag = 'smem constant byte address 0x4 - core index']
  #allocation1 [shape = 'u32[72,128]{1,0:T(1,128)}', space=vmem, size = 0x9000, scoped, tag = 'internal scratch']
  %s0 = inlined_call_operand.vmem [shape: f32[8,784], index: 0, kind: input, shape index: {}]
  %s1 = inlined_call_operand.vmem [shape: bf16[56,224], index: 1, kind: input, shape index: {}]
  %s2 = inlined_call_operand.vmem [shape: bf16[56,224], index: 2, kind: input, shape index: {}]
  %s3 = inlined_call_operand.vmem [shape: f32[1,224], index: 3, kind: input, shape index: {}]
  %s4 = inlined_call_operand.hbm [shape: bf16[3,224,112], index: 4, kind: input, shape index: {}]
  %s5 = inlined_call_operand.vmem [shape: f32[1,112], index: 5, kind: input, shape index: {}]
  %s6 = inlined_call_operand.vmem [shape: bf16[3,112,40], index: 6, kind: input, shape index: {}]
  %s7 = inlined_call_operand.vmem [shape: f32[1,40], index: 7, kind: input, shape index: {}]
  %s8 = inlined_call_operand.vmem [shape: bf16[4,40,256], index: 8, kind: input, shape index: {}]
  %s9 = inlined_call_operand.vmem [shape: f32[1,256], index: 9, kind: input, shape index: {}]
  %s10 = inlined_call_operand.vmem [shape: bf16[256,128], index: 10, kind: input, shape index: {}]
  %s11 = inlined_call_operand.vmem [shape: f32[1,128], index: 11, kind: input, shape index: {}]
  %s12 = inlined_call_operand.vmem [shape: f32[8,128], index: 12, kind: output, shape index: {}]
  %s13 = sld [smem:[#allocation0]]
  $region62: #{dqn_forward.1} parent=0
    _
  %s15 = ssub.s32 1, %s13
  %s16 = scalar_select 0, %s15, %s13
  $region1: #{dqn_forward.1} parent=0
    #allocation2 [shape = 'u8[172032]{0}', space=vmem, size = 0x2a000, scoped, tag = 'input window, operand 4, single buffered']
    #allocation3 [shape = 's32[1]{0}', space=sflag, size = 0x4, scoped, tag = 'scoped memory for dqn_forward.1']
    %17 = vsyncpa [#allocation3], 0
    // Predicated region
    $region2: #{dqn_forward.1} parent=1 // pred_check
      _
    $region3: #{dqn_forward.1} parent=1 // pred_check_branch
      %19 = sbr.rel (0) target = $region5
    $region4: #{dqn_forward.1} parent=1 // pred_region
      _
    $region5: #{dqn_forward.1} parent=1 // pred_fallthru
      _
    // Predicated region
    $region6: #{dqn_forward.1} parent=1 // pred_check
      _
    $region7: #{dqn_forward.1} parent=1 // pred_check_branch
      %21 = sbr.rel (0) target = $region9
    $region8: #{dqn_forward.1} parent=1 // pred_region
      _
    $region9: #{dqn_forward.1} parent=1 // pred_fallthru
      _
    // Predicated region
    $region10: #{dqn_forward.1} parent=1 // pred_check
      _
    $region11: #{dqn_forward.1} parent=1 // pred_check_branch
      %23 = sbr.rel (0) target = $region13
    $region12: #{dqn_forward.1} parent=1 // pred_region
      _
    $region13: #{dqn_forward.1} parent=1 // pred_fallthru
      _
    // Predicated region
    $region14: #{dqn_forward.1} parent=1 // pred_check
      _
    $region15: #{dqn_forward.1} parent=1 // pred_check_branch
      %25 = sbr.rel (0) target = $region17
    $region16: #{dqn_forward.1} parent=1 // pred_region
      _
    $region17: #{dqn_forward.1} parent=1 // pred_fallthru
      _
    // Predicated region
    $region18: #{dqn_forward.1} parent=1 // pred_check
      _
    $region19: #{dqn_forward.1} parent=1 // pred_check_branch
      %27 = sbr.rel (0) target = $region21
    $region20: #{dqn_forward.1} parent=1 // pred_region
      %29 = vsyncadd [#allocation3], 0
      %s30 = sshll.u32 %s4, 4
      %s31 = int_to_ptr.hbm [resolvable:$true] %s30
      %s32 = sshll.u32 [#allocation2], 4
      %s33 = int_to_ptr.vmem [resolvable:$true] %s32
      %38 = dma.hbm_to_vmem [thread:$0]  %s31, 5376, %s33, [#allocation3], 64, 64, 4
    $region21: #{dqn_forward.1} parent=1 // pred_fallthru
      _
    // Predicated region
    $region22: #{dqn_forward.1} parent=1 // pred_check
      _
    $region23: #{dqn_forward.1} parent=1 // pred_check_branch
      %40 = sbr.rel (0) target = $region25
    $region24: #{dqn_forward.1} parent=1 // pred_region
      _
    $region25: #{dqn_forward.1} parent=1 // pred_fallthru
      _
    // Predicated region
    $region26: #{dqn_forward.1} parent=1 // pred_check
      _
    $region27: #{dqn_forward.1} parent=1 // pred_check_branch
      %42 = sbr.rel (0) target = $region29
    $region28: #{dqn_forward.1} parent=1 // pred_region
      _
    $region29: #{dqn_forward.1} parent=1 // pred_fallthru
      _
    // Predicated region
    $region30: #{dqn_forward.1} parent=1 // pred_check
      _
    $region31: #{dqn_forward.1} parent=1 // pred_check_branch
      %44 = sbr.rel (0) target = $region33
    $region32: #{dqn_forward.1} parent=1 // pred_region
      _
    $region33: #{dqn_forward.1} parent=1 // pred_fallthru
      _
    // Predicated region
    $region34: #{dqn_forward.1} parent=1 // pred_check
      _
    $region35: #{dqn_forward.1} parent=1 // pred_check_branch
      %46 = sbr.rel (0) target = $region37
    $region36: #{dqn_forward.1} parent=1 // pred_region
      _
    $region37: #{dqn_forward.1} parent=1 // pred_fallthru
      _
    // Predicated region
    $region38: #{dqn_forward.1} parent=1 // pred_check
      _
    $region39: #{dqn_forward.1} parent=1 // pred_check_branch
      %48 = sbr.rel (0) target = $region41
    $region40: #{dqn_forward.1} parent=1 // pred_region
      _
    $region41: #{dqn_forward.1} parent=1 // pred_fallthru
      _
    // Predicated region
    $region42: #{dqn_forward.1} parent=1 // pred_check
      _
    $region43: #{dqn_forward.1} parent=1 // pred_check_branch
      %50 = sbr.rel (0) target = $region45
    $region44: #{dqn_forward.1} parent=1 // pred_region
      _
    $region45: #{dqn_forward.1} parent=1 // pred_fallthru
      _
    // Predicated region
    $region46: #{dqn_forward.1} parent=1 // pred_check
      _
    $region47: #{dqn_forward.1} parent=1 // pred_check_branch
      %52 = sbr.rel (0) target = $region49
    $region48: #{dqn_forward.1} parent=1 // pred_region
      _
    $region49: #{dqn_forward.1} parent=1 // pred_fallthru
      _
    // Predicated region
    $region50: #{dqn_forward.1} parent=1 // pred_check
      _
    $region51: #{dqn_forward.1} parent=1 // pred_check_branch
      %54 = sbr.rel (0) target = $region53
    $region52: #{dqn_forward.1} parent=1 // pred_region
      %56 = dma.done [#allocation3], 5376
    $region53: #{dqn_forward.1} parent=1 // pred_fallthru
      _
    %v58 = vld [vmem:[%s0] sm:$0xff]
    %v59 = vld [vmem:[%s0 + $0x8] sm:$0xff]
    %v60 = vld [vmem:[%s0 + $0x10] sm:$0xff]
    %v61 = vld [vmem:[%s0 + $0x18] sm:$0xff]
    %v62 = vld [vmem:[%s0 + $0x20] sm:$0xff]
    %v63 = vld [vmem:[%s0 + $0x28] sm:$0xff]
    %v64 = vld [vmem:[%s0 + $0x30] sm:$0xff]
    %v65 = vpack.c.bf16 %v59, %v58
    %v66 = vpack.c.bf16 %v61, %v60
    %v67 = vpack.c.bf16 %v63, %v62
    %v68 = vpack.c.bf16 %v64, %v64
    %v69 = vld [vmem:[%s1] sm:$0xff]
    %v70 = vld [vmem:[%s1 + $0x8] sm:$0xff]
    %v71 = vld [vmem:[%s1 + $0x10] sm:$0xff]
    %v72 = vld [vmem:[%s1 + $0x18] sm:$0xff]
    %v73 = vld [vmem:[%s1 + $0x20] sm:$0xff]
    %v74 = vld [vmem:[%s1 + $0x28] sm:$0xff]
    %v75 = vld [vmem:[%s1 + $0x30] sm:$0xff]
    %v76 = vld [vmem:[%s2] sm:$0xff]
    %v77 = vld [vmem:[%s2 + $0x8] sm:$0xff]
    %v78 = vld [vmem:[%s2 + $0x10] sm:$0xff]
    %v79 = vld [vmem:[%s2 + $0x18] sm:$0xff]
    %v80 = vld [vmem:[%s2 + $0x20] sm:$0xff]
    %v81 = vld [vmem:[%s2 + $0x28] sm:$0xff]
    %v82 = vld [vmem:[%s2 + $0x30] sm:$0xff]
    %v83 = vld [vmem:[%s3] sm:$0x3]
    %v85 = vperm.slane %v83, 0
    %v86 = vperm.slane %v83, 1
    %v96 = vunpack.c.l.b16 %v69
    %v97 = vunpack.c.h.b16 %v69
    %v98 = vunpack.c.l.b16 %v70
    %v99 = vunpack.c.h.b16 %v70
    %v100 = vunpack.c.l.b16 %v71
    %v101 = vunpack.c.h.b16 %v71
    %v102 = vunpack.c.l.b16 %v72
    %v103 = vunpack.c.h.b16 %v72
    %v104 = vunpack.c.l.b16 %v73
    %v105 = vunpack.c.h.b16 %v73
    %v106 = vunpack.c.l.b16 %v74
    %v107 = vunpack.c.h.b16 %v74
    %v108 = vunpack.c.l.b16 %v75
    %v109 = vunpack.c.h.b16 %v75
    %v110 = vpack.c.b16 %v98, %v96
    %v111 = vpack.c.b16 %v99, %v97
    %v112 = vpack.c.b16 %v102, %v100
    %v113 = vpack.c.b16 %v103, %v101
    %v114 = vpack.c.b16 %v106, %v104
    %v115 = vpack.c.b16 %v107, %v105
    %v116 = vpack.c.b16 %v108, %v108
    %v117 = vpack.c.b16 %v109, %v109
    %vm124 = vcmask 457728
    %v126 = vsel %vm124, %v65, 0
    %vm128 = vcmask 1043456
    %v130 = vsel %vm128, %v116, 0
    %v133 = vsel %vm128, %v117, 0
    %135 = vmatpush.bf16.msra.mxu0 0
    %136 = vmatpush.bf16.msra.mxu0 0
    %137 = vmatpush.bf16.msra.mxu0 0
    %138 = vmatpush.bf16.msra.mxu0 0
    %139 = vmatpush.bf16.msra.mxu0 %v130
    %140 = vmatpush.bf16.msra.mxu0 %v114
    %141 = vmatpush.bf16.msra.mxu0 %v112
    %142 = vmatpush.bf16.msra.mxu0 %v110
    %143 = vmatmul.bf16.gmra.mxu0 %v126
    %v144 = vpop.f32.mrf.mxu0
    %v145 = vadd.f32 %v85, %v144
    %v146 = vpop.f32.mrf.mxu0
    %147 = vdwg.mxu0
    %148 = vmatpush.bf16.msra.mxu0 0
    %149 = vmatpush.bf16.msra.mxu0 0
    %150 = vmatpush.bf16.msra.mxu0 0
    %151 = vmatpush.bf16.msra.mxu0 0
    %152 = vmatpush.bf16.msra.mxu0 %v133
    %153 = vmatpush.bf16.msra.mxu0 %v115
    %154 = vmatpush.bf16.msra.mxu0 %v113
    %155 = vmatpush.bf16.msra.mxu0 %v111
    %156 = vmatmul.bf16.gmra.mxu0 %v126
    %v157 = vpop.f32.mrf.mxu0
    %v158 = vadd.f32 %v86, %v157
    %v159 = vpop.f32.mrf.mxu0
    %160 = vdwg.mxu0
    %v161 = vmax.f32 %v145, 0.0
    %v162 = vmax.f32 %v158, 0.0
    %v163 = vpack.c.bf16 %v161, %v161
    %v164 = vpack.c.bf16 %v162, %v162
    %v172 = vunpack.c.l.b16 %v76
    %v173 = vunpack.c.h.b16 %v76
    %v174 = vunpack.c.l.b16 %v77
    %v175 = vunpack.c.h.b16 %v77
    %v176 = vunpack.c.l.b16 %v78
    %v177 = vunpack.c.h.b16 %v78
    %v178 = vunpack.c.l.b16 %v79
    %v179 = vunpack.c.h.b16 %v79
    %v180 = vunpack.c.l.b16 %v80
    %v181 = vunpack.c.h.b16 %v80
    %v182 = vunpack.c.l.b16 %v81
    %v183 = vunpack.c.h.b16 %v81
    %v184 = vunpack.c.l.b16 %v82
    %v185 = vunpack.c.h.b16 %v82
    %v186 = vpack.c.b16 %v174, %v172
    %v187 = vpack.c.b16 %v175, %v173
    %v188 = vpack.c.b16 %v178, %v176
    %v189 = vpack.c.b16 %v179, %v177
    %v190 = vpack.c.b16 %v182, %v180
    %v191 = vpack.c.b16 %v183, %v181
    %v192 = vpack.c.b16 %v184, %v184
    %v193 = vpack.c.b16 %v185, %v185
    %v201 = vsel %vm128, %v192, 0
    %v204 = vsel %vm128, %v193, 0
    %206 = vmatpush.bf16.msra.mxu0 0
    %207 = vmatpush.bf16.msra.mxu0 0
    %208 = vmatpush.bf16.msra.mxu0 0
    %209 = vmatpush.bf16.msra.mxu0 0
    %210 = vmatpush.bf16.msra.mxu0 %v201
    %211 = vmatpush.bf16.msra.mxu0 %v190
    %212 = vmatpush.bf16.msra.mxu0 %v188
    %213 = vmatpush.bf16.msra.mxu0 %v186
    %214 = vmatmul.bf16.gmra.mxu0 %v126
    %v215 = vpop.f32.mrf.mxu0
    %v216 = vadd.f32 0.0, %v215
    %v217 = vpop.f32.mrf.mxu0
    %218 = vdwg.mxu0
    %219 = vmatpush.bf16.msra.mxu0 0
    %220 = vmatpush.bf16.msra.mxu0 0
    %221 = vmatpush.bf16.msra.mxu0 0
    %222 = vmatpush.bf16.msra.mxu0 0
    %223 = vmatpush.bf16.msra.mxu0 %v204
    %224 = vmatpush.bf16.msra.mxu0 %v191
    %225 = vmatpush.bf16.msra.mxu0 %v189
    %226 = vmatpush.bf16.msra.mxu0 %v187
    %227 = vmatmul.bf16.gmra.mxu0 %v126
    %v228 = vpop.f32.mrf.mxu0
    %v229 = vadd.f32 0.0, %v228
    %v230 = vpop.f32.mrf.mxu0
    %231 = vdwg.mxu0
    %v233 = vunpack.c.l.b16 %v65
    %v234 = vpack.c.b16 %v233, %v233
    %235 = vrot.lane.b32.xlu0 %v234, 72
    %v236 = vpop.permute.xlu0 %235
    %v238 = vsel %vm124, %v236, 0
    %240 = vmatpush.bf16.msra.mxu0 0
    %241 = vmatpush.bf16.msra.mxu0 0
    %242 = vmatpush.bf16.msra.mxu0 0
    %243 = vmatpush.bf16.msra.mxu0 0
    %244 = vmatpush.bf16.msra.mxu0 %v130
    %245 = vmatpush.bf16.msra.mxu0 %v114
    %246 = vmatpush.bf16.msra.mxu0 %v112
    %247 = vmatpush.bf16.msra.mxu0 %v110
    %248 = vmatmul.bf16.gmra.mxu0 %v238
    %v249 = vpop.f32.mrf.mxu0
    %v250 = vadd.f32 %v216, %v249
    %v251 = vpop.f32.mrf.mxu0
    %252 = vdwg.mxu0
    %253 = vmatpush.bf16.msra.mxu0 0
    %254 = vmatpush.bf16.msra.mxu0 0
    %255 = vmatpush.bf16.msra.mxu0 0
    %256 = vmatpush.bf16.msra.mxu0 0
    %257 = vmatpush.bf16.msra.mxu0 %v133
    %258 = vmatpush.bf16.msra.mxu0 %v115
    %259 = vmatpush.bf16.msra.mxu0 %v113
    %260 = vmatpush.bf16.msra.mxu0 %v111
    %261 = vmatmul.bf16.gmra.mxu0 %v238
    %v262 = vpop.f32.mrf.mxu0
    %v263 = vadd.f32 %v229, %v262
    %v264 = vpop.f32.mrf.mxu0
    %265 = vdwg.mxu0
    %v266 = vadd.f32 %v250, %v85
    %v267 = vadd.f32 %v263, %v86
    %v268 = vmax.f32 %v266, 0.0
    %v269 = vmax.f32 %v267, 0.0
    %v270 = vpack.c.bf16 %v268, %v268
    %v271 = vpack.c.bf16 %v269, %v269
    %272 = vmatpush.bf16.msra.mxu0 0
    %273 = vmatpush.bf16.msra.mxu0 0
    %274 = vmatpush.bf16.msra.mxu0 0
    %275 = vmatpush.bf16.msra.mxu0 0
    %276 = vmatpush.bf16.msra.mxu0 %v201
    %277 = vmatpush.bf16.msra.mxu0 %v190
    %278 = vmatpush.bf16.msra.mxu0 %v188
    %279 = vmatpush.bf16.msra.mxu0 %v186
    %280 = vmatmul.bf16.gmra.mxu0 %v238
    %v281 = vpop.f32.mrf.mxu0
    %v282 = vadd.f32 0.0, %v281
    %v283 = vpop.f32.mrf.mxu0
    %284 = vdwg.mxu0
    %285 = vmatpush.bf16.msra.mxu0 0
    %286 = vmatpush.bf16.msra.mxu0 0
    %287 = vmatpush.bf16.msra.mxu0 0
    %288 = vmatpush.bf16.msra.mxu0 0
    %289 = vmatpush.bf16.msra.mxu0 %v204
    %290 = vmatpush.bf16.msra.mxu0 %v191
    %291 = vmatpush.bf16.msra.mxu0 %v189
    %292 = vmatpush.bf16.msra.mxu0 %v187
    %293 = vmatmul.bf16.gmra.mxu0 %v238
    %v294 = vpop.f32.mrf.mxu0
    %v295 = vadd.f32 0.0, %v294
    %v296 = vpop.f32.mrf.mxu0
    %297 = vdwg.mxu0
    %v298 = vunpack.c.h.b16 %v65
    %v299 = vpack.c.b16 %v298, %v298
    %300 = vrot.lane.b32.xlu0 %v234, 16
    %v301 = vpop.permute.xlu0 %300
    %302 = vrot.lane.b32.xlu0 %v299, 16
    %v303 = vpop.permute.xlu0 %302
    %vm304 = vcmask 130048
    %v305 = vsel %vm304, %v301, %v303
    %v307 = vsel %vm124, %v305, 0
    %309 = vmatpush.bf16.msra.mxu0 0
    %310 = vmatpush.bf16.msra.mxu0 0
    %311 = vmatpush.bf16.msra.mxu0 0
    %312 = vmatpush.bf16.msra.mxu0 0
    %313 = vmatpush.bf16.msra.mxu0 %v130
    %314 = vmatpush.bf16.msra.mxu0 %v114
    %315 = vmatpush.bf16.msra.mxu0 %v112
    %316 = vmatpush.bf16.msra.mxu0 %v110
    %317 = vmatmul.bf16.gmra.mxu0 %v307
    %v318 = vpop.f32.mrf.mxu0
    %v319 = vadd.f32 %v282, %v318
    %v320 = vpop.f32.mrf.mxu0
    %321 = vdwg.mxu0
    %322 = vmatpush.bf16.msra.mxu0 0
    %323 = vmatpush.bf16.msra.mxu0 0
    %324 = vmatpush.bf16.msra.mxu0 0
    %325 = vmatpush.bf16.msra.mxu0 0
    %326 = vmatpush.bf16.msra.mxu0 %v133
    %327 = vmatpush.bf16.msra.mxu0 %v115
    %328 = vmatpush.bf16.msra.mxu0 %v113
    %329 = vmatpush.bf16.msra.mxu0 %v111
    %330 = vmatmul.bf16.gmra.mxu0 %v307
    %v331 = vpop.f32.mrf.mxu0
    %v332 = vadd.f32 %v295, %v331
    %v333 = vpop.f32.mrf.mxu0
    %334 = vdwg.mxu0
    %v335 = vadd.f32 %v319, %v85
    %v336 = vadd.f32 %v332, %v86
    %v337 = vmax.f32 %v335, 0.0
    %v338 = vmax.f32 %v336, 0.0
    %v339 = vpack.c.bf16 %v337, %v337
    %v340 = vpack.c.bf16 %v338, %v338
    %341 = vmatpush.bf16.msra.mxu0 0
    %342 = vmatpush.bf16.msra.mxu0 0
    %343 = vmatpush.bf16.msra.mxu0 0
    %344 = vmatpush.bf16.msra.mxu0 0
    %345 = vmatpush.bf16.msra.mxu0 %v201
    %346 = vmatpush.bf16.msra.mxu0 %v190
    %347 = vmatpush.bf16.msra.mxu0 %v188
    %348 = vmatpush.bf16.msra.mxu0 %v186
    %349 = vmatmul.bf16.gmra.mxu0 %v307
    %v350 = vpop.f32.mrf.mxu0
    %v351 = vadd.f32 0.0, %v350
    %v352 = vpop.f32.mrf.mxu0
    %353 = vdwg.mxu0
    %354 = vmatpush.bf16.msra.mxu0 0
    %355 = vmatpush.bf16.msra.mxu0 0
    %356 = vmatpush.bf16.msra.mxu0 0
    %357 = vmatpush.bf16.msra.mxu0 0
    %358 = vmatpush.bf16.msra.mxu0 %v204
    %359 = vmatpush.bf16.msra.mxu0 %v191
    %360 = vmatpush.bf16.msra.mxu0 %v189
    %361 = vmatpush.bf16.msra.mxu0 %v187
    %362 = vmatmul.bf16.gmra.mxu0 %v307
    %v363 = vpop.f32.mrf.mxu0
    %v364 = vadd.f32 0.0, %v363
    %v365 = vpop.f32.mrf.mxu0
    %366 = vdwg.mxu0
    %367 = vrot.lane.b32.xlu0 %v299, 88
    %v368 = vpop.permute.xlu0 %367
    %v370 = vsel %vm124, %v368, 0
    %372 = vmatpush.bf16.msra.mxu0 0
    %373 = vmatpush.bf16.msra.mxu0 0
    %374 = vmatpush.bf16.msra.mxu0 0
    %375 = vmatpush.bf16.msra.mxu0 0
    %376 = vmatpush.bf16.msra.mxu0 %v130
    %377 = vmatpush.bf16.msra.mxu0 %v114
    %378 = vmatpush.bf16.msra.mxu0 %v112
    %379 = vmatpush.bf16.msra.mxu0 %v110
    %380 = vmatmul.bf16.gmra.mxu0 %v370
    %v381 = vpop.f32.mrf.mxu0
    %v382 = vadd.f32 %v351, %v381
    %v383 = vpop.f32.mrf.mxu0
    %384 = vdwg.mxu0
    %385 = vmatpush.bf16.msra.mxu0 0
    %386 = vmatpush.bf16.msra.mxu0 0
    %387 = vmatpush.bf16.msra.mxu0 0
    %388 = vmatpush.bf16.msra.mxu0 0
    %389 = vmatpush.bf16.msra.mxu0 %v133
    %390 = vmatpush.bf16.msra.mxu0 %v115
    %391 = vmatpush.bf16.msra.mxu0 %v113
    %392 = vmatpush.bf16.msra.mxu0 %v111
    %393 = vmatmul.bf16.gmra.mxu0 %v370
    %v394 = vpop.f32.mrf.mxu0
    %v395 = vadd.f32 %v364, %v394
    %v396 = vpop.f32.mrf.mxu0
    %397 = vdwg.mxu0
    %v398 = vadd.f32 %v382, %v85
    %v399 = vadd.f32 %v395, %v86
    %v400 = vmax.f32 %v398, 0.0
    %v401 = vmax.f32 %v399, 0.0
    %v402 = vpack.c.bf16 %v400, %v400
    %v403 = vpack.c.bf16 %v401, %v401
    %404 = vmatpush.bf16.msra.mxu0 0
    %405 = vmatpush.bf16.msra.mxu0 0
    %406 = vmatpush.bf16.msra.mxu0 0
    %407 = vmatpush.bf16.msra.mxu0 0
    %408 = vmatpush.bf16.msra.mxu0 %v201
    %409 = vmatpush.bf16.msra.mxu0 %v190
    %410 = vmatpush.bf16.msra.mxu0 %v188
    %411 = vmatpush.bf16.msra.mxu0 %v186
    %412 = vmatmul.bf16.gmra.mxu0 %v370
    %v413 = vpop.f32.mrf.mxu0
    %v414 = vadd.f32 0.0, %v413
    %v415 = vpop.f32.mrf.mxu0
    %416 = vdwg.mxu0
    %417 = vmatpush.bf16.msra.mxu0 0
    %418 = vmatpush.bf16.msra.mxu0 0
    %419 = vmatpush.bf16.msra.mxu0 0
    %420 = vmatpush.bf16.msra.mxu0 0
    %421 = vmatpush.bf16.msra.mxu0 %v204
    %422 = vmatpush.bf16.msra.mxu0 %v191
    %423 = vmatpush.bf16.msra.mxu0 %v189
    %424 = vmatpush.bf16.msra.mxu0 %v187
    %425 = vmatmul.bf16.gmra.mxu0 %v370
    %v426 = vpop.f32.mrf.mxu0
    %v427 = vadd.f32 0.0, %v426
    %v428 = vpop.f32.mrf.mxu0
    %429 = vdwg.mxu0
    %v431 = vunpack.c.l.b16 %v66
    %v432 = vpack.c.b16 %v431, %v431
    %433 = vrot.lane.b32.xlu0 %v299, 32
    %v434 = vpop.permute.xlu0 %433
    %435 = vrot.lane.b32.xlu0 %v432, 32
    %v436 = vpop.permute.xlu0 %435
    %vm437 = vcmask 261120
    %v438 = vsel %vm437, %v434, %v436
    %v440 = vsel %vm124, %v438, 0
    %442 = vmatpush.bf16.msra.mxu0 0
    %443 = vmatpush.bf16.msra.mxu0 0
    %444 = vmatpush.bf16.msra.mxu0 0
    %445 = vmatpush.bf16.msra.mxu0 0
    %446 = vmatpush.bf16.msra.mxu0 %v130
    %447 = vmatpush.bf16.msra.mxu0 %v114
    %448 = vmatpush.bf16.msra.mxu0 %v112
    %449 = vmatpush.bf16.msra.mxu0 %v110
    %450 = vmatmul.bf16.gmra.mxu0 %v440
    %v451 = vpop.f32.mrf.mxu0
    %v452 = vadd.f32 %v414, %v451
    %v453 = vpop.f32.mrf.mxu0
    %454 = vdwg.mxu0
    %455 = vmatpush.bf16.msra.mxu0 0
    %456 = vmatpush.bf16.msra.mxu0 0
    %457 = vmatpush.bf16.msra.mxu0 0
    %458 = vmatpush.bf16.msra.mxu0 0
    %459 = vmatpush.bf16.msra.mxu0 %v133
    %460 = vmatpush.bf16.msra.mxu0 %v115
    %461 = vmatpush.bf16.msra.mxu0 %v113
    %462 = vmatpush.bf16.msra.mxu0 %v111
    %463 = vmatmul.bf16.gmra.mxu0 %v440
    %v464 = vpop.f32.mrf.mxu0
    %v465 = vadd.f32 %v427, %v464
    %v466 = vpop.f32.mrf.mxu0
    %467 = vdwg.mxu0
    %v468 = vadd.f32 %v452, %v85
    %v469 = vadd.f32 %v465, %v86
    %v470 = vmax.f32 %v468, 0.0
    %v471 = vmax.f32 %v469, 0.0
    %v472 = vpack.c.bf16 %v470, %v470
    %v473 = vpack.c.bf16 %v471, %v471
    %474 = vmatpush.bf16.msra.mxu0 0
    %475 = vmatpush.bf16.msra.mxu0 0
    %476 = vmatpush.bf16.msra.mxu0 0
    %477 = vmatpush.bf16.msra.mxu0 0
    %478 = vmatpush.bf16.msra.mxu0 %v201
    %479 = vmatpush.bf16.msra.mxu0 %v190
    %480 = vmatpush.bf16.msra.mxu0 %v188
    %481 = vmatpush.bf16.msra.mxu0 %v186
    %482 = vmatmul.bf16.gmra.mxu0 %v440
    %v483 = vpop.f32.mrf.mxu0
    %v484 = vadd.f32 0.0, %v483
    %v485 = vpop.f32.mrf.mxu0
    %486 = vdwg.mxu0
    %487 = vmatpush.bf16.msra.mxu0 0
    %488 = vmatpush.bf16.msra.mxu0 0
    %489 = vmatpush.bf16.msra.mxu0 0
    %490 = vmatpush.bf16.msra.mxu0 0
    %491 = vmatpush.bf16.msra.mxu0 %v204
    %492 = vmatpush.bf16.msra.mxu0 %v191
    %493 = vmatpush.bf16.msra.mxu0 %v189
    %494 = vmatpush.bf16.msra.mxu0 %v187
    %495 = vmatmul.bf16.gmra.mxu0 %v440
    %v496 = vpop.f32.mrf.mxu0
    %v497 = vadd.f32 0.0, %v496
    %v498 = vpop.f32.mrf.mxu0
    %499 = vdwg.mxu0
    %500 = vrot.lane.b32.xlu0 %v432, 104
    %v501 = vpop.permute.xlu0 %500
    %v503 = vsel %vm124, %v501, 0
    %505 = vmatpush.bf16.msra.mxu0 0
    %506 = vmatpush.bf16.msra.mxu0 0
    %507 = vmatpush.bf16.msra.mxu0 0
    %508 = vmatpush.bf16.msra.mxu0 0
    %509 = vmatpush.bf16.msra.mxu0 %v130
    %510 = vmatpush.bf16.msra.mxu0 %v114
    %511 = vmatpush.bf16.msra.mxu0 %v112
    %512 = vmatpush.bf16.msra.mxu0 %v110
    %513 = vmatmul.bf16.gmra.mxu0 %v503
    %v514 = vpop.f32.mrf.mxu0
    %v515 = vadd.f32 %v484, %v514
    %v516 = vpop.f32.mrf.mxu0
    %517 = vdwg.mxu0
    %518 = vmatpush.bf16.msra.mxu0 0
    %519 = vmatpush.bf16.msra.mxu0 0
    %520 = vmatpush.bf16.msra.mxu0 0
    %521 = vmatpush.bf16.msra.mxu0 0
    %522 = vmatpush.bf16.msra.mxu0 %v133
    %523 = vmatpush.bf16.msra.mxu0 %v115
    %524 = vmatpush.bf16.msra.mxu0 %v113
    %525 = vmatpush.bf16.msra.mxu0 %v111
    %526 = vmatmul.bf16.gmra.mxu0 %v503
    %v527 = vpop.f32.mrf.mxu0
    %v528 = vadd.f32 %v497, %v527
    %v529 = vpop.f32.mrf.mxu0
    %530 = vdwg.mxu0
    %v531 = vadd.f32 %v515, %v85
    %v532 = vadd.f32 %v528, %v86
    %v533 = vmax.f32 %v531, 0.0
    %v534 = vmax.f32 %v532, 0.0
    %v535 = vpack.c.bf16 %v533, %v533
    %v536 = vpack.c.bf16 %v534, %v534
    %537 = vmatpush.bf16.msra.mxu0 0
    %538 = vmatpush.bf16.msra.mxu0 0
    %539 = vmatpush.bf16.msra.mxu0 0
    %540 = vmatpush.bf16.msra.mxu0 0
    %541 = vmatpush.bf16.msra.mxu0 %v201
    %542 = vmatpush.bf16.msra.mxu0 %v190
    %543 = vmatpush.bf16.msra.mxu0 %v188
    %544 = vmatpush.bf16.msra.mxu0 %v186
    %545 = vmatmul.bf16.gmra.mxu0 %v503
    %v546 = vpop.f32.mrf.mxu0
    %v547 = vadd.f32 0.0, %v546
    %v548 = vpop.f32.mrf.mxu0
    %549 = vdwg.mxu0
    %550 = vmatpush.bf16.msra.mxu0 0
    %551 = vmatpush.bf16.msra.mxu0 0
    %552 = vmatpush.bf16.msra.mxu0 0
    %553 = vmatpush.bf16.msra.mxu0 0
    %554 = vmatpush.bf16.msra.mxu0 %v204
    %555 = vmatpush.bf16.msra.mxu0 %v191
    %556 = vmatpush.bf16.msra.mxu0 %v189
    %557 = vmatpush.bf16.msra.mxu0 %v187
    %558 = vmatmul.bf16.gmra.mxu0 %v503
    %v559 = vpop.f32.mrf.mxu0
    %v560 = vadd.f32 0.0, %v559
    %v561 = vpop.f32.mrf.mxu0
    %562 = vdwg.mxu0
    %v563 = vunpack.c.h.b16 %v66
    %v564 = vpack.c.b16 %v563, %v563
    %565 = vrot.lane.b32.xlu0 %v432, 48
    %v566 = vpop.permute.xlu0 %565
    %567 = vrot.lane.b32.xlu0 %v564, 48
    %v568 = vpop.permute.xlu0 %567
    %vm569 = vcmask 392192
    %v570 = vsel %vm569, %v566, %v568
    %v572 = vsel %vm124, %v570, 0
    %574 = vmatpush.bf16.msra.mxu0 0
    %575 = vmatpush.bf16.msra.mxu0 0
    %576 = vmatpush.bf16.msra.mxu0 0
    %577 = vmatpush.bf16.msra.mxu0 0
    %578 = vmatpush.bf16.msra.mxu0 %v130
    %579 = vmatpush.bf16.msra.mxu0 %v114
    %580 = vmatpush.bf16.msra.mxu0 %v112
    %581 = vmatpush.bf16.msra.mxu0 %v110
    %582 = vmatmul.bf16.gmra.mxu0 %v572
    %v583 = vpop.f32.mrf.mxu0
    %v584 = vadd.f32 %v547, %v583
    %v585 = vpop.f32.mrf.mxu0
    %586 = vdwg.mxu0
    %587 = vmatpush.bf16.msra.mxu0 0
    %588 = vmatpush.bf16.msra.mxu0 0
    %589 = vmatpush.bf16.msra.mxu0 0
    %590 = vmatpush.bf16.msra.mxu0 0
    %591 = vmatpush.bf16.msra.mxu0 %v133
    %592 = vmatpush.bf16.msra.mxu0 %v115
    %593 = vmatpush.bf16.msra.mxu0 %v113
    %594 = vmatpush.bf16.msra.mxu0 %v111
    %595 = vmatmul.bf16.gmra.mxu0 %v572
    %v596 = vpop.f32.mrf.mxu0
    %v597 = vadd.f32 %v560, %v596
    %v598 = vpop.f32.mrf.mxu0
    %599 = vdwg.mxu0
    %v600 = vadd.f32 %v584, %v85
    %v601 = vadd.f32 %v597, %v86
    %v602 = vmax.f32 %v600, 0.0
    %v603 = vmax.f32 %v601, 0.0
    %v604 = vpack.c.bf16 %v602, %v602
    %v605 = vpack.c.bf16 %v603, %v603
    %606 = vmatpush.bf16.msra.mxu0 0
    %607 = vmatpush.bf16.msra.mxu0 0
    %608 = vmatpush.bf16.msra.mxu0 0
    %609 = vmatpush.bf16.msra.mxu0 0
    %610 = vmatpush.bf16.msra.mxu0 %v201
    %611 = vmatpush.bf16.msra.mxu0 %v190
    %612 = vmatpush.bf16.msra.mxu0 %v188
    %613 = vmatpush.bf16.msra.mxu0 %v186
    %614 = vmatmul.bf16.gmra.mxu0 %v572
    %v615 = vpop.f32.mrf.mxu0
    %v616 = vadd.f32 0.0, %v615
    %v617 = vpop.f32.mrf.mxu0
    %618 = vdwg.mxu0
    %619 = vmatpush.bf16.msra.mxu0 0
    %620 = vmatpush.bf16.msra.mxu0 0
    %621 = vmatpush.bf16.msra.mxu0 0
    %622 = vmatpush.bf16.msra.mxu0 0
    %623 = vmatpush.bf16.msra.mxu0 %v204
    %624 = vmatpush.bf16.msra.mxu0 %v191
    %625 = vmatpush.bf16.msra.mxu0 %v189
    %626 = vmatpush.bf16.msra.mxu0 %v187
    %627 = vmatmul.bf16.gmra.mxu0 %v572
    %v628 = vpop.f32.mrf.mxu0
    %v629 = vadd.f32 0.0, %v628
    %v630 = vpop.f32.mrf.mxu0
    %631 = vdwg.mxu0
    %632 = vrot.lane.b32.xlu0 %v564, 120
    %v633 = vpop.permute.xlu0 %632
    %v635 = vsel %vm124, %v633, 0
    %637 = vmatpush.bf16.msra.mxu0 0
    %638 = vmatpush.bf16.msra.mxu0 0
    %639 = vmatpush.bf16.msra.mxu0 0
    %640 = vmatpush.bf16.msra.mxu0 0
    %641 = vmatpush.bf16.msra.mxu0 %v130
    %642 = vmatpush.bf16.msra.mxu0 %v114
    %643 = vmatpush.bf16.msra.mxu0 %v112
    %644 = vmatpush.bf16.msra.mxu0 %v110
    %645 = vmatmul.bf16.gmra.mxu0 %v635
    %v646 = vpop.f32.mrf.mxu0
    %v647 = vadd.f32 %v616, %v646
    %v648 = vpop.f32.mrf.mxu0
    %649 = vdwg.mxu0
    %650 = vmatpush.bf16.msra.mxu0 0
    %651 = vmatpush.bf16.msra.mxu0 0
    %652 = vmatpush.bf16.msra.mxu0 0
    %653 = vmatpush.bf16.msra.mxu0 0
    %654 = vmatpush.bf16.msra.mxu0 %v133
    %655 = vmatpush.bf16.msra.mxu0 %v115
    %656 = vmatpush.bf16.msra.mxu0 %v113
    %657 = vmatpush.bf16.msra.mxu0 %v111
    %658 = vmatmul.bf16.gmra.mxu0 %v635
    %v659 = vpop.f32.mrf.mxu0
    %v660 = vadd.f32 %v629, %v659
    %v661 = vpop.f32.mrf.mxu0
    %662 = vdwg.mxu0
    %v663 = vadd.f32 %v647, %v85
    %v664 = vadd.f32 %v660, %v86
    %v665 = vmax.f32 %v663, 0.0
    %v666 = vmax.f32 %v664, 0.0
    %v667 = vpack.c.bf16 %v665, %v665
    %v668 = vpack.c.bf16 %v666, %v666
    %669 = vmatpush.bf16.msra.mxu0 0
    %670 = vmatpush.bf16.msra.mxu0 0
    %671 = vmatpush.bf16.msra.mxu0 0
    %672 = vmatpush.bf16.msra.mxu0 0
    %673 = vmatpush.bf16.msra.mxu0 %v201
    %674 = vmatpush.bf16.msra.mxu0 %v190
    %675 = vmatpush.bf16.msra.mxu0 %v188
    %676 = vmatpush.bf16.msra.mxu0 %v186
    %677 = vmatmul.bf16.gmra.mxu0 %v635
    %v678 = vpop.f32.mrf.mxu0
    %v679 = vadd.f32 0.0, %v678
    %v680 = vpop.f32.mrf.mxu0
    %681 = vdwg.mxu0
    %682 = vmatpush.bf16.msra.mxu0 0
    %683 = vmatpush.bf16.msra.mxu0 0
    %684 = vmatpush.bf16.msra.mxu0 0
    %685 = vmatpush.bf16.msra.mxu0 0
    %686 = vmatpush.bf16.msra.mxu0 %v204
    %687 = vmatpush.bf16.msra.mxu0 %v191
    %688 = vmatpush.bf16.msra.mxu0 %v189
    %689 = vmatpush.bf16.msra.mxu0 %v187
    %690 = vmatmul.bf16.gmra.mxu0 %v635
    %v691 = vpop.f32.mrf.mxu0
    %v692 = vadd.f32 0.0, %v691
    %v693 = vpop.f32.mrf.mxu0
    %694 = vdwg.mxu0
    %695 = vrot.lane.b32.xlu0 %v564, 64
    %v696 = vpop.permute.xlu0 %695
    %v698 = vsel %vm124, %v696, 0
    %700 = vmatpush.bf16.msra.mxu0 0
    %701 = vmatpush.bf16.msra.mxu0 0
    %702 = vmatpush.bf16.msra.mxu0 0
    %703 = vmatpush.bf16.msra.mxu0 0
    %704 = vmatpush.bf16.msra.mxu0 %v130
    %705 = vmatpush.bf16.msra.mxu0 %v114
    %706 = vmatpush.bf16.msra.mxu0 %v112
    %707 = vmatpush.bf16.msra.mxu0 %v110
    %708 = vmatmul.bf16.gmra.mxu0 %v698
    %v709 = vpop.f32.mrf.mxu0
    %v710 = vadd.f32 %v679, %v709
    %v711 = vpop.f32.mrf.mxu0
    %712 = vdwg.mxu0
    %713 = vmatpush.bf16.msra.mxu0 0
    %714 = vmatpush.bf16.msra.mxu0 0
    %715 = vmatpush.bf16.msra.mxu0 0
    %716 = vmatpush.bf16.msra.mxu0 0
    %717 = vmatpush.bf16.msra.mxu0 %v133
    %718 = vmatpush.bf16.msra.mxu0 %v115
    %719 = vmatpush.bf16.msra.mxu0 %v113
    %720 = vmatpush.bf16.msra.mxu0 %v111
    %721 = vmatmul.bf16.gmra.mxu0 %v698
    %v722 = vpop.f32.mrf.mxu0
    %v723 = vadd.f32 %v692, %v722
    %v724 = vpop.f32.mrf.mxu0
    %725 = vdwg.mxu0
    %v726 = vadd.f32 %v710, %v85
    %v727 = vadd.f32 %v723, %v86
    %v728 = vmax.f32 %v726, 0.0
    %v729 = vmax.f32 %v727, 0.0
    %v730 = vpack.c.bf16 %v728, %v728
    %v731 = vpack.c.bf16 %v729, %v729
    %732 = vmatpush.bf16.msra.mxu0 0
    %733 = vmatpush.bf16.msra.mxu0 0
    %734 = vmatpush.bf16.msra.mxu0 0
    %735 = vmatpush.bf16.msra.mxu0 0
    %736 = vmatpush.bf16.msra.mxu0 %v201
    %737 = vmatpush.bf16.msra.mxu0 %v190
    %738 = vmatpush.bf16.msra.mxu0 %v188
    %739 = vmatpush.bf16.msra.mxu0 %v186
    %740 = vmatmul.bf16.gmra.mxu0 %v698
    %v741 = vpop.f32.mrf.mxu0
    %v742 = vadd.f32 0.0, %v741
    %v743 = vpop.f32.mrf.mxu0
    %744 = vdwg.mxu0
    %745 = vmatpush.bf16.msra.mxu0 0
    %746 = vmatpush.bf16.msra.mxu0 0
    %747 = vmatpush.bf16.msra.mxu0 0
    %748 = vmatpush.bf16.msra.mxu0 0
    %749 = vmatpush.bf16.msra.mxu0 %v204
    %750 = vmatpush.bf16.msra.mxu0 %v191
    %751 = vmatpush.bf16.msra.mxu0 %v189
    %752 = vmatpush.bf16.msra.mxu0 %v187
    %753 = vmatmul.bf16.gmra.mxu0 %v698
    %v754 = vpop.f32.mrf.mxu0
    %v755 = vadd.f32 0.0, %v754
    %v756 = vpop.f32.mrf.mxu0
    %757 = vdwg.mxu0
    %v759 = vunpack.c.l.b16 %v67
    %v760 = vpack.c.b16 %v759, %v759
    %761 = vrot.lane.b32.xlu0 %v564, 8
    %v762 = vpop.permute.xlu0 %761
    %763 = vrot.lane.b32.xlu0 %v760, 8
    %v764 = vpop.permute.xlu0 %763
    %vm765 = vcmask 64512
    %v766 = vsel %vm765, %v762, %v764
    %v768 = vsel %vm124, %v766, 0
    %770 = vmatpush.bf16.msra.mxu0 0
    %771 = vmatpush.bf16.msra.mxu0 0
    %772 = vmatpush.bf16.msra.mxu0 0
    %773 = vmatpush.bf16.msra.mxu0 0
    %774 = vmatpush.bf16.msra.mxu0 %v130
    %775 = vmatpush.bf16.msra.mxu0 %v114
    %776 = vmatpush.bf16.msra.mxu0 %v112
    %777 = vmatpush.bf16.msra.mxu0 %v110
    %778 = vmatmul.bf16.gmra.mxu0 %v768
    %v779 = vpop.f32.mrf.mxu0
    %v780 = vadd.f32 %v742, %v779
    %v781 = vpop.f32.mrf.mxu0
    %782 = vdwg.mxu0
    %783 = vmatpush.bf16.msra.mxu0 0
    %784 = vmatpush.bf16.msra.mxu0 0
    %785 = vmatpush.bf16.msra.mxu0 0
    %786 = vmatpush.bf16.msra.mxu0 0
    %787 = vmatpush.bf16.msra.mxu0 %v133
    %788 = vmatpush.bf16.msra.mxu0 %v115
    %789 = vmatpush.bf16.msra.mxu0 %v113
    %790 = vmatpush.bf16.msra.mxu0 %v111
    %791 = vmatmul.bf16.gmra.mxu0 %v768
    %v792 = vpop.f32.mrf.mxu0
    %v793 = vadd.f32 %v755, %v792
    %v794 = vpop.f32.mrf.mxu0
    %795 = vdwg.mxu0
    %v796 = vadd.f32 %v780, %v85
    %v797 = vadd.f32 %v793, %v86
    %v798 = vmax.f32 %v796, 0.0
    %v799 = vmax.f32 %v797, 0.0
    %v800 = vpack.c.bf16 %v798, %v798
    %v801 = vpack.c.bf16 %v799, %v799
    %802 = vmatpush.bf16.msra.mxu0 0
    %803 = vmatpush.bf16.msra.mxu0 0
    %804 = vmatpush.bf16.msra.mxu0 0
    %805 = vmatpush.bf16.msra.mxu0 0
    %806 = vmatpush.bf16.msra.mxu0 %v201
    %807 = vmatpush.bf16.msra.mxu0 %v190
    %808 = vmatpush.bf16.msra.mxu0 %v188
    %809 = vmatpush.bf16.msra.mxu0 %v186
    %810 = vmatmul.bf16.gmra.mxu0 %v768
    %v811 = vpop.f32.mrf.mxu0
    %v812 = vadd.f32 0.0, %v811
    %v813 = vpop.f32.mrf.mxu0
    %814 = vdwg.mxu0
    %815 = vmatpush.bf16.msra.mxu0 0
    %816 = vmatpush.bf16.msra.mxu0 0
    %817 = vmatpush.bf16.msra.mxu0 0
    %818 = vmatpush.bf16.msra.mxu0 0
    %819 = vmatpush.bf16.msra.mxu0 %v204
    %820 = vmatpush.bf16.msra.mxu0 %v191
    %821 = vmatpush.bf16.msra.mxu0 %v189
    %822 = vmatpush.bf16.msra.mxu0 %v187
    %823 = vmatmul.bf16.gmra.mxu0 %v768
    %v824 = vpop.f32.mrf.mxu0
    %v825 = vadd.f32 0.0, %v824
    %v826 = vpop.f32.mrf.mxu0
    %827 = vdwg.mxu0
    %828 = vrot.lane.b32.xlu0 %v760, 80
    %v829 = vpop.permute.xlu0 %828
    %v831 = vsel %vm124, %v829, 0
    %833 = vmatpush.bf16.msra.mxu0 0
    %834 = vmatpush.bf16.msra.mxu0 0
    %835 = vmatpush.bf16.msra.mxu0 0
    %836 = vmatpush.bf16.msra.mxu0 0
    %837 = vmatpush.bf16.msra.mxu0 %v130
    %838 = vmatpush.bf16.msra.mxu0 %v114
    %839 = vmatpush.bf16.msra.mxu0 %v112
    %840 = vmatpush.bf16.msra.mxu0 %v110
    %841 = vmatmul.bf16.gmra.mxu0 %v831
    %v842 = vpop.f32.mrf.mxu0
    %v843 = vadd.f32 %v812, %v842
    %v844 = vpop.f32.mrf.mxu0
    %845 = vdwg.mxu0
    %846 = vmatpush.bf16.msra.mxu0 0
    %847 = vmatpush.bf16.msra.mxu0 0
    %848 = vmatpush.bf16.msra.mxu0 0
    %849 = vmatpush.bf16.msra.mxu0 0
    %850 = vmatpush.bf16.msra.mxu0 %v133
    %851 = vmatpush.bf16.msra.mxu0 %v115
    %852 = vmatpush.bf16.msra.mxu0 %v113
    %853 = vmatpush.bf16.msra.mxu0 %v111
    %854 = vmatmul.bf16.gmra.mxu0 %v831
    %v855 = vpop.f32.mrf.mxu0
    %v856 = vadd.f32 %v825, %v855
    %v857 = vpop.f32.mrf.mxu0
    %858 = vdwg.mxu0
    %v859 = vadd.f32 %v843, %v85
    %v860 = vadd.f32 %v856, %v86
    %v861 = vmax.f32 %v859, 0.0
    %v862 = vmax.f32 %v860, 0.0
    %v863 = vpack.c.bf16 %v861, %v861
    %v864 = vpack.c.bf16 %v862, %v862
    %865 = vmatpush.bf16.msra.mxu0 0
    %866 = vmatpush.bf16.msra.mxu0 0
    %867 = vmatpush.bf16.msra.mxu0 0
    %868 = vmatpush.bf16.msra.mxu0 0
    %869 = vmatpush.bf16.msra.mxu0 %v201
    %870 = vmatpush.bf16.msra.mxu0 %v190
    %871 = vmatpush.bf16.msra.mxu0 %v188
    %872 = vmatpush.bf16.msra.mxu0 %v186
    %873 = vmatmul.bf16.gmra.mxu0 %v831
    %v874 = vpop.f32.mrf.mxu0
    %v875 = vadd.f32 0.0, %v874
    %v876 = vpop.f32.mrf.mxu0
    %877 = vdwg.mxu0
    %878 = vmatpush.bf16.msra.mxu0 0
    %879 = vmatpush.bf16.msra.mxu0 0
    %880 = vmatpush.bf16.msra.mxu0 0
    %881 = vmatpush.bf16.msra.mxu0 0
    %882 = vmatpush.bf16.msra.mxu0 %v204
    %883 = vmatpush.bf16.msra.mxu0 %v191
    %884 = vmatpush.bf16.msra.mxu0 %v189
    %885 = vmatpush.bf16.msra.mxu0 %v187
    %886 = vmatmul.bf16.gmra.mxu0 %v831
    %v887 = vpop.f32.mrf.mxu0
    %v888 = vadd.f32 0.0, %v887
    %v889 = vpop.f32.mrf.mxu0
    %890 = vdwg.mxu0
    %v891 = vunpack.c.h.b16 %v67
    %v892 = vpack.c.b16 %v891, %v891
    %893 = vrot.lane.b32.xlu0 %v760, 24
    %v894 = vpop.permute.xlu0 %893
    %895 = vrot.lane.b32.xlu0 %v892, 24
    %v896 = vpop.permute.xlu0 %895
    %vm897 = vcmask 195584
    %v898 = vsel %vm897, %v894, %v896
    %v900 = vsel %vm124, %v898, 0
    %902 = vmatpush.bf16.msra.mxu0 0
    %903 = vmatpush.bf16.msra.mxu0 0
    %904 = vmatpush.bf16.msra.mxu0 0
    %905 = vmatpush.bf16.msra.mxu0 0
    %906 = vmatpush.bf16.msra.mxu0 %v130
    %907 = vmatpush.bf16.msra.mxu0 %v114
    %908 = vmatpush.bf16.msra.mxu0 %v112
    %909 = vmatpush.bf16.msra.mxu0 %v110
    %910 = vmatmul.bf16.gmra.mxu0 %v900
    %v911 = vpop.f32.mrf.mxu0
    %v912 = vadd.f32 %v875, %v911
    %v913 = vpop.f32.mrf.mxu0
    %914 = vdwg.mxu0
    %915 = vmatpush.bf16.msra.mxu0 0
    %916 = vmatpush.bf16.msra.mxu0 0
    %917 = vmatpush.bf16.msra.mxu0 0
    %918 = vmatpush.bf16.msra.mxu0 0
    %919 = vmatpush.bf16.msra.mxu0 %v133
    %920 = vmatpush.bf16.msra.mxu0 %v115
    %921 = vmatpush.bf16.msra.mxu0 %v113
    %922 = vmatpush.bf16.msra.mxu0 %v111
    %923 = vmatmul.bf16.gmra.mxu0 %v900
    %v924 = vpop.f32.mrf.mxu0
    %v925 = vadd.f32 %v888, %v924
    %v926 = vpop.f32.mrf.mxu0
    %927 = vdwg.mxu0
    %v928 = vadd.f32 %v912, %v85
    %v929 = vadd.f32 %v925, %v86
    %v930 = vmax.f32 %v928, 0.0
    %v931 = vmax.f32 %v929, 0.0
    %v932 = vpack.c.bf16 %v930, %v930
    %v933 = vpack.c.bf16 %v931, %v931
    %934 = vmatpush.bf16.msra.mxu0 0
    %935 = vmatpush.bf16.msra.mxu0 0
    %936 = vmatpush.bf16.msra.mxu0 0
    %937 = vmatpush.bf16.msra.mxu0 0
    %938 = vmatpush.bf16.msra.mxu0 %v201
    %939 = vmatpush.bf16.msra.mxu0 %v190
    %940 = vmatpush.bf16.msra.mxu0 %v188
    %941 = vmatpush.bf16.msra.mxu0 %v186
    %942 = vmatmul.bf16.gmra.mxu0 %v900
    %v943 = vpop.f32.mrf.mxu0
    %v944 = vadd.f32 0.0, %v943
    %v945 = vpop.f32.mrf.mxu0
    %946 = vdwg.mxu0
    %947 = vmatpush.bf16.msra.mxu0 0
    %948 = vmatpush.bf16.msra.mxu0 0
    %949 = vmatpush.bf16.msra.mxu0 0
    %950 = vmatpush.bf16.msra.mxu0 0
    %951 = vmatpush.bf16.msra.mxu0 %v204
    %952 = vmatpush.bf16.msra.mxu0 %v191
    %953 = vmatpush.bf16.msra.mxu0 %v189
    %954 = vmatpush.bf16.msra.mxu0 %v187
    %955 = vmatmul.bf16.gmra.mxu0 %v900
    %v956 = vpop.f32.mrf.mxu0
    %v957 = vadd.f32 0.0, %v956
    %v958 = vpop.f32.mrf.mxu0
    %959 = vdwg.mxu0
    %960 = vrot.lane.b32.xlu0 %v892, 96
    %v961 = vpop.permute.xlu0 %960
    %v963 = vsel %vm124, %v961, 0
    %965 = vmatpush.bf16.msra.mxu0 0
    %966 = vmatpush.bf16.msra.mxu0 0
    %967 = vmatpush.bf16.msra.mxu0 0
    %968 = vmatpush.bf16.msra.mxu0 0
    %969 = vmatpush.bf16.msra.mxu0 %v130
    %970 = vmatpush.bf16.msra.mxu0 %v114
    %971 = vmatpush.bf16.msra.mxu0 %v112
    %972 = vmatpush.bf16.msra.mxu0 %v110
    %973 = vmatmul.bf16.gmra.mxu0 %v963
    %v974 = vpop.f32.mrf.mxu0
    %v975 = vadd.f32 %v944, %v974
    %v976 = vpop.f32.mrf.mxu0
    %977 = vdwg.mxu0
    %978 = vmatpush.bf16.msra.mxu0 0
    %979 = vmatpush.bf16.msra.mxu0 0
    %980 = vmatpush.bf16.msra.mxu0 0
    %981 = vmatpush.bf16.msra.mxu0 0
    %982 = vmatpush.bf16.msra.mxu0 %v133
    %983 = vmatpush.bf16.msra.mxu0 %v115
    %984 = vmatpush.bf16.msra.mxu0 %v113
    %985 = vmatpush.bf16.msra.mxu0 %v111
    %986 = vmatmul.bf16.gmra.mxu0 %v963
    %v987 = vpop.f32.mrf.mxu0
    %v988 = vadd.f32 %v957, %v987
    %v989 = vpop.f32.mrf.mxu0
    %990 = vdwg.mxu0
    %v991 = vadd.f32 %v975, %v85
    %v992 = vadd.f32 %v988, %v86
    %v993 = vmax.f32 %v991, 0.0
    %v994 = vmax.f32 %v992, 0.0
    %v995 = vpack.c.bf16 %v993, %v993
    %v996 = vpack.c.bf16 %v994, %v994
    %997 = vmatpush.bf16.msra.mxu0 0
    %998 = vmatpush.bf16.msra.mxu0 0
    %999 = vmatpush.bf16.msra.mxu0 0
    %1000 = vmatpush.bf16.msra.mxu0 0
    %1001 = vmatpush.bf16.msra.mxu0 %v201
    %1002 = vmatpush.bf16.msra.mxu0 %v190
    %1003 = vmatpush.bf16.msra.mxu0 %v188
    %1004 = vmatpush.bf16.msra.mxu0 %v186
    %1005 = vmatmul.bf16.gmra.mxu0 %v963
    %v1006 = vpop.f32.mrf.mxu0
    %v1007 = vadd.f32 0.0, %v1006
    %v1008 = vpop.f32.mrf.mxu0
    %1009 = vdwg.mxu0
    %1010 = vmatpush.bf16.msra.mxu0 0
    %1011 = vmatpush.bf16.msra.mxu0 0
    %1012 = vmatpush.bf16.msra.mxu0 0
    %1013 = vmatpush.bf16.msra.mxu0 0
    %1014 = vmatpush.bf16.msra.mxu0 %v204
    %1015 = vmatpush.bf16.msra.mxu0 %v191
    %1016 = vmatpush.bf16.msra.mxu0 %v189
    %1017 = vmatpush.bf16.msra.mxu0 %v187
    %1018 = vmatmul.bf16.gmra.mxu0 %v963
    %v1019 = vpop.f32.mrf.mxu0
    %v1020 = vadd.f32 0.0, %v1019
    %v1021 = vpop.f32.mrf.mxu0
    %1022 = vdwg.mxu0
    %v1024 = vunpack.c.l.b16 %v68
    %v1025 = vpack.c.b16 %v1024, %v1024
    %1026 = vrot.lane.b32.xlu0 %v892, 40
    %v1027 = vpop.permute.xlu0 %1026
    %1028 = vrot.lane.b32.xlu0 %v1025, 40
    %v1029 = vpop.permute.xlu0 %1028
    %vm1030 = vcmask 326656
    %v1031 = vsel %vm1030, %v1027, %v1029
    %v1033 = vsel %vm124, %v1031, 0
    %1035 = vmatpush.bf16.msra.mxu0 0
    %1036 = vmatpush.bf16.msra.mxu0 0
    %1037 = vmatpush.bf16.msra.mxu0 0
    %1038 = vmatpush.bf16.msra.mxu0 0
    %1039 = vmatpush.bf16.msra.mxu0 %v130
    %1040 = vmatpush.bf16.msra.mxu0 %v114
    %1041 = vmatpush.bf16.msra.mxu0 %v112
    %1042 = vmatpush.bf16.msra.mxu0 %v110
    %1043 = vmatmul.bf16.gmra.mxu0 %v1033
    %v1044 = vpop.f32.mrf.mxu0
    %v1045 = vadd.f32 %v1007, %v1044
    %v1046 = vpop.f32.mrf.mxu0
    %1047 = vdwg.mxu0
    %1048 = vmatpush.bf16.msra.mxu0 0
    %1049 = vmatpush.bf16.msra.mxu0 0
    %1050 = vmatpush.bf16.msra.mxu0 0
    %1051 = vmatpush.bf16.msra.mxu0 0
    %1052 = vmatpush.bf16.msra.mxu0 %v133
    %1053 = vmatpush.bf16.msra.mxu0 %v115
    %1054 = vmatpush.bf16.msra.mxu0 %v113
    %1055 = vmatpush.bf16.msra.mxu0 %v111
    %1056 = vmatmul.bf16.gmra.mxu0 %v1033
    %v1057 = vpop.f32.mrf.mxu0
    %v1058 = vadd.f32 %v1020, %v1057
    %v1059 = vpop.f32.mrf.mxu0
    %1060 = vdwg.mxu0
    %v1061 = vadd.f32 %v1045, %v85
    %v1062 = vadd.f32 %v1058, %v86
    %v1063 = vmax.f32 %v1061, 0.0
    %v1064 = vmax.f32 %v1062, 0.0
    %v1065 = vpack.c.bf16 %v1063, %v1063
    %v1066 = vpack.c.bf16 %v1064, %v1064
    %v1067 = vld [vmem:[#allocation2] sm:$0xf]
    %v1068 = vld [vmem:[#allocation2 + $0x4] sm:$0xf]
    %v1069 = vld [vmem:[#allocation2 + $0x8] sm:$0xf]
    %v1070 = vld [vmem:[#allocation2 + $0xc] sm:$0xf]
    %v1071 = vld [vmem:[#allocation2 + $0x10] sm:$0xf]
    %v1072 = vld [vmem:[#allocation2 + $0x14] sm:$0xf]
    %v1073 = vld [vmem:[#allocation2 + $0x18] sm:$0xf]
    %v1074 = vld [vmem:[#allocation2 + $0x1c] sm:$0xf]
    %v1075 = vld [vmem:[#allocation2 + $0x20] sm:$0xf]
    %v1076 = vld [vmem:[#allocation2 + $0x24] sm:$0xf]
    %v1077 = vld [vmem:[#allocation2 + $0x28] sm:$0xf]
    %v1078 = vld [vmem:[#allocation2 + $0x2c] sm:$0xf]
    %v1079 = vld [vmem:[#allocation2 + $0x30] sm:$0xf]
    %v1080 = vld [vmem:[#allocation2 + $0x34] sm:$0xf]
    %v1081 = vld [vmem:[#allocation2 + $0x38] sm:$0xf]
    %v1082 = vld [vmem:[#allocation2 + $0x3c] sm:$0xf]
    %v1083 = vld [vmem:[#allocation2 + $0x40] sm:$0xf]
    %v1084 = vld [vmem:[#allocation2 + $0x44] sm:$0xf]
    %v1085 = vld [vmem:[#allocation2 + $0x48] sm:$0xf]
    %v1086 = vld [vmem:[#allocation2 + $0x4c] sm:$0xf]
    %v1087 = vld [vmem:[#allocation2 + $0x50] sm:$0xf]
    %v1088 = vld [vmem:[#allocation2 + $0x54] sm:$0xf]
    %v1089 = vld [vmem:[#allocation2 + $0x58] sm:$0xf]
    %v1090 = vld [vmem:[#allocation2 + $0x5c] sm:$0xf]
    %v1091 = vld [vmem:[#allocation2 + $0x60] sm:$0xf]
    %v1092 = vld [vmem:[#allocation2 + $0x64] sm:$0xf]
    %v1093 = vld [vmem:[#allocation2 + $0x68] sm:$0xf]
    %v1094 = vld [vmem:[#allocation2 + $0x6c] sm:$0xf]
    %s1095 = scalar_lea.vmem [#allocation2], 112
    %v1096 = vld [vmem:[%s1095] sm:$0xf]
    %v1097 = vld [vmem:[%s1095 + $0x4] sm:$0xf]
    %v1098 = vld [vmem:[%s1095 + $0x8] sm:$0xf]
    %v1099 = vld [vmem:[%s1095 + $0xc] sm:$0xf]
    %v1100 = vld [vmem:[%s1095 + $0x10] sm:$0xf]
    %v1101 = vld [vmem:[%s1095 + $0x14] sm:$0xf]
    %v1102 = vld [vmem:[%s1095 + $0x18] sm:$0xf]
    %v1103 = vld [vmem:[%s1095 + $0x1c] sm:$0xf]
    %v1104 = vld [vmem:[%s1095 + $0x20] sm:$0xf]
    %v1105 = vld [vmem:[%s1095 + $0x24] sm:$0xf]
    %v1106 = vld [vmem:[%s1095 + $0x28] sm:$0xf]
    %v1107 = vld [vmem:[%s1095 + $0x2c] sm:$0xf]
    %v1108 = vld [vmem:[%s1095 + $0x30] sm:$0xf]
    %v1109 = vld [vmem:[%s1095 + $0x34] sm:$0xf]
    %v1110 = vld [vmem:[%s1095 + $0x38] sm:$0xf]
    %v1111 = vld [vmem:[%s1095 + $0x3c] sm:$0xf]
    %v1112 = vld [vmem:[%s1095 + $0x40] sm:$0xf]
    %v1113 = vld [vmem:[%s1095 + $0x44] sm:$0xf]
    %v1114 = vld [vmem:[%s1095 + $0x48] sm:$0xf]
    %v1115 = vld [vmem:[%s1095 + $0x4c] sm:$0xf]
    %v1116 = vld [vmem:[%s1095 + $0x50] sm:$0xf]
    %v1117 = vld [vmem:[%s1095 + $0x54] sm:$0xf]
    %v1118 = vld [vmem:[%s1095 + $0x58] sm:$0xf]
    %v1119 = vld [vmem:[%s1095 + $0x5c] sm:$0xf]
    %v1120 = vld [vmem:[%s1095 + $0x60] sm:$0xf]
    %v1121 = vld [vmem:[%s1095 + $0x64] sm:$0xf]
    %v1122 = vld [vmem:[%s1095 + $0x68] sm:$0xf]
    %v1123 = vld [vmem:[%s1095 + $0x6c] sm:$0xf]
    %s1124 = scalar_lea.vmem [#allocation2], 224
    %v1125 = vld [vmem:[%s1124] sm:$0xf]
    %v1126 = vld [vmem:[%s1124 + $0x4] sm:$0xf]
    %v1127 = vld [vmem:[%s1124 + $0x8] sm:$0xf]
    %v1128 = vld [vmem:[%s1124 + $0xc] sm:$0xf]
    %v1129 = vld [vmem:[%s1124 + $0x10] sm:$0xf]
    %v1130 = vld [vmem:[%s1124 + $0x14] sm:$0xf]
    %v1131 = vld [vmem:[%s1124 + $0x18] sm:$0xf]
    %v1132 = vld [vmem:[%s1124 + $0x1c] sm:$0xf]
    %v1133 = vld [vmem:[%s1124 + $0x20] sm:$0xf]
    %v1134 = vld [vmem:[%s1124 + $0x24] sm:$0xf]
    %v1135 = vld [vmem:[%s1124 + $0x28] sm:$0xf]
    %v1136 = vld [vmem:[%s1124 + $0x2c] sm:$0xf]
    %v1137 = vld [vmem:[%s1124 + $0x30] sm:$0xf]
    %v1138 = vld [vmem:[%s1124 + $0x34] sm:$0xf]
    %v1139 = vld [vmem:[%s1124 + $0x38] sm:$0xf]
    %v1140 = vld [vmem:[%s1124 + $0x3c] sm:$0xf]
    %v1141 = vld [vmem:[%s1124 + $0x40] sm:$0xf]
    %v1142 = vld [vmem:[%s1124 + $0x44] sm:$0xf]
    %v1143 = vld [vmem:[%s1124 + $0x48] sm:$0xf]
    %v1144 = vld [vmem:[%s1124 + $0x4c] sm:$0xf]
    %v1145 = vld [vmem:[%s1124 + $0x50] sm:$0xf]
    %v1146 = vld [vmem:[%s1124 + $0x54] sm:$0xf]
    %v1147 = vld [vmem:[%s1124 + $0x58] sm:$0xf]
    %v1148 = vld [vmem:[%s1124 + $0x5c] sm:$0xf]
    %v1149 = vld [vmem:[%s1124 + $0x60] sm:$0xf]
    %v1150 = vld [vmem:[%s1124 + $0x64] sm:$0xf]
    %v1151 = vld [vmem:[%s1124 + $0x68] sm:$0xf]
    %v1152 = vld [vmem:[%s1124 + $0x6c] sm:$0xf]
    %v1153 = vld [vmem:[%s5] sm:$0x1]
    %v1182 = vunpack.c.l.b16 %v1125
    %v1183 = vunpack.c.l.b16 %v1126
    %v1184 = vunpack.c.l.b16 %v1127
    %v1185 = vunpack.c.l.b16 %v1128
    %v1186 = vunpack.c.l.b16 %v1129
    %v1187 = vunpack.c.l.b16 %v1130
    %v1188 = vunpack.c.l.b16 %v1131
    %v1189 = vunpack.c.l.b16 %v1132
    %v1190 = vunpack.c.l.b16 %v1133
    %v1191 = vunpack.c.l.b16 %v1134
    %v1192 = vunpack.c.l.b16 %v1135
    %v1193 = vunpack.c.l.b16 %v1136
    %v1194 = vunpack.c.l.b16 %v1137
    %v1195 = vunpack.c.l.b16 %v1138
    %v1196 = vunpack.c.l.b16 %v1139
    %v1197 = vunpack.c.l.b16 %v1140
    %v1198 = vunpack.c.l.b16 %v1141
    %v1199 = vunpack.c.l.b16 %v1142
    %v1200 = vunpack.c.l.b16 %v1143
    %v1201 = vunpack.c.l.b16 %v1144
    %v1202 = vunpack.c.l.b16 %v1145
    %v1203 = vunpack.c.l.b16 %v1146
    %v1204 = vunpack.c.l.b16 %v1147
    %v1205 = vunpack.c.l.b16 %v1148
    %v1206 = vunpack.c.l.b16 %v1149
    %v1207 = vunpack.c.l.b16 %v1150
    %v1208 = vunpack.c.l.b16 %v1151
    %v1209 = vunpack.c.l.b16 %v1152
    %v1210 = vpack.c.b16 %v1183, %v1182
    %v1211 = vpack.c.b16 %v1185, %v1184
    %v1212 = vpack.c.b16 %v1187, %v1186
    %v1213 = vpack.c.b16 %v1189, %v1188
    %v1214 = vpack.c.b16 %v1191, %v1190
    %v1215 = vpack.c.b16 %v1193, %v1192
    %v1216 = vpack.c.b16 %v1195, %v1194
    %v1217 = vpack.c.b16 %v1197, %v1196
    %v1218 = vpack.c.b16 %v1199, %v1198
    %v1219 = vpack.c.b16 %v1201, %v1200
    %v1220 = vpack.c.b16 %v1203, %v1202
    %v1221 = vpack.c.b16 %v1205, %v1204
    %v1222 = vpack.c.b16 %v1207, %v1206
    %v1223 = vpack.c.b16 %v1209, %v1208
    %vm1238 = vcmask 785408
    %v1240 = vsel %vm1238, %v271, 0
    %1242 = vmatpush.bf16.msra.mxu0 %v1217
    %1243 = vmatpush.bf16.msra.mxu0 %v1216
    %1244 = vmatpush.bf16.msra.mxu0 %v1215
    %1245 = vmatpush.bf16.msra.mxu0 %v1214
    %1246 = vmatpush.bf16.msra.mxu0 %v1213
    %1247 = vmatpush.bf16.msra.mxu0 %v1212
    %1248 = vmatpush.bf16.msra.mxu0 %v1211
    %1249 = vmatpush.bf16.msra.mxu0 %v1210
    %1250 = vmatmul.bf16.gmra.mxu0 %v270
    %v1251 = vpop.f32.mrf.mxu0
    %v1252 = vadd.f32 0.0, %v1251
    %v1253 = vpop.f32.mrf.mxu0
    %1254 = vdwg.mxu0
    %1255 = vmatpush.bf16.msra.mxu0 0
    %1256 = vmatpush.bf16.msra.mxu0 0
    %1257 = vmatpush.bf16.msra.mxu0 %v1223
    %1258 = vmatpush.bf16.msra.mxu0 %v1222
    %1259 = vmatpush.bf16.msra.mxu0 %v1221
    %1260 = vmatpush.bf16.msra.mxu0 %v1220
    %1261 = vmatpush.bf16.msra.mxu0 %v1219
    %1262 = vmatpush.bf16.msra.mxu0 %v1218
    %1263 = vmatmul.bf16.gmra.mxu0 %v1240
    %v1264 = vpop.f32.mrf.mxu0
    %v1265 = vadd.f32 %v1252, %v1264
    %v1266 = vpop.f32.mrf.mxu0
    %1267 = vdwg.mxu0
    %v1296 = vunpack.c.l.b16 %v1096
    %v1297 = vunpack.c.l.b16 %v1097
    %v1298 = vunpack.c.l.b16 %v1098
    %v1299 = vunpack.c.l.b16 %v1099
    %v1300 = vunpack.c.l.b16 %v1100
    %v1301 = vunpack.c.l.b16 %v1101
    %v1302 = vunpack.c.l.b16 %v1102
    %v1303 = vunpack.c.l.b16 %v1103
    %v1304 = vunpack.c.l.b16 %v1104
    %v1305 = vunpack.c.l.b16 %v1105
    %v1306 = vunpack.c.l.b16 %v1106
    %v1307 = vunpack.c.l.b16 %v1107
    %v1308 = vunpack.c.l.b16 %v1108
    %v1309 = vunpack.c.l.b16 %v1109
    %v1310 = vunpack.c.l.b16 %v1110
    %v1311 = vunpack.c.l.b16 %v1111
    %v1312 = vunpack.c.l.b16 %v1112
    %v1313 = vunpack.c.l.b16 %v1113
    %v1314 = vunpack.c.l.b16 %v1114
    %v1315 = vunpack.c.l.b16 %v1115
    %v1316 = vunpack.c.l.b16 %v1116
    %v1317 = vunpack.c.l.b16 %v1117
    %v1318 = vunpack.c.l.b16 %v1118
    %v1319 = vunpack.c.l.b16 %v1119
    %v1320 = vunpack.c.l.b16 %v1120
    %v1321 = vunpack.c.l.b16 %v1121
    %v1322 = vunpack.c.l.b16 %v1122
    %v1323 = vunpack.c.l.b16 %v1123
    %v1324 = vpack.c.b16 %v1297, %v1296
    %v1325 = vpack.c.b16 %v1299, %v1298
    %v1326 = vpack.c.b16 %v1301, %v1300
    %v1327 = vpack.c.b16 %v1303, %v1302
    %v1328 = vpack.c.b16 %v1305, %v1304
    %v1329 = vpack.c.b16 %v1307, %v1306
    %v1330 = vpack.c.b16 %v1309, %v1308
    %v1331 = vpack.c.b16 %v1311, %v1310
    %v1332 = vpack.c.b16 %v1313, %v1312
    %v1333 = vpack.c.b16 %v1315, %v1314
    %v1334 = vpack.c.b16 %v1317, %v1316
    %v1335 = vpack.c.b16 %v1319, %v1318
    %v1336 = vpack.c.b16 %v1321, %v1320
    %v1337 = vpack.c.b16 %v1323, %v1322
    %v1353 = vsel %vm1238, %v164, 0
    %1355 = vmatpush.bf16.msra.mxu0 %v1331
    %1356 = vmatpush.bf16.msra.mxu0 %v1330
    %1357 = vmatpush.bf16.msra.mxu0 %v1329
    %1358 = vmatpush.bf16.msra.mxu0 %v1328
    %1359 = vmatpush.bf16.msra.mxu0 %v1327
    %1360 = vmatpush.bf16.msra.mxu0 %v1326
    %1361 = vmatpush.bf16.msra.mxu0 %v1325
    %1362 = vmatpush.bf16.msra.mxu0 %v1324
    %1363 = vmatmul.bf16.gmra.mxu0 %v163
    %v1364 = vpop.f32.mrf.mxu0
    %v1365 = vadd.f32 %v1265, %v1364
    %v1366 = vpop.f32.mrf.mxu0
    %1367 = vdwg.mxu0
    %1368 = vmatpush.bf16.msra.mxu0 0
    %1369 = vmatpush.bf16.msra.mxu0 0
    %1370 = vmatpush.bf16.msra.mxu0 %v1337
    %1371 = vmatpush.bf16.msra.mxu0 %v1336
    %1372 = vmatpush.bf16.msra.mxu0 %v1335
    %1373 = vmatpush.bf16.msra.mxu0 %v1334
    %1374 = vmatpush.bf16.msra.mxu0 %v1333
    %1375 = vmatpush.bf16.msra.mxu0 %v1332
    %1376 = vmatmul.bf16.gmra.mxu0 %v1353
    %v1377 = vpop.f32.mrf.mxu0
    %v1378 = vadd.f32 %v1365, %v1377
    %v1379 = vpop.f32.mrf.mxu0
    %1380 = vdwg.mxu0
    %v1382 = vperm.slane %v1153, 0
    %v1384 = vadd.f32 %v1378, %v1382
    %v1385 = vmax.f32 %v1384, 0.0
    %v1386 = vpack.c.bf16 %v1385, %v1385
    %v1388 = vsel %vm1238, %v340, 0
    %1390 = vmatpush.bf16.msra.mxu0 %v1331
    %1391 = vmatpush.bf16.msra.mxu0 %v1330
    %1392 = vmatpush.bf16.msra.mxu0 %v1329
    %1393 = vmatpush.bf16.msra.mxu0 %v1328
    %1394 = vmatpush.bf16.msra.mxu0 %v1327
    %1395 = vmatpush.bf16.msra.mxu0 %v1326
    %1396 = vmatpush.bf16.msra.mxu0 %v1325
    %1397 = vmatpush.bf16.msra.mxu0 %v1324
    %1398 = vmatmul.bf16.gmra.mxu0 %v339
    %v1399 = vpop.f32.mrf.mxu0
    %v1400 = vadd.f32 0.0, %v1399
    %v1401 = vpop.f32.mrf.mxu0
    %1402 = vdwg.mxu0
    %1403 = vmatpush.bf16.msra.mxu0 0
    %1404 = vmatpush.bf16.msra.mxu0 0
    %1405 = vmatpush.bf16.msra.mxu0 %v1337
    %1406 = vmatpush.bf16.msra.mxu0 %v1336
    %1407 = vmatpush.bf16.msra.mxu0 %v1335
    %1408 = vmatpush.bf16.msra.mxu0 %v1334
    %1409 = vmatpush.bf16.msra.mxu0 %v1333
    %1410 = vmatpush.bf16.msra.mxu0 %v1332
    %1411 = vmatmul.bf16.gmra.mxu0 %v1388
    %v1412 = vpop.f32.mrf.mxu0
    %v1413 = vadd.f32 %v1400, %v1412
    %v1414 = vpop.f32.mrf.mxu0
    %1415 = vdwg.mxu0
    %v1444 = vunpack.c.l.b16 %v1067
    %v1445 = vunpack.c.l.b16 %v1068
    %v1446 = vunpack.c.l.b16 %v1069
    %v1447 = vunpack.c.l.b16 %v1070
    %v1448 = vunpack.c.l.b16 %v1071
    %v1449 = vunpack.c.l.b16 %v1072
    %v1450 = vunpack.c.l.b16 %v1073
    %v1451 = vunpack.c.l.b16 %v1074
    %v1452 = vunpack.c.l.b16 %v1075
    %v1453 = vunpack.c.l.b16 %v1076
    %v1454 = vunpack.c.l.b16 %v1077
    %v1455 = vunpack.c.l.b16 %v1078
    %v1456 = vunpack.c.l.b16 %v1079
    %v1457 = vunpack.c.l.b16 %v1080
    %v1458 = vunpack.c.l.b16 %v1081
    %v1459 = vunpack.c.l.b16 %v1082
    %v1460 = vunpack.c.l.b16 %v1083
    %v1461 = vunpack.c.l.b16 %v1084
    %v1462 = vunpack.c.l.b16 %v1085
    %v1463 = vunpack.c.l.b16 %v1086
    %v1464 = vunpack.c.l.b16 %v1087
    %v1465 = vunpack.c.l.b16 %v1088
    %v1466 = vunpack.c.l.b16 %v1089
    %v1467 = vunpack.c.l.b16 %v1090
    %v1468 = vunpack.c.l.b16 %v1091
    %v1469 = vunpack.c.l.b16 %v1092
    %v1470 = vunpack.c.l.b16 %v1093
    %v1471 = vunpack.c.l.b16 %v1094
    %v1472 = vpack.c.b16 %v1445, %v1444
    %v1473 = vpack.c.b16 %v1447, %v1446
    %v1474 = vpack.c.b16 %v1449, %v1448
    %v1475 = vpack.c.b16 %v1451, %v1450
    %v1476 = vpack.c.b16 %v1453, %v1452
    %v1477 = vpack.c.b16 %v1455, %v1454
    %v1478 = vpack.c.b16 %v1457, %v1456
    %v1479 = vpack.c.b16 %v1459, %v1458
    %v1480 = vpack.c.b16 %v1461, %v1460
    %v1481 = vpack.c.b16 %v1463, %v1462
    %v1482 = vpack.c.b16 %v1465, %v1464
    %v1483 = vpack.c.b16 %v1467, %v1466
    %v1484 = vpack.c.b16 %v1469, %v1468
    %v1485 = vpack.c.b16 %v1471, %v1470
    %1500 = vmatpush.bf16.msra.mxu0 %v1479
    %1501 = vmatpush.bf16.msra.mxu0 %v1478
    %1502 = vmatpush.bf16.msra.mxu0 %v1477
    %1503 = vmatpush.bf16.msra.mxu0 %v1476
    %1504 = vmatpush.bf16.msra.mxu0 %v1475
    %1505 = vmatpush.bf16.msra.mxu0 %v1474
    %1506 = vmatpush.bf16.msra.mxu0 %v1473
    %1507 = vmatpush.bf16.msra.mxu0 %v1472
    %1508 = vmatmul.bf16.gmra.mxu0 %v270
    %v1509 = vpop.f32.mrf.mxu0
    %v1510 = vadd.f32 %v1413, %v1509
    %v1511 = vpop.f32.mrf.mxu0
    %1512 = vdwg.mxu0
    %1513 = vmatpush.bf16.msra.mxu0 0
    %1514 = vmatpush.bf16.msra.mxu0 0
    %1515 = vmatpush.bf16.msra.mxu0 %v1485
    %1516 = vmatpush.bf16.msra.mxu0 %v1484
    %1517 = vmatpush.bf16.msra.mxu0 %v1483
    %1518 = vmatpush.bf16.msra.mxu0 %v1482
    %1519 = vmatpush.bf16.msra.mxu0 %v1481
    %1520 = vmatpush.bf16.msra.mxu0 %v1480
    %1521 = vmatmul.bf16.gmra.mxu0 %v1240
    %v1522 = vpop.f32.mrf.mxu0
    %v1523 = vadd.f32 %v1510, %v1522
    %v1524 = vpop.f32.mrf.mxu0
    %1525 = vdwg.mxu0
    %v1527 = vsel %vm1238, %v403, 0
    %1529 = vmatpush.bf16.msra.mxu0 %v1217
    %1530 = vmatpush.bf16.msra.mxu0 %v1216
    %1531 = vmatpush.bf16.msra.mxu0 %v1215
    %1532 = vmatpush.bf16.msra.mxu0 %v1214
    %1533 = vmatpush.bf16.msra.mxu0 %v1213
    %1534 = vmatpush.bf16.msra.mxu0 %v1212
    %1535 = vmatpush.bf16.msra.mxu0 %v1211
    %1536 = vmatpush.bf16.msra.mxu0 %v1210
    %1537 = vmatmul.bf16.gmra.mxu0 %v402
    %v1538 = vpop.f32.mrf.mxu0
    %v1539 = vadd.f32 0.0, %v1538
    %v1540 = vpop.f32.mrf.mxu0
    %1541 = vdwg.mxu0
    %1542 = vmatpush.bf16.msra.mxu0 0
    %1543 = vmatpush.bf16.msra.mxu0 0
    %1544 = vmatpush.bf16.msra.mxu0 %v1223
    %1545 = vmatpush.bf16.msra.mxu0 %v1222
    %1546 = vmatpush.bf16.msra.mxu0 %v1221
    %1547 = vmatpush.bf16.msra.mxu0 %v1220
    %1548 = vmatpush.bf16.msra.mxu0 %v1219
    %1549 = vmatpush.bf16.msra.mxu0 %v1218
    %1550 = vmatmul.bf16.gmra.mxu0 %v1527
    %v1551 = vpop.f32.mrf.mxu0
    %v1552 = vadd.f32 %v1539, %v1551
    %v1553 = vpop.f32.mrf.mxu0
    %1554 = vdwg.mxu0
    %v1555 = vadd.f32 %v1523, %v1552
    %v1556 = vadd.f32 %v1555, %v1382
    %v1557 = vmax.f32 %v1556, 0.0
    %v1558 = vpack.c.bf16 %v1557, %v1557
    %v1560 = vsel %vm1238, %v473, 0
    %1562 = vmatpush.bf16.msra.mxu0 %v1331
    %1563 = vmatpush.bf16.msra.mxu0 %v1330
    %1564 = vmatpush.bf16.msra.mxu0 %v1329
    %1565 = vmatpush.bf16.msra.mxu0 %v1328
    %1566 = vmatpush.bf16.msra.mxu0 %v1327
    %1567 = vmatpush.bf16.msra.mxu0 %v1326
    %1568 = vmatpush.bf16.msra.mxu0 %v1325
    %1569 = vmatpush.bf16.msra.mxu0 %v1324
    %1570 = vmatmul.bf16.gmra.mxu0 %v472
    %v1571 = vpop.f32.mrf.mxu0
    %v1572 = vadd.f32 0.0, %v1571
    %v1573 = vpop.f32.mrf.mxu0
    %1574 = vdwg.mxu0
    %1575 = vmatpush.bf16.msra.mxu0 0
    %1576 = vmatpush.bf16.msra.mxu0 0
    %1577 = vmatpush.bf16.msra.mxu0 %v1337
    %1578 = vmatpush.bf16.msra.mxu0 %v1336
    %1579 = vmatpush.bf16.msra.mxu0 %v1335
    %1580 = vmatpush.bf16.msra.mxu0 %v1334
    %1581 = vmatpush.bf16.msra.mxu0 %v1333
    %1582 = vmatpush.bf16.msra.mxu0 %v1332
    %1583 = vmatmul.bf16.gmra.mxu0 %v1560
    %v1584 = vpop.f32.mrf.mxu0
    %v1585 = vadd.f32 %v1572, %v1584
    %v1586 = vpop.f32.mrf.mxu0
    %1587 = vdwg.mxu0
    %1588 = vmatpush.bf16.msra.mxu0 %v1479
    %1589 = vmatpush.bf16.msra.mxu0 %v1478
    %1590 = vmatpush.bf16.msra.mxu0 %v1477
    %1591 = vmatpush.bf16.msra.mxu0 %v1476
    %1592 = vmatpush.bf16.msra.mxu0 %v1475
    %1593 = vmatpush.bf16.msra.mxu0 %v1474
    %1594 = vmatpush.bf16.msra.mxu0 %v1473
    %1595 = vmatpush.bf16.msra.mxu0 %v1472
    %1596 = vmatmul.bf16.gmra.mxu0 %v402
    %v1597 = vpop.f32.mrf.mxu0
    %v1598 = vadd.f32 %v1585, %v1597
    %v1599 = vpop.f32.mrf.mxu0
    %1600 = vdwg.mxu0
    %1601 = vmatpush.bf16.msra.mxu0 0
    %1602 = vmatpush.bf16.msra.mxu0 0
    %1603 = vmatpush.bf16.msra.mxu0 %v1485
    %1604 = vmatpush.bf16.msra.mxu0 %v1484
    %1605 = vmatpush.bf16.msra.mxu0 %v1483
    %1606 = vmatpush.bf16.msra.mxu0 %v1482
    %1607 = vmatpush.bf16.msra.mxu0 %v1481
    %1608 = vmatpush.bf16.msra.mxu0 %v1480
    %1609 = vmatmul.bf16.gmra.mxu0 %v1527
    %v1610 = vpop.f32.mrf.mxu0
    %v1611 = vadd.f32 %v1598, %v1610
    %v1612 = vpop.f32.mrf.mxu0
    %1613 = vdwg.mxu0
    %v1615 = vsel %vm1238, %v536, 0
    %1617 = vmatpush.bf16.msra.mxu0 %v1217
    %1618 = vmatpush.bf16.msra.mxu0 %v1216
    %1619 = vmatpush.bf16.msra.mxu0 %v1215
    %1620 = vmatpush.bf16.msra.mxu0 %v1214
    %1621 = vmatpush.bf16.msra.mxu0 %v1213
    %1622 = vmatpush.bf16.msra.mxu0 %v1212
    %1623 = vmatpush.bf16.msra.mxu0 %v1211
    %1624 = vmatpush.bf16.msra.mxu0 %v1210
    %1625 = vmatmul.bf16.gmra.mxu0 %v535
    %v1626 = vpop.f32.mrf.mxu0
    %v1627 = vadd.f32 0.0, %v1626
    %v1628 = vpop.f32.mrf.mxu0
    %1629 = vdwg.mxu0
    %1630 = vmatpush.bf16.msra.mxu0 0
    %1631 = vmatpush.bf16.msra.mxu0 0
    %1632 = vmatpush.bf16.msra.mxu0 %v1223
    %1633 = vmatpush.bf16.msra.mxu0 %v1222
    %1634 = vmatpush.bf16.msra.mxu0 %v1221
    %1635 = vmatpush.bf16.msra.mxu0 %v1220
    %1636 = vmatpush.bf16.msra.mxu0 %v1219
    %1637 = vmatpush.bf16.msra.mxu0 %v1218
    %1638 = vmatmul.bf16.gmra.mxu0 %v1615
    %v1639 = vpop.f32.mrf.mxu0
    %v1640 = vadd.f32 %v1627, %v1639
    %v1641 = vpop.f32.mrf.mxu0
    %1642 = vdwg.mxu0
    %v1643 = vadd.f32 %v1611, %v1640
    %v1644 = vadd.f32 %v1643, %v1382
    %v1645 = vmax.f32 %v1644, 0.0
    %v1646 = vpack.c.bf16 %v1645, %v1645
    %v1648 = vsel %vm1238, %v605, 0
    %1650 = vmatpush.bf16.msra.mxu0 %v1331
    %1651 = vmatpush.bf16.msra.mxu0 %v1330
    %1652 = vmatpush.bf16.msra.mxu0 %v1329
    %1653 = vmatpush.bf16.msra.mxu0 %v1328
    %1654 = vmatpush.bf16.msra.mxu0 %v1327
    %1655 = vmatpush.bf16.msra.mxu0 %v1326
    %1656 = vmatpush.bf16.msra.mxu0 %v1325
    %1657 = vmatpush.bf16.msra.mxu0 %v1324
    %1658 = vmatmul.bf16.gmra.mxu0 %v604
    %v1659 = vpop.f32.mrf.mxu0
    %v1660 = vadd.f32 0.0, %v1659
    %v1661 = vpop.f32.mrf.mxu0
    %1662 = vdwg.mxu0
    %1663 = vmatpush.bf16.msra.mxu0 0
    %1664 = vmatpush.bf16.msra.mxu0 0
    %1665 = vmatpush.bf16.msra.mxu0 %v1337
    %1666 = vmatpush.bf16.msra.mxu0 %v1336
    %1667 = vmatpush.bf16.msra.mxu0 %v1335
    %1668 = vmatpush.bf16.msra.mxu0 %v1334
    %1669 = vmatpush.bf16.msra.mxu0 %v1333
    %1670 = vmatpush.bf16.msra.mxu0 %v1332
    %1671 = vmatmul.bf16.gmra.mxu0 %v1648
    %v1672 = vpop.f32.mrf.mxu0
    %v1673 = vadd.f32 %v1660, %v1672
    %v1674 = vpop.f32.mrf.mxu0
    %1675 = vdwg.mxu0
    %1676 = vmatpush.bf16.msra.mxu0 %v1479
    %1677 = vmatpush.bf16.msra.mxu0 %v1478
    %1678 = vmatpush.bf16.msra.mxu0 %v1477
    %1679 = vmatpush.bf16.msra.mxu0 %v1476
    %1680 = vmatpush.bf16.msra.mxu0 %v1475
    %1681 = vmatpush.bf16.msra.mxu0 %v1474
    %1682 = vmatpush.bf16.msra.mxu0 %v1473
    %1683 = vmatpush.bf16.msra.mxu0 %v1472
    %1684 = vmatmul.bf16.gmra.mxu0 %v535
    %v1685 = vpop.f32.mrf.mxu0
    %v1686 = vadd.f32 %v1673, %v1685
    %v1687 = vpop.f32.mrf.mxu0
    %1688 = vdwg.mxu0
    %1689 = vmatpush.bf16.msra.mxu0 0
    %1690 = vmatpush.bf16.msra.mxu0 0
    %1691 = vmatpush.bf16.msra.mxu0 %v1485
    %1692 = vmatpush.bf16.msra.mxu0 %v1484
    %1693 = vmatpush.bf16.msra.mxu0 %v1483
    %1694 = vmatpush.bf16.msra.mxu0 %v1482
    %1695 = vmatpush.bf16.msra.mxu0 %v1481
    %1696 = vmatpush.bf16.msra.mxu0 %v1480
    %1697 = vmatmul.bf16.gmra.mxu0 %v1615
    %v1698 = vpop.f32.mrf.mxu0
    %v1699 = vadd.f32 %v1686, %v1698
    %v1700 = vpop.f32.mrf.mxu0
    %1701 = vdwg.mxu0
    %v1703 = vsel %vm1238, %v668, 0
    %1705 = vmatpush.bf16.msra.mxu0 %v1217
    %1706 = vmatpush.bf16.msra.mxu0 %v1216
    %1707 = vmatpush.bf16.msra.mxu0 %v1215
    %1708 = vmatpush.bf16.msra.mxu0 %v1214
    %1709 = vmatpush.bf16.msra.mxu0 %v1213
    %1710 = vmatpush.bf16.msra.mxu0 %v1212
    %1711 = vmatpush.bf16.msra.mxu0 %v1211
    %1712 = vmatpush.bf16.msra.mxu0 %v1210
    %1713 = vmatmul.bf16.gmra.mxu0 %v667
    %v1714 = vpop.f32.mrf.mxu0
    %v1715 = vadd.f32 0.0, %v1714
    %v1716 = vpop.f32.mrf.mxu0
    %1717 = vdwg.mxu0
    %1718 = vmatpush.bf16.msra.mxu0 0
    %1719 = vmatpush.bf16.msra.mxu0 0
    %1720 = vmatpush.bf16.msra.mxu0 %v1223
    %1721 = vmatpush.bf16.msra.mxu0 %v1222
    %1722 = vmatpush.bf16.msra.mxu0 %v1221
    %1723 = vmatpush.bf16.msra.mxu0 %v1220
    %1724 = vmatpush.bf16.msra.mxu0 %v1219
    %1725 = vmatpush.bf16.msra.mxu0 %v1218
    %1726 = vmatmul.bf16.gmra.mxu0 %v1703
    %v1727 = vpop.f32.mrf.mxu0
    %v1728 = vadd.f32 %v1715, %v1727
    %v1729 = vpop.f32.mrf.mxu0
    %1730 = vdwg.mxu0
    %v1731 = vadd.f32 %v1699, %v1728
    %v1732 = vadd.f32 %v1731, %v1382
    %v1733 = vmax.f32 %v1732, 0.0
    %v1734 = vpack.c.bf16 %v1733, %v1733
    %v1736 = vsel %vm1238, %v731, 0
    %1738 = vmatpush.bf16.msra.mxu0 %v1331
    %1739 = vmatpush.bf16.msra.mxu0 %v1330
    %1740 = vmatpush.bf16.msra.mxu0 %v1329
    %1741 = vmatpush.bf16.msra.mxu0 %v1328
    %1742 = vmatpush.bf16.msra.mxu0 %v1327
    %1743 = vmatpush.bf16.msra.mxu0 %v1326
    %1744 = vmatpush.bf16.msra.mxu0 %v1325
    %1745 = vmatpush.bf16.msra.mxu0 %v1324
    %1746 = vmatmul.bf16.gmra.mxu0 %v730
    %v1747 = vpop.f32.mrf.mxu0
    %v1748 = vadd.f32 0.0, %v1747
    %v1749 = vpop.f32.mrf.mxu0
    %1750 = vdwg.mxu0
    %1751 = vmatpush.bf16.msra.mxu0 0
    %1752 = vmatpush.bf16.msra.mxu0 0
    %1753 = vmatpush.bf16.msra.mxu0 %v1337
    %1754 = vmatpush.bf16.msra.mxu0 %v1336
    %1755 = vmatpush.bf16.msra.mxu0 %v1335
    %1756 = vmatpush.bf16.msra.mxu0 %v1334
    %1757 = vmatpush.bf16.msra.mxu0 %v1333
    %1758 = vmatpush.bf16.msra.mxu0 %v1332
    %1759 = vmatmul.bf16.gmra.mxu0 %v1736
    %v1760 = vpop.f32.mrf.mxu0
    %v1761 = vadd.f32 %v1748, %v1760
    %v1762 = vpop.f32.mrf.mxu0
    %1763 = vdwg.mxu0
    %1764 = vmatpush.bf16.msra.mxu0 %v1479
    %1765 = vmatpush.bf16.msra.mxu0 %v1478
    %1766 = vmatpush.bf16.msra.mxu0 %v1477
    %1767 = vmatpush.bf16.msra.mxu0 %v1476
    %1768 = vmatpush.bf16.msra.mxu0 %v1475
    %1769 = vmatpush.bf16.msra.mxu0 %v1474
    %1770 = vmatpush.bf16.msra.mxu0 %v1473
    %1771 = vmatpush.bf16.msra.mxu0 %v1472
    %1772 = vmatmul.bf16.gmra.mxu0 %v667
    %v1773 = vpop.f32.mrf.mxu0
    %v1774 = vadd.f32 %v1761, %v1773
    %v1775 = vpop.f32.mrf.mxu0
    %1776 = vdwg.mxu0
    %1777 = vmatpush.bf16.msra.mxu0 0
    %1778 = vmatpush.bf16.msra.mxu0 0
    %1779 = vmatpush.bf16.msra.mxu0 %v1485
    %1780 = vmatpush.bf16.msra.mxu0 %v1484
    %1781 = vmatpush.bf16.msra.mxu0 %v1483
    %1782 = vmatpush.bf16.msra.mxu0 %v1482
    %1783 = vmatpush.bf16.msra.mxu0 %v1481
    %1784 = vmatpush.bf16.msra.mxu0 %v1480
    %1785 = vmatmul.bf16.gmra.mxu0 %v1703
    %v1786 = vpop.f32.mrf.mxu0
    %v1787 = vadd.f32 %v1774, %v1786
    %v1788 = vpop.f32.mrf.mxu0
    %1789 = vdwg.mxu0
    %v1791 = vsel %vm1238, %v801, 0
    %1793 = vmatpush.bf16.msra.mxu0 %v1217
    %1794 = vmatpush.bf16.msra.mxu0 %v1216
    %1795 = vmatpush.bf16.msra.mxu0 %v1215
    %1796 = vmatpush.bf16.msra.mxu0 %v1214
    %1797 = vmatpush.bf16.msra.mxu0 %v1213
    %1798 = vmatpush.bf16.msra.mxu0 %v1212
    %1799 = vmatpush.bf16.msra.mxu0 %v1211
    %1800 = vmatpush.bf16.msra.mxu0 %v1210
    %1801 = vmatmul.bf16.gmra.mxu0 %v800
    %v1802 = vpop.f32.mrf.mxu0
    %v1803 = vadd.f32 0.0, %v1802
    %v1804 = vpop.f32.mrf.mxu0
    %1805 = vdwg.mxu0
    %1806 = vmatpush.bf16.msra.mxu0 0
    %1807 = vmatpush.bf16.msra.mxu0 0
    %1808 = vmatpush.bf16.msra.mxu0 %v1223
    %1809 = vmatpush.bf16.msra.mxu0 %v1222
    %1810 = vmatpush.bf16.msra.mxu0 %v1221
    %1811 = vmatpush.bf16.msra.mxu0 %v1220
    %1812 = vmatpush.bf16.msra.mxu0 %v1219
    %1813 = vmatpush.bf16.msra.mxu0 %v1218
    %1814 = vmatmul.bf16.gmra.mxu0 %v1791
    %v1815 = vpop.f32.mrf.mxu0
    %v1816 = vadd.f32 %v1803, %v1815
    %v1817 = vpop.f32.mrf.mxu0
    %1818 = vdwg.mxu0
    %v1819 = vadd.f32 %v1787, %v1816
    %v1820 = vadd.f32 %v1819, %v1382
    %v1821 = vmax.f32 %v1820, 0.0
    %v1822 = vpack.c.bf16 %v1821, %v1821
    %v1824 = vsel %vm1238, %v864, 0
    %1826 = vmatpush.bf16.msra.mxu0 %v1331
    %1827 = vmatpush.bf16.msra.mxu0 %v1330
    %1828 = vmatpush.bf16.msra.mxu0 %v1329
    %1829 = vmatpush.bf16.msra.mxu0 %v1328
    %1830 = vmatpush.bf16.msra.mxu0 %v1327
    %1831 = vmatpush.bf16.msra.mxu0 %v1326
    %1832 = vmatpush.bf16.msra.mxu0 %v1325
    %1833 = vmatpush.bf16.msra.mxu0 %v1324
    %1834 = vmatmul.bf16.gmra.mxu0 %v863
    %v1835 = vpop.f32.mrf.mxu0
    %v1836 = vadd.f32 0.0, %v1835
    %v1837 = vpop.f32.mrf.mxu0
    %1838 = vdwg.mxu0
    %1839 = vmatpush.bf16.msra.mxu0 0
    %1840 = vmatpush.bf16.msra.mxu0 0
    %1841 = vmatpush.bf16.msra.mxu0 %v1337
    %1842 = vmatpush.bf16.msra.mxu0 %v1336
    %1843 = vmatpush.bf16.msra.mxu0 %v1335
    %1844 = vmatpush.bf16.msra.mxu0 %v1334
    %1845 = vmatpush.bf16.msra.mxu0 %v1333
    %1846 = vmatpush.bf16.msra.mxu0 %v1332
    %1847 = vmatmul.bf16.gmra.mxu0 %v1824
    %v1848 = vpop.f32.mrf.mxu0
    %v1849 = vadd.f32 %v1836, %v1848
    %v1850 = vpop.f32.mrf.mxu0
    %1851 = vdwg.mxu0
    %1852 = vmatpush.bf16.msra.mxu0 %v1479
    %1853 = vmatpush.bf16.msra.mxu0 %v1478
    %1854 = vmatpush.bf16.msra.mxu0 %v1477
    %1855 = vmatpush.bf16.msra.mxu0 %v1476
    %1856 = vmatpush.bf16.msra.mxu0 %v1475
    %1857 = vmatpush.bf16.msra.mxu0 %v1474
    %1858 = vmatpush.bf16.msra.mxu0 %v1473
    %1859 = vmatpush.bf16.msra.mxu0 %v1472
    %1860 = vmatmul.bf16.gmra.mxu0 %v800
    %v1861 = vpop.f32.mrf.mxu0
    %v1862 = vadd.f32 %v1849, %v1861
    %v1863 = vpop.f32.mrf.mxu0
    %1864 = vdwg.mxu0
    %1865 = vmatpush.bf16.msra.mxu0 0
    %1866 = vmatpush.bf16.msra.mxu0 0
    %1867 = vmatpush.bf16.msra.mxu0 %v1485
    %1868 = vmatpush.bf16.msra.mxu0 %v1484
    %1869 = vmatpush.bf16.msra.mxu0 %v1483
    %1870 = vmatpush.bf16.msra.mxu0 %v1482
    %1871 = vmatpush.bf16.msra.mxu0 %v1481
    %1872 = vmatpush.bf16.msra.mxu0 %v1480
    %1873 = vmatmul.bf16.gmra.mxu0 %v1791
    %v1874 = vpop.f32.mrf.mxu0
    %v1875 = vadd.f32 %v1862, %v1874
    %v1876 = vpop.f32.mrf.mxu0
    %1877 = vdwg.mxu0
    %v1879 = vsel %vm1238, %v933, 0
    %1881 = vmatpush.bf16.msra.mxu0 %v1217
    %1882 = vmatpush.bf16.msra.mxu0 %v1216
    %1883 = vmatpush.bf16.msra.mxu0 %v1215
    %1884 = vmatpush.bf16.msra.mxu0 %v1214
    %1885 = vmatpush.bf16.msra.mxu0 %v1213
    %1886 = vmatpush.bf16.msra.mxu0 %v1212
    %1887 = vmatpush.bf16.msra.mxu0 %v1211
    %1888 = vmatpush.bf16.msra.mxu0 %v1210
    %1889 = vmatmul.bf16.gmra.mxu0 %v932
    %v1890 = vpop.f32.mrf.mxu0
    %v1891 = vadd.f32 0.0, %v1890
    %v1892 = vpop.f32.mrf.mxu0
    %1893 = vdwg.mxu0
    %1894 = vmatpush.bf16.msra.mxu0 0
    %1895 = vmatpush.bf16.msra.mxu0 0
    %1896 = vmatpush.bf16.msra.mxu0 %v1223
    %1897 = vmatpush.bf16.msra.mxu0 %v1222
    %1898 = vmatpush.bf16.msra.mxu0 %v1221
    %1899 = vmatpush.bf16.msra.mxu0 %v1220
    %1900 = vmatpush.bf16.msra.mxu0 %v1219
    %1901 = vmatpush.bf16.msra.mxu0 %v1218
    %1902 = vmatmul.bf16.gmra.mxu0 %v1879
    %v1903 = vpop.f32.mrf.mxu0
    %v1904 = vadd.f32 %v1891, %v1903
    %v1905 = vpop.f32.mrf.mxu0
    %1906 = vdwg.mxu0
    %v1907 = vadd.f32 %v1875, %v1904
    %v1908 = vadd.f32 %v1907, %v1382
    %v1909 = vmax.f32 %v1908, 0.0
    %v1910 = vpack.c.bf16 %v1909, %v1909
    %v1912 = vsel %vm1238, %v996, 0
    %1914 = vmatpush.bf16.msra.mxu0 %v1331
    %1915 = vmatpush.bf16.msra.mxu0 %v1330
    %1916 = vmatpush.bf16.msra.mxu0 %v1329
    %1917 = vmatpush.bf16.msra.mxu0 %v1328
    %1918 = vmatpush.bf16.msra.mxu0 %v1327
    %1919 = vmatpush.bf16.msra.mxu0 %v1326
    %1920 = vmatpush.bf16.msra.mxu0 %v1325
    %1921 = vmatpush.bf16.msra.mxu0 %v1324
    %1922 = vmatmul.bf16.gmra.mxu0 %v995
    %v1923 = vpop.f32.mrf.mxu0
    %v1924 = vadd.f32 0.0, %v1923
    %v1925 = vpop.f32.mrf.mxu0
    %1926 = vdwg.mxu0
    %1927 = vmatpush.bf16.msra.mxu0 0
    %1928 = vmatpush.bf16.msra.mxu0 0
    %1929 = vmatpush.bf16.msra.mxu0 %v1337
    %1930 = vmatpush.bf16.msra.mxu0 %v1336
    %1931 = vmatpush.bf16.msra.mxu0 %v1335
    %1932 = vmatpush.bf16.msra.mxu0 %v1334
    %1933 = vmatpush.bf16.msra.mxu0 %v1333
    %1934 = vmatpush.bf16.msra.mxu0 %v1332
    %1935 = vmatmul.bf16.gmra.mxu0 %v1912
    %v1936 = vpop.f32.mrf.mxu0
    %v1937 = vadd.f32 %v1924, %v1936
    %v1938 = vpop.f32.mrf.mxu0
    %1939 = vdwg.mxu0
    %1940 = vmatpush.bf16.msra.mxu0 %v1479
    %1941 = vmatpush.bf16.msra.mxu0 %v1478
    %1942 = vmatpush.bf16.msra.mxu0 %v1477
    %1943 = vmatpush.bf16.msra.mxu0 %v1476
    %1944 = vmatpush.bf16.msra.mxu0 %v1475
    %1945 = vmatpush.bf16.msra.mxu0 %v1474
    %1946 = vmatpush.bf16.msra.mxu0 %v1473
    %1947 = vmatpush.bf16.msra.mxu0 %v1472
    %1948 = vmatmul.bf16.gmra.mxu0 %v932
    %v1949 = vpop.f32.mrf.mxu0
    %v1950 = vadd.f32 %v1937, %v1949
    %v1951 = vpop.f32.mrf.mxu0
    %1952 = vdwg.mxu0
    %1953 = vmatpush.bf16.msra.mxu0 0
    %1954 = vmatpush.bf16.msra.mxu0 0
    %1955 = vmatpush.bf16.msra.mxu0 %v1485
    %1956 = vmatpush.bf16.msra.mxu0 %v1484
    %1957 = vmatpush.bf16.msra.mxu0 %v1483
    %1958 = vmatpush.bf16.msra.mxu0 %v1482
    %1959 = vmatpush.bf16.msra.mxu0 %v1481
    %1960 = vmatpush.bf16.msra.mxu0 %v1480
    %1961 = vmatmul.bf16.gmra.mxu0 %v1879
    %v1962 = vpop.f32.mrf.mxu0
    %v1963 = vadd.f32 %v1950, %v1962
    %v1964 = vpop.f32.mrf.mxu0
    %1965 = vdwg.mxu0
    %v1967 = vsel %vm1238, %v1066, 0
    %1969 = vmatpush.bf16.msra.mxu0 %v1217
    %1970 = vmatpush.bf16.msra.mxu0 %v1216
    %1971 = vmatpush.bf16.msra.mxu0 %v1215
    %1972 = vmatpush.bf16.msra.mxu0 %v1214
    %1973 = vmatpush.bf16.msra.mxu0 %v1213
    %1974 = vmatpush.bf16.msra.mxu0 %v1212
    %1975 = vmatpush.bf16.msra.mxu0 %v1211
    %1976 = vmatpush.bf16.msra.mxu0 %v1210
    %1977 = vmatmul.bf16.gmra.mxu0 %v1065
    %v1978 = vpop.f32.mrf.mxu0
    %v1979 = vadd.f32 0.0, %v1978
    %v1980 = vpop.f32.mrf.mxu0
    %1981 = vdwg.mxu0
    %1982 = vmatpush.bf16.msra.mxu0 0
    %1983 = vmatpush.bf16.msra.mxu0 0
    %1984 = vmatpush.bf16.msra.mxu0 %v1223
    %1985 = vmatpush.bf16.msra.mxu0 %v1222
    %1986 = vmatpush.bf16.msra.mxu0 %v1221
    %1987 = vmatpush.bf16.msra.mxu0 %v1220
    %1988 = vmatpush.bf16.msra.mxu0 %v1219
    %1989 = vmatpush.bf16.msra.mxu0 %v1218
    %1990 = vmatmul.bf16.gmra.mxu0 %v1967
    %v1991 = vpop.f32.mrf.mxu0
    %v1992 = vadd.f32 %v1979, %v1991
    %v1993 = vpop.f32.mrf.mxu0
    %1994 = vdwg.mxu0
    %v1995 = vadd.f32 %v1963, %v1992
    %v1996 = vadd.f32 %v1995, %v1382
    %v1997 = vmax.f32 %v1996, 0.0
    %v1998 = vpack.c.bf16 %v1997, %v1997
    %v1999 = vld [vmem:[%s6] sm:$0xf]
    %v2000 = vld [vmem:[%s6 + $0x4] sm:$0xf]
    %v2001 = vld [vmem:[%s6 + $0x8] sm:$0xf]
    %v2002 = vld [vmem:[%s6 + $0xc] sm:$0xf]
    %v2003 = vld [vmem:[%s6 + $0x10] sm:$0xf]
    %v2004 = vld [vmem:[%s6 + $0x14] sm:$0xf]
    %v2005 = vld [vmem:[%s6 + $0x18] sm:$0xf]
    %v2006 = vld [vmem:[%s6 + $0x1c] sm:$0xf]
    %v2007 = vld [vmem:[%s6 + $0x20] sm:$0xf]
    %v2008 = vld [vmem:[%s6 + $0x24] sm:$0xf]
    %v2009 = vld [vmem:[%s6 + $0x28] sm:$0xf]
    %v2010 = vld [vmem:[%s6 + $0x2c] sm:$0xf]
    %v2011 = vld [vmem:[%s6 + $0x30] sm:$0xf]
    %v2012 = vld [vmem:[%s6 + $0x34] sm:$0xf]
    %s2013 = scalar_lea.vmem %s6, 56
    %v2014 = vld [vmem:[%s2013] sm:$0xf]
    %v2015 = vld [vmem:[%s2013 + $0x4] sm:$0xf]
    %v2016 = vld [vmem:[%s2013 + $0x8] sm:$0xf]
    %v2017 = vld [vmem:[%s2013 + $0xc] sm:$0xf]
    %v2018 = vld [vmem:[%s2013 + $0x10] sm:$0xf]
    %v2019 = vld [vmem:[%s2013 + $0x14] sm:$0xf]
    %v2020 = vld [vmem:[%s2013 + $0x18] sm:$0xf]
    %v2021 = vld [vmem:[%s2013 + $0x1c] sm:$0xf]
    %v2022 = vld [vmem:[%s2013 + $0x20] sm:$0xf]
    %v2023 = vld [vmem:[%s2013 + $0x24] sm:$0xf]
    %v2024 = vld [vmem:[%s2013 + $0x28] sm:$0xf]
    %v2025 = vld [vmem:[%s2013 + $0x2c] sm:$0xf]
    %v2026 = vld [vmem:[%s2013 + $0x30] sm:$0xf]
    %v2027 = vld [vmem:[%s2013 + $0x34] sm:$0xf]
    %s2028 = scalar_lea.vmem %s6, 112
    %v2029 = vld [vmem:[%s2028] sm:$0xf]
    %v2030 = vld [vmem:[%s2028 + $0x4] sm:$0xf]
    %v2031 = vld [vmem:[%s2028 + $0x8] sm:$0xf]
    %v2032 = vld [vmem:[%s2028 + $0xc] sm:$0xf]
    %v2033 = vld [vmem:[%s2028 + $0x10] sm:$0xf]
    %v2034 = vld [vmem:[%s2028 + $0x14] sm:$0xf]
    %v2035 = vld [vmem:[%s2028 + $0x18] sm:$0xf]
    %v2036 = vld [vmem:[%s2028 + $0x1c] sm:$0xf]
    %v2037 = vld [vmem:[%s2028 + $0x20] sm:$0xf]
    %v2038 = vld [vmem:[%s2028 + $0x24] sm:$0xf]
    %v2039 = vld [vmem:[%s2028 + $0x28] sm:$0xf]
    %v2040 = vld [vmem:[%s2028 + $0x2c] sm:$0xf]
    %v2041 = vld [vmem:[%s2028 + $0x30] sm:$0xf]
    %v2042 = vld [vmem:[%s2028 + $0x34] sm:$0xf]
    %v2043 = vld [vmem:[%s7] sm:$0x1]
    %v2058 = vunpack.c.l.b16 %v2029
    %v2059 = vunpack.c.l.b16 %v2030
    %v2060 = vunpack.c.l.b16 %v2031
    %v2061 = vunpack.c.l.b16 %v2032
    %v2062 = vunpack.c.l.b16 %v2033
    %v2063 = vunpack.c.l.b16 %v2034
    %v2064 = vunpack.c.l.b16 %v2035
    %v2065 = vunpack.c.l.b16 %v2036
    %v2066 = vunpack.c.l.b16 %v2037
    %v2067 = vunpack.c.l.b16 %v2038
    %v2068 = vunpack.c.l.b16 %v2039
    %v2069 = vunpack.c.l.b16 %v2040
    %v2070 = vunpack.c.l.b16 %v2041
    %v2071 = vunpack.c.l.b16 %v2042
    %v2072 = vpack.c.b16 %v2059, %v2058
    %v2073 = vpack.c.b16 %v2061, %v2060
    %v2074 = vpack.c.b16 %v2063, %v2062
    %v2075 = vpack.c.b16 %v2065, %v2064
    %v2076 = vpack.c.b16 %v2067, %v2066
    %v2077 = vpack.c.b16 %v2069, %v2068
    %v2078 = vpack.c.b16 %v2071, %v2070
    %vm2086 = vcmask 916480
    %v2088 = vsel %vm2086, %v1558, 0
    %2090 = vmatpush.bf16.msra.mxu0 0
    %2091 = vmatpush.bf16.msra.mxu0 %v2078
    %2092 = vmatpush.bf16.msra.mxu0 %v2077
    %2093 = vmatpush.bf16.msra.mxu0 %v2076
    %2094 = vmatpush.bf16.msra.mxu0 %v2075
    %2095 = vmatpush.bf16.msra.mxu0 %v2074
    %2096 = vmatpush.bf16.msra.mxu0 %v2073
    %2097 = vmatpush.bf16.msra.mxu0 %v2072
    %2098 = vmatmul.bf16.gmra.mxu0 %v2088
    %v2099 = vpop.f32.mrf.mxu0
    %v2100 = vadd.f32 0.0, %v2099
    %v2101 = vpop.f32.mrf.mxu0
    %2102 = vdwg.mxu0
    %v2117 = vunpack.c.l.b16 %v2014
    %v2118 = vunpack.c.l.b16 %v2015
    %v2119 = vunpack.c.l.b16 %v2016
    %v2120 = vunpack.c.l.b16 %v2017
    %v2121 = vunpack.c.l.b16 %v2018
    %v2122 = vunpack.c.l.b16 %v2019
    %v2123 = vunpack.c.l.b16 %v2020
    %v2124 = vunpack.c.l.b16 %v2021
    %v2125 = vunpack.c.l.b16 %v2022
    %v2126 = vunpack.c.l.b16 %v2023
    %v2127 = vunpack.c.l.b16 %v2024
    %v2128 = vunpack.c.l.b16 %v2025
    %v2129 = vunpack.c.l.b16 %v2026
    %v2130 = vunpack.c.l.b16 %v2027
    %v2131 = vpack.c.b16 %v2118, %v2117
    %v2132 = vpack.c.b16 %v2120, %v2119
    %v2133 = vpack.c.b16 %v2122, %v2121
    %v2134 = vpack.c.b16 %v2124, %v2123
    %v2135 = vpack.c.b16 %v2126, %v2125
    %v2136 = vpack.c.b16 %v2128, %v2127
    %v2137 = vpack.c.b16 %v2130, %v2129
    %v2146 = vsel %vm2086, %v1386, 0
    %2148 = vmatpush.bf16.msra.mxu0 0
    %2149 = vmatpush.bf16.msra.mxu0 %v2137
    %2150 = vmatpush.bf16.msra.mxu0 %v2136
    %2151 = vmatpush.bf16.msra.mxu0 %v2135
    %2152 = vmatpush.bf16.msra.mxu0 %v2134
    %2153 = vmatpush.bf16.msra.mxu0 %v2133
    %2154 = vmatpush.bf16.msra.mxu0 %v2132
    %2155 = vmatpush.bf16.msra.mxu0 %v2131
    %2156 = vmatmul.bf16.gmra.mxu0 %v2146
    %v2157 = vpop.f32.mrf.mxu0
    %v2158 = vadd.f32 %v2100, %v2157
    %v2159 = vpop.f32.mrf.mxu0
    %2160 = vdwg.mxu0
    %v2162 = vperm.slane %v2043, 0
    %v2164 = vadd.f32 %v2158, %v2162
    %v2165 = vmax.f32 %v2164, 0.0
    %v2166 = vpack.c.bf16 %v2165, %v2165
    %v2168 = vsel %vm2086, %v1646, 0
    %2170 = vmatpush.bf16.msra.mxu0 0
    %2171 = vmatpush.bf16.msra.mxu0 %v2137
    %2172 = vmatpush.bf16.msra.mxu0 %v2136
    %2173 = vmatpush.bf16.msra.mxu0 %v2135
    %2174 = vmatpush.bf16.msra.mxu0 %v2134
    %2175 = vmatpush.bf16.msra.mxu0 %v2133
    %2176 = vmatpush.bf16.msra.mxu0 %v2132
    %2177 = vmatpush.bf16.msra.mxu0 %v2131
    %2178 = vmatmul.bf16.gmra.mxu0 %v2168
    %v2179 = vpop.f32.mrf.mxu0
    %v2180 = vadd.f32 0.0, %v2179
    %v2181 = vpop.f32.mrf.mxu0
    %2182 = vdwg.mxu0
    %v2197 = vunpack.c.l.b16 %v1999
    %v2198 = vunpack.c.l.b16 %v2000
    %v2199 = vunpack.c.l.b16 %v2001
    %v2200 = vunpack.c.l.b16 %v2002
    %v2201 = vunpack.c.l.b16 %v2003
    %v2202 = vunpack.c.l.b16 %v2004
    %v2203 = vunpack.c.l.b16 %v2005
    %v2204 = vunpack.c.l.b16 %v2006
    %v2205 = vunpack.c.l.b16 %v2007
    %v2206 = vunpack.c.l.b16 %v2008
    %v2207 = vunpack.c.l.b16 %v2009
    %v2208 = vunpack.c.l.b16 %v2010
    %v2209 = vunpack.c.l.b16 %v2011
    %v2210 = vunpack.c.l.b16 %v2012
    %v2211 = vpack.c.b16 %v2198, %v2197
    %v2212 = vpack.c.b16 %v2200, %v2199
    %v2213 = vpack.c.b16 %v2202, %v2201
    %v2214 = vpack.c.b16 %v2204, %v2203
    %v2215 = vpack.c.b16 %v2206, %v2205
    %v2216 = vpack.c.b16 %v2208, %v2207
    %v2217 = vpack.c.b16 %v2210, %v2209
    %2225 = vmatpush.bf16.msra.mxu0 0
    %2226 = vmatpush.bf16.msra.mxu0 %v2217
    %2227 = vmatpush.bf16.msra.mxu0 %v2216
    %2228 = vmatpush.bf16.msra.mxu0 %v2215
    %2229 = vmatpush.bf16.msra.mxu0 %v2214
    %2230 = vmatpush.bf16.msra.mxu0 %v2213
    %2231 = vmatpush.bf16.msra.mxu0 %v2212
    %2232 = vmatpush.bf16.msra.mxu0 %v2211
    %2233 = vmatmul.bf16.gmra.mxu0 %v2088
    %v2234 = vpop.f32.mrf.mxu0
    %v2235 = vadd.f32 %v2180, %v2234
    %v2236 = vpop.f32.mrf.mxu0
    %2237 = vdwg.mxu0
    %v2239 = vsel %vm2086, %v1734, 0
    %2241 = vmatpush.bf16.msra.mxu0 0
    %2242 = vmatpush.bf16.msra.mxu0 %v2078
    %2243 = vmatpush.bf16.msra.mxu0 %v2077
    %2244 = vmatpush.bf16.msra.mxu0 %v2076
    %2245 = vmatpush.bf16.msra.mxu0 %v2075
    %2246 = vmatpush.bf16.msra.mxu0 %v2074
    %2247 = vmatpush.bf16.msra.mxu0 %v2073
    %2248 = vmatpush.bf16.msra.mxu0 %v2072
    %2249 = vmatmul.bf16.gmra.mxu0 %v2239
    %v2250 = vpop.f32.mrf.mxu0
    %v2251 = vadd.f32 0.0, %v2250
    %v2252 = vpop.f32.mrf.mxu0
    %2253 = vdwg.mxu0
    %v2254 = vadd.f32 %v2235, %v2251
    %v2255 = vadd.f32 %v2254, %v2162
    %v2256 = vmax.f32 %v2255, 0.0
    %v2257 = vpack.c.bf16 %v2256, %v2256
    %v2259 = vsel %vm2086, %v1822, 0
    %2261 = vmatpush.bf16.msra.mxu0 0
    %2262 = vmatpush.bf16.msra.mxu0 %v2137
    %2263 = vmatpush.bf16.msra.mxu0 %v2136
    %2264 = vmatpush.bf16.msra.mxu0 %v2135
    %2265 = vmatpush.bf16.msra.mxu0 %v2134
    %2266 = vmatpush.bf16.msra.mxu0 %v2133
    %2267 = vmatpush.bf16.msra.mxu0 %v2132
    %2268 = vmatpush.bf16.msra.mxu0 %v2131
    %2269 = vmatmul.bf16.gmra.mxu0 %v2259
    %v2270 = vpop.f32.mrf.mxu0
    %v2271 = vadd.f32 0.0, %v2270
    %v2272 = vpop.f32.mrf.mxu0
    %2273 = vdwg.mxu0
    %2274 = vmatpush.bf16.msra.mxu0 0
    %2275 = vmatpush.bf16.msra.mxu0 %v2217
    %2276 = vmatpush.bf16.msra.mxu0 %v2216
    %2277 = vmatpush.bf16.msra.mxu0 %v2215
    %2278 = vmatpush.bf16.msra.mxu0 %v2214
    %2279 = vmatpush.bf16.msra.mxu0 %v2213
    %2280 = vmatpush.bf16.msra.mxu0 %v2212
    %2281 = vmatpush.bf16.msra.mxu0 %v2211
    %2282 = vmatmul.bf16.gmra.mxu0 %v2239
    %v2283 = vpop.f32.mrf.mxu0
    %v2284 = vadd.f32 %v2271, %v2283
    %v2285 = vpop.f32.mrf.mxu0
    %2286 = vdwg.mxu0
    %v2288 = vsel %vm2086, %v1910, 0
    %2290 = vmatpush.bf16.msra.mxu0 0
    %2291 = vmatpush.bf16.msra.mxu0 %v2078
    %2292 = vmatpush.bf16.msra.mxu0 %v2077
    %2293 = vmatpush.bf16.msra.mxu0 %v2076
    %2294 = vmatpush.bf16.msra.mxu0 %v2075
    %2295 = vmatpush.bf16.msra.mxu0 %v2074
    %2296 = vmatpush.bf16.msra.mxu0 %v2073
    %2297 = vmatpush.bf16.msra.mxu0 %v2072
    %2298 = vmatmul.bf16.gmra.mxu0 %v2288
    %v2299 = vpop.f32.mrf.mxu0
    %v2300 = vadd.f32 0.0, %v2299
    %v2301 = vpop.f32.mrf.mxu0
    %2302 = vdwg.mxu0
    %v2303 = vadd.f32 %v2284, %v2300
    %v2304 = vadd.f32 %v2303, %v2162
    %v2305 = vmax.f32 %v2304, 0.0
    %v2306 = vpack.c.bf16 %v2305, %v2305
    %v2308 = vsel %vm2086, %v1998, 0
    %2310 = vmatpush.bf16.msra.mxu0 0
    %2311 = vmatpush.bf16.msra.mxu0 %v2137
    %2312 = vmatpush.bf16.msra.mxu0 %v2136
    %2313 = vmatpush.bf16.msra.mxu0 %v2135
    %2314 = vmatpush.bf16.msra.mxu0 %v2134
    %2315 = vmatpush.bf16.msra.mxu0 %v2133
    %2316 = vmatpush.bf16.msra.mxu0 %v2132
    %2317 = vmatpush.bf16.msra.mxu0 %v2131
    %2318 = vmatmul.bf16.gmra.mxu0 %v2308
    %v2319 = vpop.f32.mrf.mxu0
    %v2320 = vadd.f32 0.0, %v2319
    %v2321 = vpop.f32.mrf.mxu0
    %2322 = vdwg.mxu0
    %2323 = vmatpush.bf16.msra.mxu0 0
    %2324 = vmatpush.bf16.msra.mxu0 %v2217
    %2325 = vmatpush.bf16.msra.mxu0 %v2216
    %2326 = vmatpush.bf16.msra.mxu0 %v2215
    %2327 = vmatpush.bf16.msra.mxu0 %v2214
    %2328 = vmatpush.bf16.msra.mxu0 %v2213
    %2329 = vmatpush.bf16.msra.mxu0 %v2212
    %2330 = vmatpush.bf16.msra.mxu0 %v2211
    %2331 = vmatmul.bf16.gmra.mxu0 %v2288
    %v2332 = vpop.f32.mrf.mxu0
    %v2333 = vadd.f32 %v2320, %v2332
    %v2334 = vpop.f32.mrf.mxu0
    %2335 = vdwg.mxu0
    %v2336 = vadd.f32 %v2333, %v2162
    %v2337 = vmax.f32 %v2336, 0.0
    %v2338 = vpack.c.bf16 %v2337, %v2337
    %v2339 = vld [vmem:[%s8] sm:$0xff]
    %v2340 = vld [vmem:[%s8 + $0x8] sm:$0xff]
    %v2341 = vld [vmem:[%s8 + $0x10] sm:$0xff]
    %v2342 = vld [vmem:[%s8 + $0x18] sm:$0xff]
    %v2343 = vld [vmem:[%s8 + $0x20] sm:$0xff]
    %s2344 = scalar_lea.vmem %s8, 40
    %v2345 = vld [vmem:[%s2344] sm:$0xff]
    %v2346 = vld [vmem:[%s2344 + $0x8] sm:$0xff]
    %v2347 = vld [vmem:[%s2344 + $0x10] sm:$0xff]
    %v2348 = vld [vmem:[%s2344 + $0x18] sm:$0xff]
    %v2349 = vld [vmem:[%s2344 + $0x20] sm:$0xff]
    %v2355 = vunpack.c.l.b16 %v2345
    %v2356 = vunpack.c.h.b16 %v2345
    %v2357 = vunpack.c.l.b16 %v2346
    %v2358 = vunpack.c.h.b16 %v2346
    %v2359 = vunpack.c.l.b16 %v2347
    %v2360 = vunpack.c.h.b16 %v2347
    %v2361 = vunpack.c.l.b16 %v2348
    %v2362 = vunpack.c.h.b16 %v2348
    %v2363 = vunpack.c.l.b16 %v2349
    %v2364 = vunpack.c.h.b16 %v2349
    %v2365 = vpack.c.b16 %v2357, %v2355
    %v2366 = vpack.c.b16 %v2358, %v2356
    %v2367 = vpack.c.b16 %v2361, %v2359
    %v2368 = vpack.c.b16 %v2362, %v2360
    %v2369 = vpack.c.b16 %v2363, %v2363
    %v2370 = vpack.c.b16 %v2364, %v2364
    %vm2375 = vcmask 326656
    %v2377 = vsel %vm2375, %v2257, 0
    %v2380 = vsel %vm128, %v2369, 0
    %v2383 = vsel %vm128, %v2370, 0
    %2385 = vmatpush.bf16.msra.mxu0 0
    %2386 = vmatpush.bf16.msra.mxu0 0
    %2387 = vmatpush.bf16.msra.mxu0 0
    %2388 = vmatpush.bf16.msra.mxu0 0
    %2389 = vmatpush.bf16.msra.mxu0 0
    %2390 = vmatpush.bf16.msra.mxu0 %v2380
    %2391 = vmatpush.bf16.msra.mxu0 %v2367
    %2392 = vmatpush.bf16.msra.mxu0 %v2365
    %2393 = vmatmul.bf16.gmra.mxu0 %v2377
    %v2394 = vpop.f32.mrf.mxu0
    %v2395 = vadd.f32 0.0, %v2394
    %v2396 = vpop.f32.mrf.mxu0
    %2397 = vdwg.mxu0
    %2398 = vmatpush.bf16.msra.mxu0 0
    %2399 = vmatpush.bf16.msra.mxu0 0
    %2400 = vmatpush.bf16.msra.mxu0 0
    %2401 = vmatpush.bf16.msra.mxu0 0
    %2402 = vmatpush.bf16.msra.mxu0 0
    %2403 = vmatpush.bf16.msra.mxu0 %v2383
    %2404 = vmatpush.bf16.msra.mxu0 %v2368
    %2405 = vmatpush.bf16.msra.mxu0 %v2366
    %2406 = vmatmul.bf16.gmra.mxu0 %v2377
    %v2407 = vpop.f32.mrf.mxu0
    %v2408 = vadd.f32 0.0, %v2407
    %v2409 = vpop.f32.mrf.mxu0
    %2410 = vdwg.mxu0
    %v2416 = vunpack.c.l.b16 %v2339
    %v2417 = vunpack.c.h.b16 %v2339
    %v2418 = vunpack.c.l.b16 %v2340
    %v2419 = vunpack.c.h.b16 %v2340
    %v2420 = vunpack.c.l.b16 %v2341
    %v2421 = vunpack.c.h.b16 %v2341
    %v2422 = vunpack.c.l.b16 %v2342
    %v2423 = vunpack.c.h.b16 %v2342
    %v2424 = vunpack.c.l.b16 %v2343
    %v2425 = vunpack.c.h.b16 %v2343
    %v2426 = vpack.c.b16 %v2418, %v2416
    %v2427 = vpack.c.b16 %v2419, %v2417
    %v2428 = vpack.c.b16 %v2422, %v2420
    %v2429 = vpack.c.b16 %v2423, %v2421
    %v2430 = vpack.c.b16 %v2424, %v2424
    %v2431 = vpack.c.b16 %v2425, %v2425
    %v2437 = vsel %vm2375, %v2166, 0
    %v2440 = vsel %vm128, %v2430, 0
    %v2443 = vsel %vm128, %v2431, 0
    %2445 = vmatpush.bf16.msra.mxu0 0
    %2446 = vmatpush.bf16.msra.mxu0 0
    %2447 = vmatpush.bf16.msra.mxu0 0
    %2448 = vmatpush.bf16.msra.mxu0 0
    %2449 = vmatpush.bf16.msra.mxu0 0
    %2450 = vmatpush.bf16.msra.mxu0 %v2440
    %2451 = vmatpush.bf16.msra.mxu0 %v2428
    %2452 = vmatpush.bf16.msra.mxu0 %v2426
    %2453 = vmatmul.bf16.gmra.mxu0 %v2437
    %v2454 = vpop.f32.mrf.mxu0
    %v2455 = vadd.f32 %v2395, %v2454
    %v2456 = vpop.f32.mrf.mxu0
    %2457 = vdwg.mxu0
    %2458 = vmatpush.bf16.msra.mxu0 0
    %2459 = vmatpush.bf16.msra.mxu0 0
    %2460 = vmatpush.bf16.msra.mxu0 0
    %2461 = vmatpush.bf16.msra.mxu0 0
    %2462 = vmatpush.bf16.msra.mxu0 0
    %2463 = vmatpush.bf16.msra.mxu0 %v2443
    %2464 = vmatpush.bf16.msra.mxu0 %v2429
    %2465 = vmatpush.bf16.msra.mxu0 %v2427
    %2466 = vmatmul.bf16.gmra.mxu0 %v2437
    %v2467 = vpop.f32.mrf.mxu0
    %v2468 = vadd.f32 %v2408, %v2467
    %v2469 = vpop.f32.mrf.mxu0
    %2470 = vdwg.mxu0
    %s2471 = scalar_lea.vmem %s8, 80
    %v2472 = vld [vmem:[%s2471] sm:$0xff]
    %v2473 = vld [vmem:[%s2471 + $0x8] sm:$0xff]
    %v2474 = vld [vmem:[%s2471 + $0x10] sm:$0xff]
    %v2475 = vld [vmem:[%s2471 + $0x18] sm:$0xff]
    %v2476 = vld [vmem:[%s2471 + $0x20] sm:$0xff]
    %v2482 = vunpack.c.l.b16 %v2472
    %v2483 = vunpack.c.h.b16 %v2472
    %v2484 = vunpack.c.l.b16 %v2473
    %v2485 = vunpack.c.h.b16 %v2473
    %v2486 = vunpack.c.l.b16 %v2474
    %v2487 = vunpack.c.h.b16 %v2474
    %v2488 = vunpack.c.l.b16 %v2475
    %v2489 = vunpack.c.h.b16 %v2475
    %v2490 = vunpack.c.l.b16 %v2476
    %v2491 = vunpack.c.h.b16 %v2476
    %v2492 = vpack.c.b16 %v2484, %v2482
    %v2493 = vpack.c.b16 %v2485, %v2483
    %v2494 = vpack.c.b16 %v2488, %v2486
    %v2495 = vpack.c.b16 %v2489, %v2487
    %v2496 = vpack.c.b16 %v2490, %v2490
    %v2497 = vpack.c.b16 %v2491, %v2491
    %v2503 = vsel %vm2375, %v2306, 0
    %v2506 = vsel %vm128, %v2496, 0
    %v2509 = vsel %vm128, %v2497, 0
    %2511 = vmatpush.bf16.msra.mxu0 0
    %2512 = vmatpush.bf16.msra.mxu0 0
    %2513 = vmatpush.bf16.msra.mxu0 0
    %2514 = vmatpush.bf16.msra.mxu0 0
    %2515 = vmatpush.bf16.msra.mxu0 0
    %2516 = vmatpush.bf16.msra.mxu0 %v2506
    %2517 = vmatpush.bf16.msra.mxu0 %v2494
    %2518 = vmatpush.bf16.msra.mxu0 %v2492
    %2519 = vmatmul.bf16.gmra.mxu0 %v2503
    %v2520 = vpop.f32.mrf.mxu0
    %v2521 = vadd.f32 0.0, %v2520
    %v2522 = vpop.f32.mrf.mxu0
    %2523 = vdwg.mxu0
    %2524 = vmatpush.bf16.msra.mxu0 0
    %2525 = vmatpush.bf16.msra.mxu0 0
    %2526 = vmatpush.bf16.msra.mxu0 0
    %2527 = vmatpush.bf16.msra.mxu0 0
    %2528 = vmatpush.bf16.msra.mxu0 0
    %2529 = vmatpush.bf16.msra.mxu0 %v2509
    %2530 = vmatpush.bf16.msra.mxu0 %v2495
    %2531 = vmatpush.bf16.msra.mxu0 %v2493
    %2532 = vmatmul.bf16.gmra.mxu0 %v2503
    %v2533 = vpop.f32.mrf.mxu0
    %v2534 = vadd.f32 0.0, %v2533
    %v2535 = vpop.f32.mrf.mxu0
    %2536 = vdwg.mxu0
    %v2537 = vadd.f32 %v2455, %v2521
    %v2538 = vadd.f32 %v2468, %v2534
    %s2539 = scalar_lea.vmem %s8, 120
    %v2540 = vld [vmem:[%s2539] sm:$0xff]
    %v2541 = vld [vmem:[%s2539 + $0x8] sm:$0xff]
    %v2542 = vld [vmem:[%s2539 + $0x10] sm:$0xff]
    %v2543 = vld [vmem:[%s2539 + $0x18] sm:$0xff]
    %v2544 = vld [vmem:[%s2539 + $0x20] sm:$0xff]
    %v2550 = vunpack.c.l.b16 %v2540
    %v2551 = vunpack.c.h.b16 %v2540
    %v2552 = vunpack.c.l.b16 %v2541
    %v2553 = vunpack.c.h.b16 %v2541
    %v2554 = vunpack.c.l.b16 %v2542
    %v2555 = vunpack.c.h.b16 %v2542
    %v2556 = vunpack.c.l.b16 %v2543
    %v2557 = vunpack.c.h.b16 %v2543
    %v2558 = vunpack.c.l.b16 %v2544
    %v2559 = vunpack.c.h.b16 %v2544
    %v2560 = vpack.c.b16 %v2552, %v2550
    %v2561 = vpack.c.b16 %v2553, %v2551
    %v2562 = vpack.c.b16 %v2556, %v2554
    %v2563 = vpack.c.b16 %v2557, %v2555
    %v2564 = vpack.c.b16 %v2558, %v2558
    %v2565 = vpack.c.b16 %v2559, %v2559
    %v2571 = vsel %vm2375, %v2338, 0
    %v2574 = vsel %vm128, %v2564, 0
    %v2577 = vsel %vm128, %v2565, 0
    %2579 = vmatpush.bf16.msra.mxu0 0
    %2580 = vmatpush.bf16.msra.mxu0 0
    %2581 = vmatpush.bf16.msra.mxu0 0
    %2582 = vmatpush.bf16.msra.mxu0 0
    %2583 = vmatpush.bf16.msra.mxu0 0
    %2584 = vmatpush.bf16.msra.mxu0 %v2574
    %2585 = vmatpush.bf16.msra.mxu0 %v2562
    %2586 = vmatpush.bf16.msra.mxu0 %v2560
    %2587 = vmatmul.bf16.gmra.mxu0 %v2571
    %v2588 = vpop.f32.mrf.mxu0
    %v2589 = vadd.f32 0.0, %v2588
    %v2590 = vpop.f32.mrf.mxu0
    %2591 = vdwg.mxu0
    %2592 = vmatpush.bf16.msra.mxu0 0
    %2593 = vmatpush.bf16.msra.mxu0 0
    %2594 = vmatpush.bf16.msra.mxu0 0
    %2595 = vmatpush.bf16.msra.mxu0 0
    %2596 = vmatpush.bf16.msra.mxu0 0
    %2597 = vmatpush.bf16.msra.mxu0 %v2577
    %2598 = vmatpush.bf16.msra.mxu0 %v2563
    %2599 = vmatpush.bf16.msra.mxu0 %v2561
    %2600 = vmatmul.bf16.gmra.mxu0 %v2571
    %v2601 = vpop.f32.mrf.mxu0
    %v2602 = vadd.f32 0.0, %v2601
    %v2603 = vpop.f32.mrf.mxu0
    %2604 = vdwg.mxu0
    %v2605 = vadd.f32 %v2537, %v2589
    %v2606 = vadd.f32 %v2538, %v2602
    %v2607 = vld [vmem:[%s9] sm:$0x3]
    %v2609 = vperm.slane %v2607, 0
    %v2610 = vperm.slane %v2607, 1
    %v2613 = vadd.f32 %v2605, %v2609
    %v2614 = vadd.f32 %v2606, %v2610
    %v2615 = vmax.f32 %v2613, 0.0
    %v2616 = vmax.f32 %v2614, 0.0
    %v2617 = vpack.c.bf16 %v2615, %v2615
    %v2618 = vpack.c.bf16 %v2616, %v2616
    %v2619 = vld [vmem:[%s10] sm:$0xf]
    %v2620 = vld [vmem:[%s10 + $0x4] sm:$0xf]
    %v2621 = vld [vmem:[%s10 + $0x8] sm:$0xf]
    %v2622 = vld [vmem:[%s10 + $0xc] sm:$0xf]
    %v2623 = vld [vmem:[%s10 + $0x10] sm:$0xf]
    %v2624 = vld [vmem:[%s10 + $0x14] sm:$0xf]
    %v2625 = vld [vmem:[%s10 + $0x18] sm:$0xf]
    %v2626 = vld [vmem:[%s10 + $0x1c] sm:$0xf]
    %v2627 = vld [vmem:[%s10 + $0x20] sm:$0xf]
    %v2628 = vld [vmem:[%s10 + $0x24] sm:$0xf]
    %v2629 = vld [vmem:[%s10 + $0x28] sm:$0xf]
    %v2630 = vld [vmem:[%s10 + $0x2c] sm:$0xf]
    %v2631 = vld [vmem:[%s10 + $0x30] sm:$0xf]
    %v2632 = vld [vmem:[%s10 + $0x34] sm:$0xf]
    %v2633 = vld [vmem:[%s10 + $0x38] sm:$0xf]
    %v2634 = vld [vmem:[%s10 + $0x3c] sm:$0xf]
    %v2635 = vld [vmem:[%s10 + $0x40] sm:$0xf]
    %v2636 = vld [vmem:[%s10 + $0x44] sm:$0xf]
    %v2637 = vld [vmem:[%s10 + $0x48] sm:$0xf]
    %v2638 = vld [vmem:[%s10 + $0x4c] sm:$0xf]
    %v2639 = vld [vmem:[%s10 + $0x50] sm:$0xf]
    %v2640 = vld [vmem:[%s10 + $0x54] sm:$0xf]
    %v2641 = vld [vmem:[%s10 + $0x58] sm:$0xf]
    %v2642 = vld [vmem:[%s10 + $0x5c] sm:$0xf]
    %v2643 = vld [vmem:[%s10 + $0x60] sm:$0xf]
    %v2644 = vld [vmem:[%s10 + $0x64] sm:$0xf]
    %v2645 = vld [vmem:[%s10 + $0x68] sm:$0xf]
    %v2646 = vld [vmem:[%s10 + $0x6c] sm:$0xf]
    %v2647 = vld [vmem:[%s10 + $0x70] sm:$0xf]
    %v2648 = vld [vmem:[%s10 + $0x74] sm:$0xf]
    %v2649 = vld [vmem:[%s10 + $0x78] sm:$0xf]
    %v2650 = vld [vmem:[%s10 + $0x7c] sm:$0xf]
    %v2651 = vld [vmem:[%s11] sm:$0x1]
    %v2653 = vperm.slane %v2651, 0
    %v2687 = vunpack.c.l.b16 %v2619
    %v2688 = vunpack.c.l.b16 %v2620
    %v2689 = vunpack.c.l.b16 %v2621
    %v2690 = vunpack.c.l.b16 %v2622
    %v2691 = vunpack.c.l.b16 %v2623
    %v2692 = vunpack.c.l.b16 %v2624
    %v2693 = vunpack.c.l.b16 %v2625
    %v2694 = vunpack.c.l.b16 %v2626
    %v2695 = vunpack.c.l.b16 %v2627
    %v2696 = vunpack.c.l.b16 %v2628
    %v2697 = vunpack.c.l.b16 %v2629
    %v2698 = vunpack.c.l.b16 %v2630
    %v2699 = vunpack.c.l.b16 %v2631
    %v2700 = vunpack.c.l.b16 %v2632
    %v2701 = vunpack.c.l.b16 %v2633
    %v2702 = vunpack.c.l.b16 %v2634
    %v2703 = vunpack.c.l.b16 %v2635
    %v2704 = vunpack.c.l.b16 %v2636
    %v2705 = vunpack.c.l.b16 %v2637
    %v2706 = vunpack.c.l.b16 %v2638
    %v2707 = vunpack.c.l.b16 %v2639
    %v2708 = vunpack.c.l.b16 %v2640
    %v2709 = vunpack.c.l.b16 %v2641
    %v2710 = vunpack.c.l.b16 %v2642
    %v2711 = vunpack.c.l.b16 %v2643
    %v2712 = vunpack.c.l.b16 %v2644
    %v2713 = vunpack.c.l.b16 %v2645
    %v2714 = vunpack.c.l.b16 %v2646
    %v2715 = vunpack.c.l.b16 %v2647
    %v2716 = vunpack.c.l.b16 %v2648
    %v2717 = vunpack.c.l.b16 %v2649
    %v2718 = vunpack.c.l.b16 %v2650
    %v2719 = vpack.c.b16 %v2688, %v2687
    %v2720 = vpack.c.b16 %v2690, %v2689
    %v2721 = vpack.c.b16 %v2692, %v2691
    %v2722 = vpack.c.b16 %v2694, %v2693
    %v2723 = vpack.c.b16 %v2696, %v2695
    %v2724 = vpack.c.b16 %v2698, %v2697
    %v2725 = vpack.c.b16 %v2700, %v2699
    %v2726 = vpack.c.b16 %v2702, %v2701
    %v2727 = vpack.c.b16 %v2704, %v2703
    %v2728 = vpack.c.b16 %v2706, %v2705
    %v2729 = vpack.c.b16 %v2708, %v2707
    %v2730 = vpack.c.b16 %v2710, %v2709
    %v2731 = vpack.c.b16 %v2712, %v2711
    %v2732 = vpack.c.b16 %v2714, %v2713
    %v2733 = vpack.c.b16 %v2716, %v2715
    %v2734 = vpack.c.b16 %v2718, %v2717
    %2751 = vmatpush.bf16.msra.mxu0 %v2726
    %2752 = vmatpush.bf16.msra.mxu0 %v2725
    %2753 = vmatpush.bf16.msra.mxu0 %v2724
    %2754 = vmatpush.bf16.msra.mxu0 %v2723
    %2755 = vmatpush.bf16.msra.mxu0 %v2722
    %2756 = vmatpush.bf16.msra.mxu0 %v2721
    %2757 = vmatpush.bf16.msra.mxu0 %v2720
    %2758 = vmatpush.bf16.msra.mxu0 %v2719
    %2759 = vmatmul.bf16.gmra.mxu0 %v2617
    %v2760 = vpop.f32.mrf.mxu0
    %v2761 = vadd.f32 %v2653, %v2760
    %v2762 = vpop.f32.mrf.mxu0
    %2763 = vdwg.mxu0
    %2764 = vmatpush.bf16.msra.mxu0 %v2734
    %2765 = vmatpush.bf16.msra.mxu0 %v2733
    %2766 = vmatpush.bf16.msra.mxu0 %v2732
    %2767 = vmatpush.bf16.msra.mxu0 %v2731
    %2768 = vmatpush.bf16.msra.mxu0 %v2730
    %2769 = vmatpush.bf16.msra.mxu0 %v2729
    %2770 = vmatpush.bf16.msra.mxu0 %v2728
    %2771 = vmatpush.bf16.msra.mxu0 %v2727
    %2772 = vmatmul.bf16.gmra.mxu0 %v2618
    %v2773 = vpop.f32.mrf.mxu0
    %v2774 = vadd.f32 %v2761, %v2773
    %v2775 = vpop.f32.mrf.mxu0
    %2776 = vdwg.mxu0
    %2777 = vst [vmem:[%s12] sm:$0xff] %v2774
    // Predicated region
    $region54: #{dqn_forward.1} parent=1 // pred_check
      _
    $region55: #{dqn_forward.1} parent=1 // pred_check_branch
      %2779 = sbr.rel (0) target = $region57
    $region56: #{dqn_forward.1} parent=1 // pred_region
      _
    $region57: #{dqn_forward.1} parent=1 // pred_fallthru
      _
    // Predicated region
    $region58: #{dqn_forward.1} parent=1 // pred_check
      _
    $region59: #{dqn_forward.1} parent=1 // pred_check_branch
      %2781 = sbr.rel (0) target = $region61
    $region60: #{dqn_forward.1} parent=1 // pred_region
      _
    $region61: #{dqn_forward.1} parent=1 // pred_fallthru
      _
    %2782 = vsyncpa [#allocation3], 1

</llo_original>
